<compile_context>
chip_gen: v7x
topology: tpu7x:2x2x1
jax: 0.10.0
libtpu: 0.0.40
codegen_flags: <defaults>
</compile_context>

<pallas_src>
import functools

import jax
import jax.numpy as jnp
from jax import lax
from jax.experimental import pallas as pl
from jax.experimental.pallas import tpu as pltpu


def _encoder_layer_kernel(x_ref,
                          wqkv_ref, bqkv_ref, wo_ref, vecs_ref,
                          w1_ref, b1_ref, w2_ref,
                          o_ref,
                          qkv_ref, ctx_ref,
                          *, num_heads, head_dim, seq_len, eps):
    rows, D = x_ref.shape
    bb = rows // seq_len                              # batch elems in this block

    x = x_ref[...]                                    # (rows, D) f32

    g1, beta1 = vecs_ref[0:1, :], vecs_ref[1:2, :]
    g2, beta2 = vecs_ref[2:3, :], vecs_ref[3:4, :]
    bo, b2 = vecs_ref[4:5, :], vecs_ref[5:6, :]

    # ---------------- LayerNorm 1 (f32 elementwise) ----------------
    mu = jnp.mean(x, axis=-1, keepdims=True)
    var = jnp.mean((x - mu) ** 2, axis=-1, keepdims=True)
    h = (x - mu) * lax.rsqrt(var + eps) * g1 + beta1

    # -------- Fused QKV projection: one (rows,D)x(D,3D) bf16 MXU matmul -----
    # (softmax scale is already folded into the Q columns of wqkv/bqkv)
    qkv = jnp.dot(h.astype(jnp.bfloat16), wqkv_ref[...],
                  preferred_element_type=jnp.float32) + bqkv_ref[...]
    qkv_ref[...] = qkv.astype(jnp.bfloat16)

    # ---------------- Self attention (per batch element, per head) ----------
    # Reads come from the VMEM scratch ref (bounded live ranges); the lane
    # offset per head is static, the sublane (row) offset is dynamic.
    def attend_one_batch(r0):
        for hh in range(num_heads):                   # small static unroll
            c0 = hh * head_dim
            qh = qkv_ref[pl.ds(r0, seq_len), c0:c0 + head_dim]
            kh = qkv_ref[pl.ds(r0, seq_len), D + c0:D + c0 + head_dim]
            vh = qkv_ref[pl.ds(r0, seq_len), 2 * D + c0:2 * D + c0 + head_dim]
            # scores = (q*scale) @ k^T without materializing a transpose.
            s = lax.dot_general(qh, kh, (((1,), (1,)), ((), ())),
                                preferred_element_type=jnp.float32)
            s = s - jnp.max(s, axis=-1, keepdims=True)
            p = jnp.exp(s)
            p = p * pl.reciprocal(jnp.sum(p, axis=-1, keepdims=True), approx=True)
            # attention_dropout == 0.0 (inference) -> dropout is a no-op.
            pv = jnp.dot(p.astype(jnp.bfloat16), vh,
                         preferred_element_type=jnp.float32)
            ctx_ref[pl.ds(r0, seq_len), c0:c0 + head_dim] = pv.astype(jnp.bfloat16)

    if bb == 1:
        attend_one_batch(0)                           # fully static fast path
    else:
        def body(b, carry):
            attend_one_batch(pl.multiple_of(b * seq_len, seq_len))
            return carry
        lax.fori_loop(0, bb, body, 0)

    attn_out = jnp.dot(ctx_ref[...], wo_ref[...],
                       preferred_element_type=jnp.float32) + bo
    h1 = x + attn_out                                 # residual 1 (f32)

    # ---------------- LayerNorm 2 ----------------
    mu2 = jnp.mean(h1, axis=-1, keepdims=True)
    var2 = jnp.mean((h1 - mu2) ** 2, axis=-1, keepdims=True)
    h2 = (h1 - mu2) * lax.rsqrt(var2 + eps) * g2 + beta2

    # -------- MLP with tanh-approx GELU (bf16 matmuls, f32 elementwise) -----
    f = jnp.dot(h2.astype(jnp.bfloat16), w1_ref[...],
                preferred_element_type=jnp.float32) + b1_ref[...]
    c = jnp.float32(0.7978845608028654)               # sqrt(2/pi)
    f = 0.5 * f * (1.0 + jnp.tanh(c * (f + 0.044715 * (f * f * f))))
    f = jnp.dot(f.astype(jnp.bfloat16), w2_ref[...],
                preferred_element_type=jnp.float32) + b2

    o_ref[...] = h1 + f                               # residual 2


def _pick_batch_block(B, S):
    """Largest bb dividing B that keeps >=2 grid steps and 8-aligned row blocks."""
    candidates = [bb for bb in range(1, B + 1)
                  if B % bb == 0 and (bb == B or (bb * S) % 8 == 0)]
    multi = [bb for bb in candidates if B // bb >= 2]
    return max(multi) if multi else max(candidates)


def _vmem_limit_bytes():
    try:
        cap = pltpu.get_tpu_info().vmem_capacity_bytes
    except Exception:
        cap = 64 * 1024 * 1024            # assume the smaller (v7x) part
    return min(int(cap) * 3 // 4, 100 * 1024 * 1024)


def siglip_encoder_layer(x, params, *, num_heads, eps, batch_block=None):
    B, S, D = x.shape
    head_dim = D // num_heads
    assert num_heads * head_dim == D, "hidden_size must divide by num_heads"
    I = params["w1"].shape[1]

    bb = batch_block if batch_block is not None else _pick_batch_block(B, S)
    assert B % bb == 0 and (bb == B or (bb * S) % 8 == 0)
    rows = bb * S

    # Host-side weight prep: fold softmax scale into Q projection, fuse Q/K/V
    # into one (D, 3D) matmul, cast matmul weights to bf16.
    scale = jnp.float32(head_dim ** -0.5)
    wqkv = jnp.concatenate(
        [params["wq"] * scale, params["wk"], params["wv"]], axis=1
    ).astype(jnp.bfloat16)
    bqkv = jnp.concatenate(
        [params["bq"] * scale, params["bk"], params["bv"]], axis=1
    ).astype(jnp.float32)
    wo = params["wo"].astype(jnp.bfloat16)
    w1 = params["w1"].astype(jnp.bfloat16)
    w2 = params["w2"].astype(jnp.bfloat16)
    b1 = params["b1"].astype(jnp.float32)

    # Pack the six (1, D) vectors into one sublane-aligned (8, D) operand.
    vecs = jnp.zeros((8, D), jnp.float32)
    vecs = vecs.at[0].set(params["g1"][0]).at[1].set(params["beta1"][0])
    vecs = vecs.at[2].set(params["g2"][0]).at[3].set(params["beta2"][0])
    vecs = vecs.at[4].set(params["bo"][0]).at[5].set(params["b2"][0])

    # Flatten to (B*S, D) so blocks are lane-dense 2-D slabs; each grid step
    # owns `bb` whole batch elements (no cross-batch mixing in attention).
    x2d = x.reshape(B * S, D)

    kernel = functools.partial(_encoder_layer_kernel, num_heads=num_heads,
                               head_dim=head_dim, seq_len=S, eps=eps)

    def build(single_buffer_weights):
        extra = {}
        if single_buffer_weights and hasattr(pl, "Buffered"):
            extra = {"pipeline_mode": pl.Buffered(1)}   # constants: 1 buffer

        def const_spec(shape):
            zeros = (0,) * len(shape)
            return pl.BlockSpec(shape, lambda i, _z=zeros: _z, **extra)

        in_specs = [
            pl.BlockSpec((rows, D), lambda i: (i, 0)),        # x (flattened)
            const_spec((D, 3 * D)), const_spec((1, 3 * D)),   # fused qkv W, b
            const_spec((D, D)),                               # out_proj W
            const_spec((8, D)),                               # packed vectors
            const_spec((D, I)), const_spec((1, I)),           # fc1 W, b
            const_spec((I, D)),                               # fc2 W
        ]
        return pl.pallas_call(
            kernel,
            out_shape=jax.ShapeDtypeStruct((B * S, D), jnp.float32),
            grid_spec=pltpu.PrefetchScalarGridSpec(
                num_scalar_prefetch=0,
                grid=(B // bb,),
                in_specs=in_specs,
                out_specs=pl.BlockSpec((rows, D), lambda i: (i, 0)),
                scratch_shapes=[
                    pltpu.VMEM((rows, 3 * D), jnp.bfloat16),  # qkv scratch
                    pltpu.VMEM((rows, D), jnp.bfloat16),      # attn context
                ],
            ),
            compiler_params=pltpu.CompilerParams(
                dimension_semantics=("parallel",),            # megacore on v7x
                vmem_limit_bytes=_vmem_limit_bytes(),
            ),
        )

    operands = (x2d, wqkv, bqkv, wo, vecs, w1, b1, w2)
    try:
        out2d = build(True)(*operands)
    except Exception:
        # Fallback for jax versions without pipeline_mode support: default
        # double-buffering of the constant weight blocks.
        out2d = build(False)(*operands)
    return out2d.reshape(B, S, D)


def reference_encoder_layer(x, params, *, num_heads, eps):
    """Pure-JAX reference matching the PyTorch forward exactly (f32)."""
    B, S, D = x.shape
    hd = D // num_heads

    def ln(z, g, b):
        mu = jnp.mean(z, axis=-1, keepdims=True)
        var = jnp.mean((z - mu) ** 2, axis=-1, keepdims=True)
        return (z - mu) / jnp.sqrt(var + eps) * g + b

    h = ln(x, params["g1"][0], params["beta1"][0])
    q = h @ params["wq"] + params["bq"][0]
    k = h @ params["wk"] + params["bk"][0]
    v = h @ params["wv"] + params["bv"][0]
    q = q.reshape(B, S, num_heads, hd).transpose(0, 2, 1, 3)
    k = k.reshape(B, S, num_heads, hd).transpose(0, 2, 1, 3)
    v = v.reshape(B, S, num_heads, hd).transpose(0, 2, 1, 3)
    w = jnp.einsum("bhqd,bhkd->bhqk", q, k) * (hd ** -0.5)
    w = jax.nn.softmax(w.astype(jnp.float32), axis=-1)
    o = jnp.einsum("bhqk,bhkd->bhqd", w, v)
    o = o.transpose(0, 2, 1, 3).reshape(B, S, D)
    o = o @ params["wo"] + params["bo"][0]
    h1 = x + o
    h2 = ln(h1, params["g2"][0], params["beta2"][0])
    f = h2 @ params["w1"] + params["b1"][0]
    f = 0.5 * f * (1.0 + jnp.tanh(jnp.sqrt(2.0 / jnp.pi) * (f + 0.044715 * f ** 3)))
    f = f @ params["w2"] + params["b2"][0]
    return h1 + f


if __name__ == "__main__":
    # Small config consistent with SiglipVisionConfig semantics.
    B, S = 2, 8
    D = 32              # hidden_size
    H = 4               # num_attention_heads
    I = 64              # intermediate_size
    EPS = 1e-6

    key = jax.random.PRNGKey(0)
    ks = jax.random.split(key, 16)

    def w(k, shape, scale=0.02):
        return (scale * jax.random.normal(k, shape)).astype(jnp.float32)

    params = {
        "wq": w(ks[0], (D, D)), "bq": w(ks[1], (1, D)),
        "wk": w(ks[2], (D, D)), "bk": w(ks[3], (1, D)),
        "wv": w(ks[4], (D, D)), "bv": w(ks[5], (1, D)),
        "wo": w(ks[6], (D, D)), "bo": w(ks[7], (1, D)),
        "g1": jnp.ones((1, D), jnp.float32), "beta1": w(ks[8], (1, D)),
        "g2": jnp.ones((1, D), jnp.float32), "beta2": w(ks[9], (1, D)),
        "w1": w(ks[10], (D, I)), "b1": w(ks[11], (1, I)),
        "w2": w(ks[12], (I, D)), "b2": w(ks[13], (1, D)),
    }

    x = jax.random.normal(ks[14], (B, S, D), dtype=jnp.float32)

    out = siglip_encoder_layer(x, params, num_heads=H, eps=EPS)
    out = jax.block_until_ready(out)

    ref = reference_encoder_layer(x, params, num_heads=H, eps=EPS)
    assert out.shape == (B, S, D)
    err = jnp.max(jnp.abs(out - ref))
    # Tolerance accounts for bf16 MXU operands (f32 accumulation) and the
    # approx EUP reciprocal in the softmax.
    assert jnp.allclose(out, ref, atol=2e-3, rtol=2e-3), f"max err {err}"

    print("KERNEL_OK")
</pallas_src>

<mosaic_0001>
module attributes {stable_mosaic.version = 11 : i64} {
  func.func @_encoder_layer_kernel(%arg0: i32, %arg1: memref<8x32xf32, #tpu.memory_space<vmem>>, %arg2: memref<32x96xbf16, #tpu.memory_space<vmem>>, %arg3: memref<1x96xf32, #tpu.memory_space<vmem>>, %arg4: memref<32x32xbf16, #tpu.memory_space<vmem>>, %arg5: memref<8x32xf32, #tpu.memory_space<vmem>>, %arg6: memref<32x64xbf16, #tpu.memory_space<vmem>>, %arg7: memref<1x64xf32, #tpu.memory_space<vmem>>, %arg8: memref<64x32xbf16, #tpu.memory_space<vmem>>, %arg9: memref<8x32xf32, #tpu.memory_space<vmem>>, %arg10: memref<8x96xbf16, #tpu.memory_space<vmem>>, %arg11: memref<8x32xbf16, #tpu.memory_space<vmem>>) attributes {dimension_semantics = [#tpu.dimension_semantics<parallel>], iteration_bounds = array<i64: 2>, scalar_prefetch = 0 : i64, scratch_operands = 2 : i64, tpu.core_type = #tpu.core_type<tc>, window_params = [{transform_indices = @transform_0, window_bounds = array<i64: 8, 32>}, {pipeline_mode = #tpu.pipeline_mode<synchronous>, transform_indices = @transform_1, window_bounds = array<i64: 32, 96>}, {pipeline_mode = #tpu.pipeline_mode<synchronous>, transform_indices = @transform_2, window_bounds = array<i64: 1, 96>}, {pipeline_mode = #tpu.pipeline_mode<synchronous>, transform_indices = @transform_3, window_bounds = array<i64: 32, 32>}, {pipeline_mode = #tpu.pipeline_mode<synchronous>, transform_indices = @transform_4, window_bounds = array<i64: 8, 32>}, {pipeline_mode = #tpu.pipeline_mode<synchronous>, transform_indices = @transform_5, window_bounds = array<i64: 32, 64>}, {pipeline_mode = #tpu.pipeline_mode<synchronous>, transform_indices = @transform_6, window_bounds = array<i64: 1, 64>}, {pipeline_mode = #tpu.pipeline_mode<synchronous>, transform_indices = @transform_7, window_bounds = array<i64: 64, 32>}, {transform_indices = @transform_8, window_bounds = array<i64: 8, 32>}]} {
    %c0 = arith.constant 0 : index
    %c0_0 = arith.constant 0 : index
    %0 = vector.load %arg1[%c0, %c0_0] : memref<8x32xf32, #tpu.memory_space<vmem>>, vector<8x32xf32>
    %c0_1 = arith.constant 0 : index
    %c0_2 = arith.constant 0 : index
    %1 = vector.load %arg5[%c0_1, %c0_2] : memref<8x32xf32, #tpu.memory_space<vmem>>, vector<1x32xf32>
    %c1 = arith.constant 1 : index
    %c0_3 = arith.constant 0 : index
    %2 = vector.load %arg5[%c1, %c0_3] : memref<8x32xf32, #tpu.memory_space<vmem>>, vector<1x32xf32>
    %c2 = arith.constant 2 : index
    %c0_4 = arith.constant 0 : index
    %3 = vector.load %arg5[%c2, %c0_4] : memref<8x32xf32, #tpu.memory_space<vmem>>, vector<1x32xf32>
    %c3 = arith.constant 3 : index
    %c0_5 = arith.constant 0 : index
    %4 = vector.load %arg5[%c3, %c0_5] : memref<8x32xf32, #tpu.memory_space<vmem>>, vector<1x32xf32>
    %c4 = arith.constant 4 : index
    %c0_6 = arith.constant 0 : index
    %5 = vector.load %arg5[%c4, %c0_6] : memref<8x32xf32, #tpu.memory_space<vmem>>, vector<1x32xf32>
    %c5 = arith.constant 5 : index
    %c0_7 = arith.constant 0 : index
    %6 = vector.load %arg5[%c5, %c0_7] : memref<8x32xf32, #tpu.memory_space<vmem>>, vector<1x32xf32>
    %cst = arith.constant dense<0.000000e+00> : vector<8xf32>
    %7 = vector.multi_reduction <add>, %0, %cst [1] : vector<8x32xf32> to vector<8xf32>
    %8 = vector.shape_cast %7 : vector<8xf32> to vector<8x1xf32>
    %cst_8 = arith.constant 3.200000e+01 : f32
    %9 = vector.broadcast %cst_8 : f32 to vector<8x1xf32>
    %10 = arith.divf %8, %9 : vector<8x1xf32>
    %11 = vector.broadcast %10 : vector<8x1xf32> to vector<8x32xf32>
    %12 = arith.subf %0, %11 : vector<8x32xf32>
    %13 = arith.mulf %12, %12 : vector<8x32xf32>
    %cst_9 = arith.constant dense<0.000000e+00> : vector<8xf32>
    %14 = vector.multi_reduction <add>, %13, %cst_9 [1] : vector<8x32xf32> to vector<8xf32>
    %15 = vector.shape_cast %14 : vector<8xf32> to vector<8x1xf32>
    %cst_10 = arith.constant 3.200000e+01 : f32
    %16 = vector.broadcast %cst_10 : f32 to vector<8x1xf32>
    %17 = arith.divf %15, %16 : vector<8x1xf32>
    %18 = vector.broadcast %10 : vector<8x1xf32> to vector<8x32xf32>
    %19 = arith.subf %0, %18 : vector<8x32xf32>
    %cst_11 = arith.constant 9.99999997E-7 : f32
    %20 = vector.broadcast %cst_11 : f32 to vector<8x1xf32>
    %21 = arith.addf %17, %20 : vector<8x1xf32>
    %22 = math.rsqrt %21 : vector<8x1xf32>
    %23 = vector.broadcast %22 : vector<8x1xf32> to vector<8x32xf32>
    %24 = arith.mulf %19, %23 : vector<8x32xf32>
    %25 = vector.broadcast %1 : vector<1x32xf32> to vector<8x32xf32>
    %26 = arith.mulf %24, %25 : vector<8x32xf32>
    %27 = vector.broadcast %2 : vector<1x32xf32> to vector<8x32xf32>
    %28 = arith.addf %26, %27 : vector<8x32xf32>
    %29 = arith.truncf %28 : vector<8x32xf32> to vector<8x32xbf16>
    %c0_12 = arith.constant 0 : index
    %c0_13 = arith.constant 0 : index
    %30 = vector.load %arg2[%c0_12, %c0_13] : memref<32x96xbf16, #tpu.memory_space<vmem>>, vector<32x96xbf16>
    %cst_14 = arith.constant dense<0.000000e+00> : vector<8x96xf32>
    %31 = tpu.matmul %29, %30, %cst_14 {dimension_numbers = #tpu.dot_dimension_numbers<[1], [0], [0], [1], [0, 0, 1, 1], [], []>} : vector<8x32xbf16>, vector<32x96xbf16>, vector<8x96xf32> -> vector<8x96xf32>
    %c0_15 = arith.constant 0 : index
    %c0_16 = arith.constant 0 : index
    %32 = vector.load %arg3[%c0_15, %c0_16] : memref<1x96xf32, #tpu.memory_space<vmem>>, vector<1x96xf32>
    %33 = vector.broadcast %32 : vector<1x96xf32> to vector<8x96xf32>
    %34 = arith.addf %31, %33 : vector<8x96xf32>
    %35 = arith.truncf %34 : vector<8x96xf32> to vector<8x96xbf16>
    %c0_17 = arith.constant 0 : index
    %c0_18 = arith.constant 0 : index
    %36 = vector.load %arg10[%c0_17, %c0_18] : memref<8x96xbf16, #tpu.memory_space<vmem>>, vector<8x96xbf16>
    tpu.vector_store %arg10[%c0_17, %c0_18], %35 {strides = array<i32>} : memref<8x96xbf16, #tpu.memory_space<vmem>>, vector<8x96xbf16>,
    %c0_19 = arith.constant 0 : index
    %c0_20 = arith.constant 0 : index
    %37 = vector.load %arg10[%c0_19, %c0_20] : memref<8x96xbf16, #tpu.memory_space<vmem>>, vector<8x8xbf16>
    %c0_21 = arith.constant 0 : index
    %c32 = arith.constant 32 : index
    %38 = vector.load %arg10[%c0_21, %c32] : memref<8x96xbf16, #tpu.memory_space<vmem>>, vector<8x8xbf16>
    %c0_22 = arith.constant 0 : index
    %c64 = arith.constant 64 : index
    %39 = vector.load %arg10[%c0_22, %c64] : memref<8x96xbf16, #tpu.memory_space<vmem>>, vector<8x8xbf16>
    %cst_23 = arith.constant dense<0.000000e+00> : vector<8x8xf32>
    %40 = tpu.matmul %37, %38, %cst_23 {dimension_numbers = #tpu.dot_dimension_numbers<[1], [1], [0], [0], [0, 0, 1, 0], [], []>} : vector<8x8xbf16>, vector<8x8xbf16>, vector<8x8xf32> -> vector<8x8xf32>
    %cst_24 = arith.constant dense<0xFF800000> : vector<8xf32>
    %41 = vector.multi_reduction <maximumf>, %40, %cst_24 [1] : vector<8x8xf32> to vector<8xf32>
    %42 = vector.shape_cast %41 : vector<8xf32> to vector<8x1xf32>
    %43 = vector.broadcast %42 : vector<8x1xf32> to vector<8x8xf32>
    %44 = arith.subf %40, %43 : vector<8x8xf32>
    %45 = math.exp %44 : vector<8x8xf32>
    %cst_25 = arith.constant dense<0.000000e+00> : vector<8xf32>
    %46 = vector.multi_reduction <add>, %45, %cst_25 [1] : vector<8x8xf32> to vector<8xf32>
    %47 = vector.shape_cast %46 : vector<8xf32> to vector<8x1xf32>
    %48 = tpu.reciprocal %47 {approx = true} : vector<8x1xf32> -> vector<8x1xf32>
    %49 = vector.broadcast %48 : vector<8x1xf32> to vector<8x8xf32>
    %50 = arith.mulf %45, %49 : vector<8x8xf32>
    %51 = arith.truncf %50 : vector<8x8xf32> to vector<8x8xbf16>
    %cst_26 = arith.constant dense<0.000000e+00> : vector<8x8xf32>
    %52 = tpu.matmul %51, %39, %cst_26 {dimension_numbers = #tpu.dot_dimension_numbers<[1], [0], [0], [1], [0, 0, 1, 1], [], []>} : vector<8x8xbf16>, vector<8x8xbf16>, vector<8x8xf32> -> vector<8x8xf32>
    %53 = arith.truncf %52 : vector<8x8xf32> to vector<8x8xbf16>
    %c0_27 = arith.constant 0 : index
    %c0_28 = arith.constant 0 : index
    %54 = vector.load %arg11[%c0_27, %c0_28] : memref<8x32xbf16, #tpu.memory_space<vmem>>, vector<8x8xbf16>
    tpu.vector_store %arg11[%c0_27, %c0_28], %53 {strides = array<i32>} : memref<8x32xbf16, #tpu.memory_space<vmem>>, vector<8x8xbf16>,
    %c0_29 = arith.constant 0 : index
    %c8 = arith.constant 8 : index
    %55 = vector.load %arg10[%c0_29, %c8] : memref<8x96xbf16, #tpu.memory_space<vmem>>, vector<8x8xbf16>
    %c0_30 = arith.constant 0 : index
    %c40 = arith.constant 40 : index
    %56 = vector.load %arg10[%c0_30, %c40] : memref<8x96xbf16, #tpu.memory_space<vmem>>, vector<8x8xbf16>
    %c0_31 = arith.constant 0 : index
    %c72 = arith.constant 72 : index
    %57 = vector.load %arg10[%c0_31, %c72] : memref<8x96xbf16, #tpu.memory_space<vmem>>, vector<8x8xbf16>
    %cst_32 = arith.constant dense<0.000000e+00> : vector<8x8xf32>
    %58 = tpu.matmul %55, %56, %cst_32 {dimension_numbers = #tpu.dot_dimension_numbers<[1], [1], [0], [0], [0, 0, 1, 0], [], []>} : vector<8x8xbf16>, vector<8x8xbf16>, vector<8x8xf32> -> vector<8x8xf32>
    %cst_33 = arith.constant dense<0xFF800000> : vector<8xf32>
    %59 = vector.multi_reduction <maximumf>, %58, %cst_33 [1] : vector<8x8xf32> to vector<8xf32>
    %60 = vector.shape_cast %59 : vector<8xf32> to vector<8x1xf32>
    %61 = vector.broadcast %60 : vector<8x1xf32> to vector<8x8xf32>
    %62 = arith.subf %58, %61 : vector<8x8xf32>
    %63 = math.exp %62 : vector<8x8xf32>
    %cst_34 = arith.constant dense<0.000000e+00> : vector<8xf32>
    %64 = vector.multi_reduction <add>, %63, %cst_34 [1] : vector<8x8xf32> to vector<8xf32>
    %65 = vector.shape_cast %64 : vector<8xf32> to vector<8x1xf32>
    %66 = tpu.reciprocal %65 {approx = true} : vector<8x1xf32> -> vector<8x1xf32>
    %67 = vector.broadcast %66 : vector<8x1xf32> to vector<8x8xf32>
    %68 = arith.mulf %63, %67 : vector<8x8xf32>
    %69 = arith.truncf %68 : vector<8x8xf32> to vector<8x8xbf16>
    %cst_35 = arith.constant dense<0.000000e+00> : vector<8x8xf32>
    %70 = tpu.matmul %69, %57, %cst_35 {dimension_numbers = #tpu.dot_dimension_numbers<[1], [0], [0], [1], [0, 0, 1, 1], [], []>} : vector<8x8xbf16>, vector<8x8xbf16>, vector<8x8xf32> -> vector<8x8xf32>
    %71 = arith.truncf %70 : vector<8x8xf32> to vector<8x8xbf16>
    %c0_36 = arith.constant 0 : index
    %c8_37 = arith.constant 8 : index
    %72 = vector.load %arg11[%c0_36, %c8_37] : memref<8x32xbf16, #tpu.memory_space<vmem>>, vector<8x8xbf16>
    tpu.vector_store %arg11[%c0_36, %c8_37], %71 {strides = array<i32>} : memref<8x32xbf16, #tpu.memory_space<vmem>>, vector<8x8xbf16>,
    %c0_38 = arith.constant 0 : index
    %c16 = arith.constant 16 : index
    %73 = vector.load %arg10[%c0_38, %c16] : memref<8x96xbf16, #tpu.memory_space<vmem>>, vector<8x8xbf16>
    %c0_39 = arith.constant 0 : index
    %c48 = arith.constant 48 : index
    %74 = vector.load %arg10[%c0_39, %c48] : memref<8x96xbf16, #tpu.memory_space<vmem>>, vector<8x8xbf16>
    %c0_40 = arith.constant 0 : index
    %c80 = arith.constant 80 : index
    %75 = vector.load %arg10[%c0_40, %c80] : memref<8x96xbf16, #tpu.memory_space<vmem>>, vector<8x8xbf16>
    %cst_41 = arith.constant dense<0.000000e+00> : vector<8x8xf32>
    %76 = tpu.matmul %73, %74, %cst_41 {dimension_numbers = #tpu.dot_dimension_numbers<[1], [1], [0], [0], [0, 0, 1, 0], [], []>} : vector<8x8xbf16>, vector<8x8xbf16>, vector<8x8xf32> -> vector<8x8xf32>
    %cst_42 = arith.constant dense<0xFF800000> : vector<8xf32>
    %77 = vector.multi_reduction <maximumf>, %76, %cst_42 [1] : vector<8x8xf32> to vector<8xf32>
    %78 = vector.shape_cast %77 : vector<8xf32> to vector<8x1xf32>
    %79 = vector.broadcast %78 : vector<8x1xf32> to vector<8x8xf32>
    %80 = arith.subf %76, %79 : vector<8x8xf32>
    %81 = math.exp %80 : vector<8x8xf32>
    %cst_43 = arith.constant dense<0.000000e+00> : vector<8xf32>
    %82 = vector.multi_reduction <add>, %81, %cst_43 [1] : vector<8x8xf32> to vector<8xf32>
    %83 = vector.shape_cast %82 : vector<8xf32> to vector<8x1xf32>
    %84 = tpu.reciprocal %83 {approx = true} : vector<8x1xf32> -> vector<8x1xf32>
    %85 = vector.broadcast %84 : vector<8x1xf32> to vector<8x8xf32>
    %86 = arith.mulf %81, %85 : vector<8x8xf32>
    %87 = arith.truncf %86 : vector<8x8xf32> to vector<8x8xbf16>
    %cst_44 = arith.constant dense<0.000000e+00> : vector<8x8xf32>
    %88 = tpu.matmul %87, %75, %cst_44 {dimension_numbers = #tpu.dot_dimension_numbers<[1], [0], [0], [1], [0, 0, 1, 1], [], []>} : vector<8x8xbf16>, vector<8x8xbf16>, vector<8x8xf32> -> vector<8x8xf32>
    %89 = arith.truncf %88 : vector<8x8xf32> to vector<8x8xbf16>
    %c0_45 = arith.constant 0 : index
    %c16_46 = arith.constant 16 : index
    %90 = vector.load %arg11[%c0_45, %c16_46] : memref<8x32xbf16, #tpu.memory_space<vmem>>, vector<8x8xbf16>
    tpu.vector_store %arg11[%c0_45, %c16_46], %89 {strides = array<i32>} : memref<8x32xbf16, #tpu.memory_space<vmem>>, vector<8x8xbf16>,
    %c0_47 = arith.constant 0 : index
    %c24 = arith.constant 24 : index
    %91 = vector.load %arg10[%c0_47, %c24] : memref<8x96xbf16, #tpu.memory_space<vmem>>, vector<8x8xbf16>
    %c0_48 = arith.constant 0 : index
    %c56 = arith.constant 56 : index
    %92 = vector.load %arg10[%c0_48, %c56] : memref<8x96xbf16, #tpu.memory_space<vmem>>, vector<8x8xbf16>
    %c0_49 = arith.constant 0 : index
    %c88 = arith.constant 88 : index
    %93 = vector.load %arg10[%c0_49, %c88] : memref<8x96xbf16, #tpu.memory_space<vmem>>, vector<8x8xbf16>
    %cst_50 = arith.constant dense<0.000000e+00> : vector<8x8xf32>
    %94 = tpu.matmul %91, %92, %cst_50 {dimension_numbers = #tpu.dot_dimension_numbers<[1], [1], [0], [0], [0, 0, 1, 0], [], []>} : vector<8x8xbf16>, vector<8x8xbf16>, vector<8x8xf32> -> vector<8x8xf32>
    %cst_51 = arith.constant dense<0xFF800000> : vector<8xf32>
    %95 = vector.multi_reduction <maximumf>, %94, %cst_51 [1] : vector<8x8xf32> to vector<8xf32>
    %96 = vector.shape_cast %95 : vector<8xf32> to vector<8x1xf32>
    %97 = vector.broadcast %96 : vector<8x1xf32> to vector<8x8xf32>
    %98 = arith.subf %94, %97 : vector<8x8xf32>
    %99 = math.exp %98 : vector<8x8xf32>
    %cst_52 = arith.constant dense<0.000000e+00> : vector<8xf32>
    %100 = vector.multi_reduction <add>, %99, %cst_52 [1] : vector<8x8xf32> to vector<8xf32>
    %101 = vector.shape_cast %100 : vector<8xf32> to vector<8x1xf32>
    %102 = tpu.reciprocal %101 {approx = true} : vector<8x1xf32> -> vector<8x1xf32>
    %103 = vector.broadcast %102 : vector<8x1xf32> to vector<8x8xf32>
    %104 = arith.mulf %99, %103 : vector<8x8xf32>
    %105 = arith.truncf %104 : vector<8x8xf32> to vector<8x8xbf16>
    %cst_53 = arith.constant dense<0.000000e+00> : vector<8x8xf32>
    %106 = tpu.matmul %105, %93, %cst_53 {dimension_numbers = #tpu.dot_dimension_numbers<[1], [0], [0], [1], [0, 0, 1, 1], [], []>} : vector<8x8xbf16>, vector<8x8xbf16>, vector<8x8xf32> -> vector<8x8xf32>
    %107 = arith.truncf %106 : vector<8x8xf32> to vector<8x8xbf16>
    %c0_54 = arith.constant 0 : index
    %c24_55 = arith.constant 24 : index
    %108 = vector.load %arg11[%c0_54, %c24_55] : memref<8x32xbf16, #tpu.memory_space<vmem>>, vector<8x8xbf16>
    tpu.vector_store %arg11[%c0_54, %c24_55], %107 {strides = array<i32>} : memref<8x32xbf16, #tpu.memory_space<vmem>>, vector<8x8xbf16>,
    %c0_56 = arith.constant 0 : index
    %c0_57 = arith.constant 0 : index
    %109 = vector.load %arg11[%c0_56, %c0_57] : memref<8x32xbf16, #tpu.memory_space<vmem>>, vector<8x32xbf16>
    %c0_58 = arith.constant 0 : index
    %c0_59 = arith.constant 0 : index
    %110 = vector.load %arg4[%c0_58, %c0_59] : memref<32x32xbf16, #tpu.memory_space<vmem>>, vector<32x32xbf16>
    %cst_60 = arith.constant dense<0.000000e+00> : vector<8x32xf32>
    %111 = tpu.matmul %109, %110, %cst_60 {dimension_numbers = #tpu.dot_dimension_numbers<[1], [0], [0], [1], [0, 0, 1, 1], [], []>} : vector<8x32xbf16>, vector<32x32xbf16>, vector<8x32xf32> -> vector<8x32xf32>
    %112 = vector.broadcast %5 : vector<1x32xf32> to vector<8x32xf32>
    %113 = arith.addf %111, %112 : vector<8x32xf32>
    %114 = arith.addf %0, %113 : vector<8x32xf32>
    %cst_61 = arith.constant dense<0.000000e+00> : vector<8xf32>
    %115 = vector.multi_reduction <add>, %114, %cst_61 [1] : vector<8x32xf32> to vector<8xf32>
    %116 = vector.shape_cast %115 : vector<8xf32> to vector<8x1xf32>
    %cst_62 = arith.constant 3.200000e+01 : f32
    %117 = vector.broadcast %cst_62 : f32 to vector<8x1xf32>
    %118 = arith.divf %116, %117 : vector<8x1xf32>
    %119 = vector.broadcast %118 : vector<8x1xf32> to vector<8x32xf32>
    %120 = arith.subf %114, %119 : vector<8x32xf32>
    %121 = arith.mulf %120, %120 : vector<8x32xf32>
    %cst_63 = arith.constant dense<0.000000e+00> : vector<8xf32>
    %122 = vector.multi_reduction <add>, %121, %cst_63 [1] : vector<8x32xf32> to vector<8xf32>
    %123 = vector.shape_cast %122 : vector<8xf32> to vector<8x1xf32>
    %cst_64 = arith.constant 3.200000e+01 : f32
    %124 = vector.broadcast %cst_64 : f32 to vector<8x1xf32>
    %125 = arith.divf %123, %124 : vector<8x1xf32>
    %126 = vector.broadcast %118 : vector<8x1xf32> to vector<8x32xf32>
    %127 = arith.subf %114, %126 : vector<8x32xf32>
    %cst_65 = arith.constant 9.99999997E-7 : f32
    %128 = vector.broadcast %cst_65 : f32 to vector<8x1xf32>
    %129 = arith.addf %125, %128 : vector<8x1xf32>
    %130 = math.rsqrt %129 : vector<8x1xf32>
    %131 = vector.broadcast %130 : vector<8x1xf32> to vector<8x32xf32>
    %132 = arith.mulf %127, %131 : vector<8x32xf32>
    %133 = vector.broadcast %3 : vector<1x32xf32> to vector<8x32xf32>
    %134 = arith.mulf %132, %133 : vector<8x32xf32>
    %135 = vector.broadcast %4 : vector<1x32xf32> to vector<8x32xf32>
    %136 = arith.addf %134, %135 : vector<8x32xf32>
    %137 = arith.truncf %136 : vector<8x32xf32> to vector<8x32xbf16>
    %c0_66 = arith.constant 0 : index
    %c0_67 = arith.constant 0 : index
    %138 = vector.load %arg6[%c0_66, %c0_67] : memref<32x64xbf16, #tpu.memory_space<vmem>>, vector<32x64xbf16>
    %cst_68 = arith.constant dense<0.000000e+00> : vector<8x64xf32>
    %139 = tpu.matmul %137, %138, %cst_68 {dimension_numbers = #tpu.dot_dimension_numbers<[1], [0], [0], [1], [0, 0, 1, 1], [], []>} : vector<8x32xbf16>, vector<32x64xbf16>, vector<8x64xf32> -> vector<8x64xf32>
    %c0_69 = arith.constant 0 : index
    %c0_70 = arith.constant 0 : index
    %140 = vector.load %arg7[%c0_69, %c0_70] : memref<1x64xf32, #tpu.memory_space<vmem>>, vector<1x64xf32>
    %141 = vector.broadcast %140 : vector<1x64xf32> to vector<8x64xf32>
    %142 = arith.addf %139, %141 : vector<8x64xf32>
    %cst_71 = arith.constant 5.000000e-01 : f32
    %143 = vector.broadcast %cst_71 : f32 to vector<8x64xf32>
    %144 = arith.mulf %143, %142 : vector<8x64xf32>
    %145 = arith.mulf %142, %142 : vector<8x64xf32>
    %146 = arith.mulf %145, %142 : vector<8x64xf32>
    %cst_72 = arith.constant 4.471500e-02 : f32
    %147 = vector.broadcast %cst_72 : f32 to vector<8x64xf32>
    %148 = arith.mulf %147, %146 : vector<8x64xf32>
    %149 = arith.addf %142, %148 : vector<8x64xf32>
    %cst_73 = arith.constant 0.797884583 : f32
    %150 = vector.broadcast %cst_73 : f32 to vector<8x64xf32>
    %151 = arith.mulf %150, %149 : vector<8x64xf32>
    %152 = math.tanh %151 : vector<8x64xf32>
    %cst_74 = arith.constant 1.000000e+00 : f32
    %153 = vector.broadcast %cst_74 : f32 to vector<8x64xf32>
    %154 = arith.addf %153, %152 : vector<8x64xf32>
    %155 = arith.mulf %144, %154 : vector<8x64xf32>
    %156 = arith.truncf %155 : vector<8x64xf32> to vector<8x64xbf16>
    %c0_75 = arith.constant 0 : index
    %c0_76 = arith.constant 0 : index
    %157 = vector.load %arg8[%c0_75, %c0_76] : memref<64x32xbf16, #tpu.memory_space<vmem>>, vector<64x32xbf16>
    %cst_77 = arith.constant dense<0.000000e+00> : vector<8x32xf32>
    %158 = tpu.matmul %156, %157, %cst_77 {dimension_numbers = #tpu.dot_dimension_numbers<[1], [0], [0], [1], [0, 0, 1, 1], [], []>} : vector<8x64xbf16>, vector<64x32xbf16>, vector<8x32xf32> -> vector<8x32xf32>
    %159 = vector.broadcast %6 : vector<1x32xf32> to vector<8x32xf32>
    %160 = arith.addf %158, %159 : vector<8x32xf32>
    %161 = arith.addf %114, %160 : vector<8x32xf32>
    %c0_78 = arith.constant 0 : index
    %c0_79 = arith.constant 0 : index
    %162 = vector.load %arg9[%c0_78, %c0_79] : memref<8x32xf32, #tpu.memory_space<vmem>>, vector<8x32xf32>
    tpu.vector_store %arg9[%c0_78, %c0_79], %161 {strides = array<i32>} : memref<8x32xf32, #tpu.memory_space<vmem>>, vector<8x32xf32>,
    return
  }
  func.func @transform_0(%arg0: i32) -> (i32, i32) {
    %c0_i32 = arith.constant 0 : i32
    %c0_i32_0 = arith.constant 0 : i32
    return %arg0, %c0_i32 : i32, i32
  }
  func.func @transform_1(%arg0: i32) -> (i32, i32) {
    %c0_i32 = arith.constant 0 : i32
    %c0_i32_0 = arith.constant 0 : i32
    %c0_i32_1 = arith.constant 0 : i32
    return %c0_i32, %c0_i32_0 : i32, i32
  }
  func.func @transform_2(%arg0: i32) -> (i32, i32) {
    %c0_i32 = arith.constant 0 : i32
    %c0_i32_0 = arith.constant 0 : i32
    %c0_i32_1 = arith.constant 0 : i32
    return %c0_i32, %c0_i32_0 : i32, i32
  }
  func.func @transform_3(%arg0: i32) -> (i32, i32) {
    %c0_i32 = arith.constant 0 : i32
    %c0_i32_0 = arith.constant 0 : i32
    %c0_i32_1 = arith.constant 0 : i32
    return %c0_i32, %c0_i32_0 : i32, i32
  }
  func.func @transform_4(%arg0: i32) -> (i32, i32) {
    %c0_i32 = arith.constant 0 : i32
    %c0_i32_0 = arith.constant 0 : i32
    %c0_i32_1 = arith.constant 0 : i32
    return %c0_i32, %c0_i32_0 : i32, i32
  }
  func.func @transform_5(%arg0: i32) -> (i32, i32) {
    %c0_i32 = arith.constant 0 : i32
    %c0_i32_0 = arith.constant 0 : i32
    %c0_i32_1 = arith.constant 0 : i32
    return %c0_i32, %c0_i32_0 : i32, i32
  }
  func.func @transform_6(%arg0: i32) -> (i32, i32) {
    %c0_i32 = arith.constant 0 : i32
    %c0_i32_0 = arith.constant 0 : i32
    %c0_i32_1 = arith.constant 0 : i32
    return %c0_i32, %c0_i32_0 : i32, i32
  }
  func.func @transform_7(%arg0: i32) -> (i32, i32) {
    %c0_i32 = arith.constant 0 : i32
    %c0_i32_0 = arith.constant 0 : i32
    %c0_i32_1 = arith.constant 0 : i32
    return %c0_i32, %c0_i32_0 : i32, i32
  }
  func.func @transform_8(%arg0: i32) -> (i32, i32) {
    %c0_i32 = arith.constant 0 : i32
    %c0_i32_0 = arith.constant 0 : i32
    return %arg0, %c0_i32 : i32, i32
  }
}

module attributes {stable_mosaic.version = 11 : i64} {
  func.func @_encoder_layer_kernel(%arg0: i32, %arg1: memref<8x32xf32, #tpu.memory_space<vmem>>, %arg2: memref<32x96xbf16, #tpu.memory_space<vmem>>, %arg3: memref<1x96xf32, #tpu.memory_space<vmem>>, %arg4: memref<32x32xbf16, #tpu.memory_space<vmem>>, %arg5: memref<8x32xf32, #tpu.memory_space<vmem>>, %arg6: memref<32x64xbf16, #tpu.memory_space<vmem>>, %arg7: memref<1x64xf32, #tpu.memory_space<vmem>>, %arg8: memref<64x32xbf16, #tpu.memory_space<vmem>>, %arg9: memref<8x32xf32, #tpu.memory_space<vmem>>, %arg10: memref<8x96xbf16, #tpu.memory_space<vmem>>, %arg11: memref<8x32xbf16, #tpu.memory_space<vmem>>) attributes {dimension_semantics = [#tpu.dimension_semantics<parallel>], iteration_bounds = array<i64: 2>, scalar_prefetch = 0 : i64, scratch_operands = 2 : i64, tpu.core_type = #tpu.core_type<tc>, window_params = [{transform_indices = @transform_0, window_bounds = array<i64: 8, 32>}, {pipeline_mode = #tpu.pipeline_mode<synchronous>, transform_indices = @transform_1, window_bounds = array<i64: 32, 96>}, {pipeline_mode = #tpu.pipeline_mode<synchronous>, transform_indices = @transform_2, window_bounds = array<i64: 1, 96>}, {pipeline_mode = #tpu.pipeline_mode<synchronous>, transform_indices = @transform_3, window_bounds = array<i64: 32, 32>}, {pipeline_mode = #tpu.pipeline_mode<synchronous>, transform_indices = @transform_4, window_bounds = array<i64: 8, 32>}, {pipeline_mode = #tpu.pipeline_mode<synchronous>, transform_indices = @transform_5, window_bounds = array<i64: 32, 64>}, {pipeline_mode = #tpu.pipeline_mode<synchronous>, transform_indices = @transform_6, window_bounds = array<i64: 1, 64>}, {pipeline_mode = #tpu.pipeline_mode<synchronous>, transform_indices = @transform_7, window_bounds = array<i64: 64, 32>}, {transform_indices = @transform_8, window_bounds = array<i64: 8, 32>}]} {
    %c0 = arith.constant 0 : index
    %c0_0 = arith.constant 0 : index
    %0 = vector.load %arg1[%c0, %c0_0] : memref<8x32xf32, #tpu.memory_space<vmem>>, vector<8x32xf32>
    %c0_1 = arith.constant 0 : index
    %c0_2 = arith.constant 0 : index
    %1 = vector.load %arg5[%c0_1, %c0_2] : memref<8x32xf32, #tpu.memory_space<vmem>>, vector<1x32xf32>
    %c1 = arith.constant 1 : index
    %c0_3 = arith.constant 0 : index
    %2 = vector.load %arg5[%c1, %c0_3] : memref<8x32xf32, #tpu.memory_space<vmem>>, vector<1x32xf32>
    %c2 = arith.constant 2 : index
    %c0_4 = arith.constant 0 : index
    %3 = vector.load %arg5[%c2, %c0_4] : memref<8x32xf32, #tpu.memory_space<vmem>>, vector<1x32xf32>
    %c3 = arith.constant 3 : index
    %c0_5 = arith.constant 0 : index
    %4 = vector.load %arg5[%c3, %c0_5] : memref<8x32xf32, #tpu.memory_space<vmem>>, vector<1x32xf32>
    %c4 = arith.constant 4 : index
    %c0_6 = arith.constant 0 : index
    %5 = vector.load %arg5[%c4, %c0_6] : memref<8x32xf32, #tpu.memory_space<vmem>>, vector<1x32xf32>
    %c5 = arith.constant 5 : index
    %c0_7 = arith.constant 0 : index
    %6 = vector.load %arg5[%c5, %c0_7] : memref<8x32xf32, #tpu.memory_space<vmem>>, vector<1x32xf32>
    %cst = arith.constant dense<0.000000e+00> : vector<8xf32>
    %7 = vector.multi_reduction <add>, %0, %cst [1] : vector<8x32xf32> to vector<8xf32>
    %8 = vector.shape_cast %7 : vector<8xf32> to vector<8x1xf32>
    %cst_8 = arith.constant 3.200000e+01 : f32
    %9 = vector.broadcast %cst_8 : f32 to vector<8x1xf32>
    %10 = arith.divf %8, %9 : vector<8x1xf32>
    %11 = vector.broadcast %10 : vector<8x1xf32> to vector<8x32xf32>
    %12 = arith.subf %0, %11 : vector<8x32xf32>
    %13 = arith.mulf %12, %12 : vector<8x32xf32>
    %cst_9 = arith.constant dense<0.000000e+00> : vector<8xf32>
    %14 = vector.multi_reduction <add>, %13, %cst_9 [1] : vector<8x32xf32> to vector<8xf32>
    %15 = vector.shape_cast %14 : vector<8xf32> to vector<8x1xf32>
    %cst_10 = arith.constant 3.200000e+01 : f32
    %16 = vector.broadcast %cst_10 : f32 to vector<8x1xf32>
    %17 = arith.divf %15, %16 : vector<8x1xf32>
    %18 = vector.broadcast %10 : vector<8x1xf32> to vector<8x32xf32>
    %19 = arith.subf %0, %18 : vector<8x32xf32>
    %cst_11 = arith.constant 9.99999997E-7 : f32
    %20 = vector.broadcast %cst_11 : f32 to vector<8x1xf32>
    %21 = arith.addf %17, %20 : vector<8x1xf32>
    %22 = math.rsqrt %21 : vector<8x1xf32>
    %23 = vector.broadcast %22 : vector<8x1xf32> to vector<8x32xf32>
    %24 = arith.mulf %19, %23 : vector<8x32xf32>
    %25 = vector.broadcast %1 : vector<1x32xf32> to vector<8x32xf32>
    %26 = arith.mulf %24, %25 : vector<8x32xf32>
    %27 = vector.broadcast %2 : vector<1x32xf32> to vector<8x32xf32>
    %28 = arith.addf %26, %27 : vector<8x32xf32>
    %29 = arith.truncf %28 : vector<8x32xf32> to vector<8x32xbf16>
    %c0_12 = arith.constant 0 : index
    %c0_13 = arith.constant 0 : index
    %30 = vector.load %arg2[%c0_12, %c0_13] : memref<32x96xbf16, #tpu.memory_space<vmem>>, vector<32x96xbf16>
    %cst_14 = arith.constant dense<0.000000e+00> : vector<8x96xf32>
    %31 = tpu.matmul %29, %30, %cst_14 {dimension_numbers = #tpu.dot_dimension_numbers<[1], [0], [0], [1], [0, 0, 1, 1], [], []>} : vector<8x32xbf16>, vector<32x96xbf16>, vector<8x96xf32> -> vector<8x96xf32>
    %c0_15 = arith.constant 0 : index
    %c0_16 = arith.constant 0 : index
    %32 = vector.load %arg3[%c0_15, %c0_16] : memref<1x96xf32, #tpu.memory_space<vmem>>, vector<1x96xf32>
    %33 = vector.broadcast %32 : vector<1x96xf32> to vector<8x96xf32>
    %34 = arith.addf %31, %33 : vector<8x96xf32>
    %35 = arith.truncf %34 : vector<8x96xf32> to vector<8x96xbf16>
    %c0_17 = arith.constant 0 : index
    %c0_18 = arith.constant 0 : index
    %36 = vector.load %arg10[%c0_17, %c0_18] : memref<8x96xbf16, #tpu.memory_space<vmem>>, vector<8x96xbf16>
    tpu.vector_store %arg10[%c0_17, %c0_18], %35 {strides = array<i32>} : memref<8x96xbf16, #tpu.memory_space<vmem>>, vector<8x96xbf16>,
    %c0_19 = arith.constant 0 : index
    %c0_20 = arith.constant 0 : index
    %37 = vector.load %arg10[%c0_19, %c0_20] : memref<8x96xbf16, #tpu.memory_space<vmem>>, vector<8x8xbf16>
    %c0_21 = arith.constant 0 : index
    %c32 = arith.constant 32 : index
    %38 = vector.load %arg10[%c0_21, %c32] : memref<8x96xbf16, #tpu.memory_space<vmem>>, vector<8x8xbf16>
    %c0_22 = arith.constant 0 : index
    %c64 = arith.constant 64 : index
    %39 = vector.load %arg10[%c0_22, %c64] : memref<8x96xbf16, #tpu.memory_space<vmem>>, vector<8x8xbf16>
    %cst_23 = arith.constant dense<0.000000e+00> : vector<8x8xf32>
    %40 = tpu.matmul %37, %38, %cst_23 {dimension_numbers = #tpu.dot_dimension_numbers<[1], [1], [0], [0], [0, 0, 1, 0], [], []>} : vector<8x8xbf16>, vector<8x8xbf16>, vector<8x8xf32> -> vector<8x8xf32>
    %cst_24 = arith.constant dense<0xFF800000> : vector<8xf32>
    %41 = vector.multi_reduction <maximumf>, %40, %cst_24 [1] : vector<8x8xf32> to vector<8xf32>
    %42 = vector.shape_cast %41 : vector<8xf32> to vector<8x1xf32>
    %43 = vector.broadcast %42 : vector<8x1xf32> to vector<8x8xf32>
    %44 = arith.subf %40, %43 : vector<8x8xf32>
    %45 = math.exp %44 : vector<8x8xf32>
    %cst_25 = arith.constant dense<0.000000e+00> : vector<8xf32>
    %46 = vector.multi_reduction <add>, %45, %cst_25 [1] : vector<8x8xf32> to vector<8xf32>
    %47 = vector.shape_cast %46 : vector<8xf32> to vector<8x1xf32>
    %48 = tpu.reciprocal %47 {approx = true} : vector<8x1xf32> -> vector<8x1xf32>
    %49 = vector.broadcast %48 : vector<8x1xf32> to vector<8x8xf32>
    %50 = arith.mulf %45, %49 : vector<8x8xf32>
    %51 = arith.truncf %50 : vector<8x8xf32> to vector<8x8xbf16>
    %cst_26 = arith.constant dense<0.000000e+00> : vector<8x8xf32>
    %52 = tpu.matmul %51, %39, %cst_26 {dimension_numbers = #tpu.dot_dimension_numbers<[1], [0], [0], [1], [0, 0, 1, 1], [], []>} : vector<8x8xbf16>, vector<8x8xbf16>, vector<8x8xf32> -> vector<8x8xf32>
    %53 = arith.truncf %52 : vector<8x8xf32> to vector<8x8xbf16>
    %c0_27 = arith.constant 0 : index
    %c0_28 = arith.constant 0 : index
    %54 = vector.load %arg11[%c0_27, %c0_28] : memref<8x32xbf16, #tpu.memory_space<vmem>>, vector<8x8xbf16>
    tpu.vector_store %arg11[%c0_27, %c0_28], %53 {strides = array<i32>} : memref<8x32xbf16, #tpu.memory_space<vmem>>, vector<8x8xbf16>,
    %c0_29 = arith.constant 0 : index
    %c8 = arith.constant 8 : index
    %55 = vector.load %arg10[%c0_29, %c8] : memref<8x96xbf16, #tpu.memory_space<vmem>>, vector<8x8xbf16>
    %c0_30 = arith.constant 0 : index
    %c40 = arith.constant 40 : index
    %56 = vector.load %arg10[%c0_30, %c40] : memref<8x96xbf16, #tpu.memory_space<vmem>>, vector<8x8xbf16>
    %c0_31 = arith.constant 0 : index
    %c72 = arith.constant 72 : index
    %57 = vector.load %arg10[%c0_31, %c72] : memref<8x96xbf16, #tpu.memory_space<vmem>>, vector<8x8xbf16>
    %cst_32 = arith.constant dense<0.000000e+00> : vector<8x8xf32>
    %58 = tpu.matmul %55, %56, %cst_32 {dimension_numbers = #tpu.dot_dimension_numbers<[1], [1], [0], [0], [0, 0, 1, 0], [], []>} : vector<8x8xbf16>, vector<8x8xbf16>, vector<8x8xf32> -> vector<8x8xf32>
    %cst_33 = arith.constant dense<0xFF800000> : vector<8xf32>
    %59 = vector.multi_reduction <maximumf>, %58, %cst_33 [1] : vector<8x8xf32> to vector<8xf32>
    %60 = vector.shape_cast %59 : vector<8xf32> to vector<8x1xf32>
    %61 = vector.broadcast %60 : vector<8x1xf32> to vector<8x8xf32>
    %62 = arith.subf %58, %61 : vector<8x8xf32>
    %63 = math.exp %62 : vector<8x8xf32>
    %cst_34 = arith.constant dense<0.000000e+00> : vector<8xf32>
    %64 = vector.multi_reduction <add>, %63, %cst_34 [1] : vector<8x8xf32> to vector<8xf32>
    %65 = vector.shape_cast %64 : vector<8xf32> to vector<8x1xf32>
    %66 = tpu.reciprocal %65 {approx = true} : vector<8x1xf32> -> vector<8x1xf32>
    %67 = vector.broadcast %66 : vector<8x1xf32> to vector<8x8xf32>
    %68 = arith.mulf %63, %67 : vector<8x8xf32>
    %69 = arith.truncf %68 : vector<8x8xf32> to vector<8x8xbf16>
    %cst_35 = arith.constant dense<0.000000e+00> : vector<8x8xf32>
    %70 = tpu.matmul %69, %57, %cst_35 {dimension_numbers = #tpu.dot_dimension_numbers<[1], [0], [0], [1], [0, 0, 1, 1], [], []>} : vector<8x8xbf16>, vector<8x8xbf16>, vector<8x8xf32> -> vector<8x8xf32>
    %71 = arith.truncf %70 : vector<8x8xf32> to vector<8x8xbf16>
    %c0_36 = arith.constant 0 : index
    %c8_37 = arith.constant 8 : index
    %72 = vector.load %arg11[%c0_36, %c8_37] : memref<8x32xbf16, #tpu.memory_space<vmem>>, vector<8x8xbf16>
    tpu.vector_store %arg11[%c0_36, %c8_37], %71 {strides = array<i32>} : memref<8x32xbf16, #tpu.memory_space<vmem>>, vector<8x8xbf16>,
    %c0_38 = arith.constant 0 : index
    %c16 = arith.constant 16 : index
    %73 = vector.load %arg10[%c0_38, %c16] : memref<8x96xbf16, #tpu.memory_space<vmem>>, vector<8x8xbf16>
    %c0_39 = arith.constant 0 : index
    %c48 = arith.constant 48 : index
    %74 = vector.load %arg10[%c0_39, %c48] : memref<8x96xbf16, #tpu.memory_space<vmem>>, vector<8x8xbf16>
    %c0_40 = arith.constant 0 : index
    %c80 = arith.constant 80 : index
    %75 = vector.load %arg10[%c0_40, %c80] : memref<8x96xbf16, #tpu.memory_space<vmem>>, vector<8x8xbf16>
    %cst_41 = arith.constant dense<0.000000e+00> : vector<8x8xf32>
    %76 = tpu.matmul %73, %74, %cst_41 {dimension_numbers = #tpu.dot_dimension_numbers<[1], [1], [0], [0], [0, 0, 1, 0], [], []>} : vector<8x8xbf16>, vector<8x8xbf16>, vector<8x8xf32> -> vector<8x8xf32>
    %cst_42 = arith.constant dense<0xFF800000> : vector<8xf32>
    %77 = vector.multi_reduction <maximumf>, %76, %cst_42 [1] : vector<8x8xf32> to vector<8xf32>
    %78 = vector.shape_cast %77 : vector<8xf32> to vector<8x1xf32>
    %79 = vector.broadcast %78 : vector<8x1xf32> to vector<8x8xf32>
    %80 = arith.subf %76, %79 : vector<8x8xf32>
    %81 = math.exp %80 : vector<8x8xf32>
    %cst_43 = arith.constant dense<0.000000e+00> : vector<8xf32>
    %82 = vector.multi_reduction <add>, %81, %cst_43 [1] : vector<8x8xf32> to vector<8xf32>
    %83 = vector.shape_cast %82 : vector<8xf32> to vector<8x1xf32>
    %84 = tpu.reciprocal %83 {approx = true} : vector<8x1xf32> -> vector<8x1xf32>
    %85 = vector.broadcast %84 : vector<8x1xf32> to vector<8x8xf32>
    %86 = arith.mulf %81, %85 : vector<8x8xf32>
    %87 = arith.truncf %86 : vector<8x8xf32> to vector<8x8xbf16>
    %cst_44 = arith.constant dense<0.000000e+00> : vector<8x8xf32>
    %88 = tpu.matmul %87, %75, %cst_44 {dimension_numbers = #tpu.dot_dimension_numbers<[1], [0], [0], [1], [0, 0, 1, 1], [], []>} : vector<8x8xbf16>, vector<8x8xbf16>, vector<8x8xf32> -> vector<8x8xf32>
    %89 = arith.truncf %88 : vector<8x8xf32> to vector<8x8xbf16>
    %c0_45 = arith.constant 0 : index
    %c16_46 = arith.constant 16 : index
    %90 = vector.load %arg11[%c0_45, %c16_46] : memref<8x32xbf16, #tpu.memory_space<vmem>>, vector<8x8xbf16>
    tpu.vector_store %arg11[%c0_45, %c16_46], %89 {strides = array<i32>} : memref<8x32xbf16, #tpu.memory_space<vmem>>, vector<8x8xbf16>,
    %c0_47 = arith.constant 0 : index
    %c24 = arith.constant 24 : index
    %91 = vector.load %arg10[%c0_47, %c24] : memref<8x96xbf16, #tpu.memory_space<vmem>>, vector<8x8xbf16>
    %c0_48 = arith.constant 0 : index
    %c56 = arith.constant 56 : index
    %92 = vector.load %arg10[%c0_48, %c56] : memref<8x96xbf16, #tpu.memory_space<vmem>>, vector<8x8xbf16>
    %c0_49 = arith.constant 0 : index
    %c88 = arith.constant 88 : index
    %93 = vector.load %arg10[%c0_49, %c88] : memref<8x96xbf16, #tpu.memory_space<vmem>>, vector<8x8xbf16>
    %cst_50 = arith.constant dense<0.000000e+00> : vector<8x8xf32>
    %94 = tpu.matmul %91, %92, %cst_50 {dimension_numbers = #tpu.dot_dimension_numbers<[1], [1], [0], [0], [0, 0, 1, 0], [], []>} : vector<8x8xbf16>, vector<8x8xbf16>, vector<8x8xf32> -> vector<8x8xf32>
    %cst_51 = arith.constant dense<0xFF800000> : vector<8xf32>
    %95 = vector.multi_reduction <maximumf>, %94, %cst_51 [1] : vector<8x8xf32> to vector<8xf32>
    %96 = vector.shape_cast %95 : vector<8xf32> to vector<8x1xf32>
    %97 = vector.broadcast %96 : vector<8x1xf32> to vector<8x8xf32>
    %98 = arith.subf %94, %97 : vector<8x8xf32>
    %99 = math.exp %98 : vector<8x8xf32>
    %cst_52 = arith.constant dense<0.000000e+00> : vector<8xf32>
    %100 = vector.multi_reduction <add>, %99, %cst_52 [1] : vector<8x8xf32> to vector<8xf32>
    %101 = vector.shape_cast %100 : vector<8xf32> to vector<8x1xf32>
    %102 = tpu.reciprocal %101 {approx = true} : vector<8x1xf32> -> vector<8x1xf32>
    %103 = vector.broadcast %102 : vector<8x1xf32> to vector<8x8xf32>
    %104 = arith.mulf %99, %103 : vector<8x8xf32>
    %105 = arith.truncf %104 : vector<8x8xf32> to vector<8x8xbf16>
    %cst_53 = arith.constant dense<0.000000e+00> : vector<8x8xf32>
    %106 = tpu.matmul %105, %93, %cst_53 {dimension_numbers = #tpu.dot_dimension_numbers<[1], [0], [0], [1], [0, 0, 1, 1], [], []>} : vector<8x8xbf16>, vector<8x8xbf16>, vector<8x8xf32> -> vector<8x8xf32>
    %107 = arith.truncf %106 : vector<8x8xf32> to vector<8x8xbf16>
    %c0_54 = arith.constant 0 : index
    %c24_55 = arith.constant 24 : index
    %108 = vector.load %arg11[%c0_54, %c24_55] : memref<8x32xbf16, #tpu.memory_space<vmem>>, vector<8x8xbf16>
    tpu.vector_store %arg11[%c0_54, %c24_55], %107 {strides = array<i32>} : memref<8x32xbf16, #tpu.memory_space<vmem>>, vector<8x8xbf16>,
    %c0_56 = arith.constant 0 : index
    %c0_57 = arith.constant 0 : index
    %109 = vector.load %arg11[%c0_56, %c0_57] : memref<8x32xbf16, #tpu.memory_space<vmem>>, vector<8x32xbf16>
    %c0_58 = arith.constant 0 : index
    %c0_59 = arith.constant 0 : index
    %110 = vector.load %arg4[%c0_58, %c0_59] : memref<32x32xbf16, #tpu.memory_space<vmem>>, vector<32x32xbf16>
    %cst_60 = arith.constant dense<0.000000e+00> : vector<8x32xf32>
    %111 = tpu.matmul %109, %110, %cst_60 {dimension_numbers = #tpu.dot_dimension_numbers<[1], [0], [0], [1], [0, 0, 1, 1], [], []>} : vector<8x32xbf16>, vector<32x32xbf16>, vector<8x32xf32> -> vector<8x32xf32>
    %112 = vector.broadcast %5 : vector<1x32xf32> to vector<8x32xf32>
    %113 = arith.addf %111, %112 : vector<8x32xf32>
    %114 = arith.addf %0, %113 : vector<8x32xf32>
    %cst_61 = arith.constant dense<0.000000e+00> : vector<8xf32>
    %115 = vector.multi_reduction <add>, %114, %cst_61 [1] : vector<8x32xf32> to vector<8xf32>
    %116 = vector.shape_cast %115 : vector<8xf32> to vector<8x1xf32>
    %cst_62 = arith.constant 3.200000e+01 : f32
    %117 = vector.broadcast %cst_62 : f32 to vector<8x1xf32>
    %118 = arith.divf %116, %117 : vector<8x1xf32>
    %119 = vector.broadcast %118 : vector<8x1xf32> to vector<8x32xf32>
    %120 = arith.subf %114, %119 : vector<8x32xf32>
    %121 = arith.mulf %120, %120 : vector<8x32xf32>
    %cst_63 = arith.constant dense<0.000000e+00> : vector<8xf32>
    %122 = vector.multi_reduction <add>, %121, %cst_63 [1] : vector<8x32xf32> to vector<8xf32>
    %123 = vector.shape_cast %122 : vector<8xf32> to vector<8x1xf32>
    %cst_64 = arith.constant 3.200000e+01 : f32
    %124 = vector.broadcast %cst_64 : f32 to vector<8x1xf32>
    %125 = arith.divf %123, %124 : vector<8x1xf32>
    %126 = vector.broadcast %118 : vector<8x1xf32> to vector<8x32xf32>
    %127 = arith.subf %114, %126 : vector<8x32xf32>
    %cst_65 = arith.constant 9.99999997E-7 : f32
    %128 = vector.broadcast %cst_65 : f32 to vector<8x1xf32>
    %129 = arith.addf %125, %128 : vector<8x1xf32>
    %130 = math.rsqrt %129 : vector<8x1xf32>
    %131 = vector.broadcast %130 : vector<8x1xf32> to vector<8x32xf32>
    %132 = arith.mulf %127, %131 : vector<8x32xf32>
    %133 = vector.broadcast %3 : vector<1x32xf32> to vector<8x32xf32>
    %134 = arith.mulf %132, %133 : vector<8x32xf32>
    %135 = vector.broadcast %4 : vector<1x32xf32> to vector<8x32xf32>
    %136 = arith.addf %134, %135 : vector<8x32xf32>
    %137 = arith.truncf %136 : vector<8x32xf32> to vector<8x32xbf16>
    %c0_66 = arith.constant 0 : index
    %c0_67 = arith.constant 0 : index
    %138 = vector.load %arg6[%c0_66, %c0_67] : memref<32x64xbf16, #tpu.memory_space<vmem>>, vector<32x64xbf16>
    %cst_68 = arith.constant dense<0.000000e+00> : vector<8x64xf32>
    %139 = tpu.matmul %137, %138, %cst_68 {dimension_numbers = #tpu.dot_dimension_numbers<[1], [0], [0], [1], [0, 0, 1, 1], [], []>} : vector<8x32xbf16>, vector<32x64xbf16>, vector<8x64xf32> -> vector<8x64xf32>
    %c0_69 = arith.constant 0 : index
    %c0_70 = arith.constant 0 : index
    %140 = vector.load %arg7[%c0_69, %c0_70] : memref<1x64xf32, #tpu.memory_space<vmem>>, vector<1x64xf32>
    %141 = vector.broadcast %140 : vector<1x64xf32> to vector<8x64xf32>
    %142 = arith.addf %139, %141 : vector<8x64xf32>
    %cst_71 = arith.constant 5.000000e-01 : f32
    %143 = vector.broadcast %cst_71 : f32 to vector<8x64xf32>
    %144 = arith.mulf %143, %142 : vector<8x64xf32>
    %145 = arith.mulf %142, %142 : vector<8x64xf32>
    %146 = arith.mulf %145, %142 : vector<8x64xf32>
    %cst_72 = arith.constant 4.471500e-02 : f32
    %147 = vector.broadcast %cst_72 : f32 to vector<8x64xf32>
    %148 = arith.mulf %147, %146 : vector<8x64xf32>
    %149 = arith.addf %142, %148 : vector<8x64xf32>
    %cst_73 = arith.constant 0.797884583 : f32
    %150 = vector.broadcast %cst_73 : f32 to vector<8x64xf32>
    %151 = arith.mulf %150, %149 : vector<8x64xf32>
    %152 = math.tanh %151 : vector<8x64xf32>
    %cst_74 = arith.constant 1.000000e+00 : f32
    %153 = vector.broadcast %cst_74 : f32 to vector<8x64xf32>
    %154 = arith.addf %153, %152 : vector<8x64xf32>
    %155 = arith.mulf %144, %154 : vector<8x64xf32>
    %156 = arith.truncf %155 : vector<8x64xf32> to vector<8x64xbf16>
    %c0_75 = arith.constant 0 : index
    %c0_76 = arith.constant 0 : index
    %157 = vector.load %arg8[%c0_75, %c0_76] : memref<64x32xbf16, #tpu.memory_space<vmem>>, vector<64x32xbf16>
    %cst_77 = arith.constant dense<0.000000e+00> : vector<8x32xf32>
    %158 = tpu.matmul %156, %157, %cst_77 {dimension_numbers = #tpu.dot_dimension_numbers<[1], [0], [0], [1], [0, 0, 1, 1], [], []>} : vector<8x64xbf16>, vector<64x32xbf16>, vector<8x32xf32> -> vector<8x32xf32>
    %159 = vector.broadcast %6 : vector<1x32xf32> to vector<8x32xf32>
    %160 = arith.addf %158, %159 : vector<8x32xf32>
    %161 = arith.addf %114, %160 : vector<8x32xf32>
    %c0_78 = arith.constant 0 : index
    %c0_79 = arith.constant 0 : index
    %162 = vector.load %arg9[%c0_78, %c0_79] : memref<8x32xf32, #tpu.memory_space<vmem>>, vector<8x32xf32>
    tpu.vector_store %arg9[%c0_78, %c0_79], %161 {strides = array<i32>} : memref<8x32xf32, #tpu.memory_space<vmem>>, vector<8x32xf32>,
    return
  }
  func.func @transform_0(%arg0: i32) -> (i32, i32) {
    %c0_i32 = arith.constant 0 : i32
    %c0_i32_0 = arith.constant 0 : i32
    return %arg0, %c0_i32 : i32, i32
  }
  func.func @transform_1(%arg0: i32) -> (i32, i32) {
    %c0_i32 = arith.constant 0 : i32
    %c0_i32_0 = arith.constant 0 : i32
    %c0_i32_1 = arith.constant 0 : i32
    return %c0_i32, %c0_i32_0 : i32, i32
  }
  func.func @transform_2(%arg0: i32) -> (i32, i32) {
    %c0_i32 = arith.constant 0 : i32
    %c0_i32_0 = arith.constant 0 : i32
    %c0_i32_1 = arith.constant 0 : i32
    return %c0_i32, %c0_i32_0 : i32, i32
  }
  func.func @transform_3(%arg0: i32) -> (i32, i32) {
    %c0_i32 = arith.constant 0 : i32
    %c0_i32_0 = arith.constant 0 : i32
    %c0_i32_1 = arith.constant 0 : i32
    return %c0_i32, %c0_i32_0 : i32, i32
  }
  func.func @transform_4(%arg0: i32) -> (i32, i32) {
    %c0_i32 = arith.constant 0 : i32
    %c0_i32_0 = arith.constant 0 : i32
    %c0_i32_1 = arith.constant 0 : i32
    return %c0_i32, %c0_i32_0 : i32, i32
  }
  func.func @transform_5(%arg0: i32) -> (i32, i32) {
    %c0_i32 = arith.constant 0 : i32
    %c0_i32_0 = arith.constant 0 : i32
    %c0_i32_1 = arith.constant 0 : i32
    return %c0_i32, %c0_i32_0 : i32, i32
  }
  func.func @transform_6(%arg0: i32) -> (i32, i32) {
    %c0_i32 = arith.constant 0 : i32
    %c0_i32_0 = arith.constant 0 : i32
    %c0_i32_1 = arith.constant 0 : i32
    return %c0_i32, %c0_i32_0 : i32, i32
  }
  func.func @transform_7(%arg0: i32) -> (i32, i32) {
    %c0_i32 = arith.constant 0 : i32
    %c0_i32_0 = arith.constant 0 : i32
    %c0_i32_1 = arith.constant 0 : i32
    return %c0_i32, %c0_i32_0 : i32, i32
  }
  func.func @transform_8(%arg0: i32) -> (i32, i32) {
    %c0_i32 = arith.constant 0 : i32
    %c0_i32_0 = arith.constant 0 : i32
    return %arg0, %c0_i32 : i32, i32
  }
}

</mosaic_0001>

<llo_original>
// kernel: tpu_custom_call.1
$region0: #{tpu_custom_call.1}
  #allocation0 [shape = 'u32[]', space=smem, size = 0x4, offset = 0x4, fixed_abs, tag = 'smem constant byte address 0x4 - core index']
  #allocation1 [shape = 'u32[144,128]{1,0:T(1,128)}', space=vmem, size = 0x12000, scoped, tag = 'internal scratch']
  #allocation2 [shape = 'bf16[8,96]{1,0:T(8,128)(2,1)}', space=vmem, size = 0x800, scoped, tag = 'scratch operand']
  #allocation3 [shape = 'bf16[8,32]{1,0:T(8,128)(2,1)}', space=vmem, size = 0x800, scoped, tag = 'scratch operand']
  %s0 = inlined_call_operand.vmem [shape: f32[16,32], index: 0, kind: input, shape index: {}]
  %s1 = inlined_call_operand.vmem [shape: bf16[32,96], index: 1, kind: input, shape index: {}]
  %s2 = inlined_call_operand.vmem [shape: f32[1,96], index: 2, kind: input, shape index: {}]
  %s3 = inlined_call_operand.vmem [shape: bf16[32,32], index: 3, kind: input, shape index: {}]
  %s4 = inlined_call_operand.vmem [shape: f32[8,32], index: 4, kind: input, shape index: {}]
  %s5 = inlined_call_operand.hbm [shape: bf16[32,64], index: 5, kind: input, shape index: {}]
  %s6 = inlined_call_operand.vmem [shape: f32[1,64], index: 6, kind: input, shape index: {}]
  %s7 = inlined_call_operand.vmem [shape: bf16[64,32], index: 7, kind: input, shape index: {}]
  %s8 = inlined_call_operand.hbm [shape: f32[16,32], index: 8, kind: output, shape index: {}]
  %s9 = sld [smem:[#allocation0]]
  $region69: #{tpu_custom_call.1} parent=0
    _
  %s11 = ssub.s32 1, %s9
  %s12 = scalar_select 0, %s11, %s9
  $region1: #{tpu_custom_call.1} parent=0
    #allocation4 [shape = 'u8[8192]{0}', space=vmem, size = 0x2000, scoped, tag = 'input window, operand 5, single buffered']
    #allocation5 [shape = 's32[2]{0}', space=sflag, size = 0x8, scoped, tag = 'scoped memory for tpu_custom_call.1']
    #allocation6 [shape = 's32[2]{0}', space=sflag, size = 0x8, scoped, tag = 'scoped memory for tpu_custom_call.1']
    #allocation7 [shape = 'u8[8192]{0}', space=vmem, size = 0x2000, scoped, tag = 'output window, operand 0']
    %13 = vsyncpa [#allocation5], 0
    %14 = vsyncpa [#allocation6], 0
    %s15 = scalar_lea.sflag [#allocation6], 1
    %16 = vsyncpa %s15, 0
    loop: start=0, step=1, limit=4
    $region2: #{tpu_custom_call.1} parent=1 // loop_pre_header
      _
    $region3: #{tpu_custom_call.1} parent=1 // loop_header
      %s18 = sphi 0, %s22
      %p19 = scmp.ge.s32.totalorder %s18, 4
      %s28 = sphi 0, %s30
      %s31 = sphi 0, %s28
      %s32 = sphi 0, %s31
      %s48 = sphi 0, %s32
      %s52 = sphi 0, %s52
      %s54 = sphi 0, %s52
      %s55 = sphi 0, %s54
      %s69 = sphi 0, %s55
      %s73 = sphi 0, %s73
      %s75 = sphi 0, %s73
      %s76 = sphi 0, %s75
      %s90 = sphi 0, %s76
      %s94 = sphi 0, %s94
      %s96 = sphi 0, %s94
      %s97 = sphi 0, %s96
      %s111 = sphi 0, %s97
      %s115 = sphi 0, %s115
      %s117 = sphi 0, %s115
      %s118 = sphi 0, %s117
      %s132 = sphi 0, %s118
      %s136 = sphi 0, %s136
      %s138 = sphi 0, %s136
      %s139 = sphi 0, %s138
      %s153 = sphi 0, %s139
      %s157 = sphi 0, %s157
      %s159 = sphi 0, %s157
      %s160 = sphi 0, %s159
      %s174 = sphi 0, %s160
      %s178 = sphi 0, %s178
      %s180 = sphi 0, %s178
      %s181 = sphi 0, %s180
      %s195 = sphi 0, %s181
      %s201 = sphi 0, %s203
      %s204 = sphi 0, %s201
      %s205 = sphi 0, %s204
      %s221 = sphi 0, %s205
    $region4: #{tpu_custom_call.1} parent=1 // loop_header_branch
      %21 = sbr.rel (%p19) target = $region8
    $region5: #{tpu_custom_call.1} parent=1 // loop_body
      %s23 = ssub.s32 %s18, 1
      %s24 = ssub.s32 %s18, 2
      %s25 = sadd.s32 %s18, 1
      %s26 = ssub.s32 %s18, %s25
      %p27 = scmp.eq.s32.totalorder %s26, 0
      %s29 = sadd.s32 %s28, 1
      %s30 = scalar_select %p27, %s28, %s29
      %p33 = pneg %p27
      %p34 = scmp.eq.s32.totalorder %s18, 1
      %p35 = por %p33, %p34
      %p36 = scmp.ne.s32.totalorder %s28, %s31
      %p37 = scmp.eq.s32.totalorder %s18, 0
      %p38 = por %p36, %p37
      %p39 = scmp.ne.s32.totalorder %s28, %s31
      %p40 = scmp.eq.s32.totalorder %s23, 1
      %p41 = por %p39, %p40
      %p42 = scmp.ne.s32.totalorder %s31, %s32
      %p43 = scmp.eq.s32.totalorder %s23, 0
      %p44 = por %p42, %p43
      %p45 = scmp.ne.s32.totalorder %s31, %s32
      %p46 = scmp.eq.s32.totalorder %s24, 1
      %p47 = por %p45, %p46
      %p49 = scmp.ne.s32.totalorder %s32, %s48
      %p50 = scmp.eq.s32.totalorder %s24, 0
      %p51 = por %p49, %p50
      %s53 = sadd.s32 %s52, 1
      %p56 = scmp.eq.s32.totalorder %s18, 1
      %p57 = scmp.ne.s32.totalorder %s52, %s54
      %p58 = scmp.eq.s32.totalorder %s18, 0
      %p59 = por %p57, %p58
      %p60 = scmp.ne.s32.totalorder %s52, %s54
      %p61 = scmp.eq.s32.totalorder %s23, 1
      %p62 = por %p60, %p61
      %p63 = scmp.ne.s32.totalorder %s54, %s55
      %p64 = scmp.eq.s32.totalorder %s23, 0
      %p65 = por %p63, %p64
      %p66 = scmp.ne.s32.totalorder %s54, %s55
      %p67 = scmp.eq.s32.totalorder %s24, 1
      %p68 = por %p66, %p67
      %p70 = scmp.ne.s32.totalorder %s55, %s69
      %p71 = scmp.eq.s32.totalorder %s24, 0
      %p72 = por %p70, %p71
      %s74 = sadd.s32 %s73, 1
      %p77 = scmp.eq.s32.totalorder %s18, 1
      %p78 = scmp.ne.s32.totalorder %s73, %s75
      %p79 = scmp.eq.s32.totalorder %s18, 0
      %p80 = por %p78, %p79
      %p81 = scmp.ne.s32.totalorder %s73, %s75
      %p82 = scmp.eq.s32.totalorder %s23, 1
      %p83 = por %p81, %p82
      %p84 = scmp.ne.s32.totalorder %s75, %s76
      %p85 = scmp.eq.s32.totalorder %s23, 0
      %p86 = por %p84, %p85
      %p87 = scmp.ne.s32.totalorder %s75, %s76
      %p88 = scmp.eq.s32.totalorder %s24, 1
      %p89 = por %p87, %p88
      %p91 = scmp.ne.s32.totalorder %s76, %s90
      %p92 = scmp.eq.s32.totalorder %s24, 0
      %p93 = por %p91, %p92
      %s95 = sadd.s32 %s94, 1
      %p98 = scmp.eq.s32.totalorder %s18, 1
      %p99 = scmp.ne.s32.totalorder %s94, %s96
      %p100 = scmp.eq.s32.totalorder %s18, 0
      %p101 = por %p99, %p100
      %p102 = scmp.ne.s32.totalorder %s94, %s96
      %p103 = scmp.eq.s32.totalorder %s23, 1
      %p104 = por %p102, %p103
      %p105 = scmp.ne.s32.totalorder %s96, %s97
      %p106 = scmp.eq.s32.totalorder %s23, 0
      %p107 = por %p105, %p106
      %p108 = scmp.ne.s32.totalorder %s96, %s97
      %p109 = scmp.eq.s32.totalorder %s24, 1
      %p110 = por %p108, %p109
      %p112 = scmp.ne.s32.totalorder %s97, %s111
      %p113 = scmp.eq.s32.totalorder %s24, 0
      %p114 = por %p112, %p113
      %s116 = sadd.s32 %s115, 1
      %p119 = scmp.eq.s32.totalorder %s18, 1
      %p120 = scmp.ne.s32.totalorder %s115, %s117
      %p121 = scmp.eq.s32.totalorder %s18, 0
      %p122 = por %p120, %p121
      %p123 = scmp.ne.s32.totalorder %s115, %s117
      %p124 = scmp.eq.s32.totalorder %s23, 1
      %p125 = por %p123, %p124
      %p126 = scmp.ne.s32.totalorder %s117, %s118
      %p127 = scmp.eq.s32.totalorder %s23, 0
      %p128 = por %p126, %p127
      %p129 = scmp.ne.s32.totalorder %s117, %s118
      %p130 = scmp.eq.s32.totalorder %s24, 1
      %p131 = por %p129, %p130
      %p133 = scmp.ne.s32.totalorder %s118, %s132
      %p134 = scmp.eq.s32.totalorder %s24, 0
      %p135 = por %p133, %p134
      %s137 = sadd.s32 %s136, 1
      %p140 = scmp.eq.s32.totalorder %s18, 1
      %p141 = scmp.ne.s32.totalorder %s136, %s138
      %p142 = scmp.eq.s32.totalorder %s18, 0
      %p143 = por %p141, %p142
      %p144 = scmp.ne.s32.totalorder %s136, %s138
      %p145 = scmp.eq.s32.totalorder %s23, 1
      %p146 = por %p144, %p145
      %p147 = scmp.ne.s32.totalorder %s138, %s139
      %p148 = scmp.eq.s32.totalorder %s23, 0
      %p149 = por %p147, %p148
      %p150 = scmp.ne.s32.totalorder %s138, %s139
      %p151 = scmp.eq.s32.totalorder %s24, 1
      %p152 = por %p150, %p151
      %p154 = scmp.ne.s32.totalorder %s139, %s153
      %p155 = scmp.eq.s32.totalorder %s24, 0
      %p156 = por %p154, %p155
      %s158 = sadd.s32 %s157, 1
      %p161 = scmp.eq.s32.totalorder %s18, 1
      %p162 = scmp.ne.s32.totalorder %s157, %s159
      %p163 = scmp.eq.s32.totalorder %s18, 0
      %p164 = por %p162, %p163
      %p165 = scmp.ne.s32.totalorder %s157, %s159
      %p166 = scmp.eq.s32.totalorder %s23, 1
      %p167 = por %p165, %p166
      %p168 = scmp.ne.s32.totalorder %s159, %s160
      %p169 = scmp.eq.s32.totalorder %s23, 0
      %p170 = por %p168, %p169
      %p171 = scmp.ne.s32.totalorder %s159, %s160
      %p172 = scmp.eq.s32.totalorder %s24, 1
      %p173 = por %p171, %p172
      %p175 = scmp.ne.s32.totalorder %s160, %s174
      %p176 = scmp.eq.s32.totalorder %s24, 0
      %p177 = por %p175, %p176
      %s179 = sadd.s32 %s178, 1
      %p182 = scmp.eq.s32.totalorder %s18, 1
      %p183 = scmp.ne.s32.totalorder %s178, %s180
      %p184 = scmp.eq.s32.totalorder %s18, 0
      %p185 = por %p183, %p184
      %p186 = scmp.ne.s32.totalorder %s178, %s180
      %p187 = scmp.eq.s32.totalorder %s23, 1
      %p188 = por %p186, %p187
      %p189 = scmp.ne.s32.totalorder %s180, %s181
      %p190 = scmp.eq.s32.totalorder %s23, 0
      %p191 = por %p189, %p190
      %p192 = scmp.ne.s32.totalorder %s180, %s181
      %p193 = scmp.eq.s32.totalorder %s24, 1
      %p194 = por %p192, %p193
      %p196 = scmp.ne.s32.totalorder %s181, %s195
      %p197 = scmp.eq.s32.totalorder %s24, 0
      %p198 = por %p196, %p197
      %s199 = ssub.s32 %s18, %s25
      %p200 = scmp.eq.s32.totalorder %s199, 0
      %s202 = sadd.s32 %s201, 1
      %s203 = scalar_select %p200, %s201, %s202
      %p206 = pneg %p200
      %p207 = scmp.eq.s32.totalorder %s18, 1
      %p208 = por %p206, %p207
      %p209 = scmp.ne.s32.totalorder %s201, %s204
      %p210 = scmp.eq.s32.totalorder %s18, 0
      %p211 = por %p209, %p210
      %p212 = scmp.ne.s32.totalorder %s201, %s204
      %p213 = scmp.eq.s32.totalorder %s23, 1
      %p214 = por %p212, %p213
      %p215 = scmp.ne.s32.totalorder %s204, %s205
      %p216 = scmp.eq.s32.totalorder %s23, 0
      %p217 = por %p215, %p216
      %p218 = scmp.ne.s32.totalorder %s204, %s205
      %p219 = scmp.eq.s32.totalorder %s24, 1
      %p220 = por %p218, %p219
      %p222 = scmp.ne.s32.totalorder %s205, %s221
      %p223 = scmp.eq.s32.totalorder %s24, 0
      %p224 = por %p222, %p223
      %p225 = scmp.le.s32.totalorder 1, %s18
      %p226 = scmp.lt.s32.totalorder %s18, 3
      %p227 = pnand %p225, %p226
      %p228 = pneg %p227
      // Predicated region
      $region9: #{tpu_custom_call.1} parent=5 // pred_check
        _
      $region10: #{tpu_custom_call.1} parent=5 // pred_check_branch
        %230 = sbr.rel (%p227) target = $region12
      $region11: #{tpu_custom_call.1} parent=5 // pred_region
        %s231 = ssub.s32 %s18, 1
        // Predicated region
        $region13: #{tpu_custom_call.1} parent=11 // pred_check
          %p232 = pneg %p65
        $region14: #{tpu_custom_call.1} parent=11 // pred_check_branch
          %234 = sbr.rel (%p232) target = $region16
        $region15: #{tpu_custom_call.1} parent=11 // pred_region
          _
        $region16: #{tpu_custom_call.1} parent=11 // pred_fallthru
          _
        // Predicated region
        $region17: #{tpu_custom_call.1} parent=11 // pred_check
          %p235 = pneg %p86
        $region18: #{tpu_custom_call.1} parent=11 // pred_check_branch
          %237 = sbr.rel (%p235) target = $region20
        $region19: #{tpu_custom_call.1} parent=11 // pred_region
          _
        $region20: #{tpu_custom_call.1} parent=11 // pred_fallthru
          _
        // Predicated region
        $region21: #{tpu_custom_call.1} parent=11 // pred_check
          %p238 = pneg %p107
        $region22: #{tpu_custom_call.1} parent=11 // pred_check_branch
          %240 = sbr.rel (%p238) target = $region24
        $region23: #{tpu_custom_call.1} parent=11 // pred_region
          _
        $region24: #{tpu_custom_call.1} parent=11 // pred_fallthru
          _
        // Predicated region
        $region25: #{tpu_custom_call.1} parent=11 // pred_check
          %p241 = pneg %p128
        $region26: #{tpu_custom_call.1} parent=11 // pred_check_branch
          %243 = sbr.rel (%p241) target = $region28
        $region27: #{tpu_custom_call.1} parent=11 // pred_region
          _
        $region28: #{tpu_custom_call.1} parent=11 // pred_fallthru
          _
        // Predicated region
        $region29: #{tpu_custom_call.1} parent=11 // pred_check
          %p244 = pneg %p149
        $region30: #{tpu_custom_call.1} parent=11 // pred_check_branch
          %246 = sbr.rel (%p244) target = $region32
        $region31: #{tpu_custom_call.1} parent=11 // pred_region
          %s248 = ssub.s32 256, 256
          %249 = vsyncadd [#allocation5], %s248
          %s250 = sshll.u32 [#allocation4], 4
          %s251 = int_to_ptr.vmem [resolvable:$true] %s250
          %256 = dma.hbm_to_vmem [thread:$0]  %s5, 256, %s251, [#allocation5], 64, 64, 4
        $region32: #{tpu_custom_call.1} parent=11 // pred_fallthru
          _
        // Predicated region
        $region33: #{tpu_custom_call.1} parent=11 // pred_check
          %p257 = pneg %p170
        $region34: #{tpu_custom_call.1} parent=11 // pred_check_branch
          %259 = sbr.rel (%p257) target = $region36
        $region35: #{tpu_custom_call.1} parent=11 // pred_region
          _
        $region36: #{tpu_custom_call.1} parent=11 // pred_fallthru
          _
        // Predicated region
        $region37: #{tpu_custom_call.1} parent=11 // pred_check
          %p260 = pneg %p191
        $region38: #{tpu_custom_call.1} parent=11 // pred_check_branch
          %262 = sbr.rel (%p260) target = $region40
        $region39: #{tpu_custom_call.1} parent=11 // pred_region
          _
        $region40: #{tpu_custom_call.1} parent=11 // pred_fallthru
          _
      $region12: #{tpu_custom_call.1} parent=5 // pred_fallthru
        _
      %p263 = scmp.lt.s32.totalorder %s18, 2
      // Predicated region
      $region41: #{tpu_custom_call.1} parent=5 // pred_check
        %p264 = pneg %p263
      $region42: #{tpu_custom_call.1} parent=5 // pred_check_branch
        %266 = sbr.rel (%p264) target = $region44
      $region43: #{tpu_custom_call.1} parent=5 // pred_region
        // Predicated region
        $region45: #{tpu_custom_call.1} parent=43 // pred_check
          %p267 = pneg %p38
        $region46: #{tpu_custom_call.1} parent=43 // pred_check_branch
          %269 = sbr.rel (%p267) target = $region48
        $region47: #{tpu_custom_call.1} parent=43 // pred_region
          %p270 = scmp.lt.s32.totalorder %s18, 1
          %s271 = scalar_select %p270, %s18, 1
          %s272 = smul.addr %s271, 8
          %s273 = scalar_lea.vmem %s0, %s272
        $region48: #{tpu_custom_call.1} parent=43 // pred_fallthru
          _
      $region44: #{tpu_custom_call.1} parent=5 // pred_fallthru
        _
      %p274 = scmp.le.s32.totalorder 1, %s18
      %p275 = scmp.lt.s32.totalorder %s18, 3
      %p276 = pnand %p274, %p275
      %p277 = pneg %p276
      // Predicated region
      $region49: #{tpu_custom_call.1} parent=5 // pred_check
        _
      $region50: #{tpu_custom_call.1} parent=5 // pred_check_branch
        %279 = sbr.rel (%p276) target = $region52
      $region51: #{tpu_custom_call.1} parent=5 // pred_region
        %s280 = ssub.s32 %s18, 1
        // Predicated region
        $region53: #{tpu_custom_call.1} parent=51 // pred_check
          %p281 = pneg %p149
        $region54: #{tpu_custom_call.1} parent=51 // pred_check_branch
          %283 = sbr.rel (%p281) target = $region56
        $region55: #{tpu_custom_call.1} parent=51 // pred_region
          %284 = dma.done [#allocation5], 256
        $region56: #{tpu_custom_call.1} parent=51 // pred_fallthru
          _
        %p285 = scmp.lt.s32.totalorder %s23, 1
        %s286 = scalar_select %p285, %s23, 1
        %s287 = smul.addr %s286, 8
        %s288 = scalar_lea.vmem %s0, %s287
        %p289 = pneg %p44
        %p290 = pneg %p41
        %p291 = pneg %p65
        %p292 = pneg %p62
        %p293 = pneg %p86
        %p294 = pneg %p83
        %p295 = pneg %p107
        %p296 = pneg %p104
        %p297 = pneg %p128
        %p298 = pneg %p125
        %p299 = pneg %p149
        %p300 = pneg %p146
        %p301 = pneg %p170
        %p302 = pneg %p167
        %p303 = pneg %p191
        %p304 = pneg %p188
        %p305 = pneg %p217
        %p306 = pneg %p214
        %s307 = sand.u32 %s204, 1
        %s308 = scalar_lea.sflag [#allocation6], %s307
        %s309 = sand.u32 %s204, 1
        %s310 = smul.addr %s309, 8
        %s311 = scalar_lea.vmem [#allocation7], %s310
        %p312 = scmp.lt.s32.totalorder %s23, 1
        %s313 = scalar_select %p312, %s23, 1
        %s314 = smul.addr %s313, 8
        %s315 = scalar_lea.vmem %s0, %s314
        %v317 = vld [vmem:[%s315] sm:$0xff]
        %v318 = vld [vmem:[%s4] sm:$0x1]
        %v319 = vld [vmem:[%s4 + $0x1] sm:$0x1]
        %v320 = vld [vmem:[%s4 + $0x2] sm:$0x1]
        %v321 = vld [vmem:[%s4 + $0x3] sm:$0x1]
        %v322 = vld [vmem:[%s4 + $0x4] sm:$0x1]
        %v323 = vld [vmem:[%s4 + $0x5] sm:$0x1]
        %vm324 = vcmask 261120
        %v325 = vsel %vm324, %v317, 0.0
        %326 = vadd.xlane.f32.xlu0 %v325
        %v327 = vpop.xlane.xlu0 %326
        %v328 = vrcp.pop 32.0
        %v329 = vmul.f32 %v327, %v328
        %v330 = vsub.f32 %v317, %v329
        %v331 = vmul.f32 %v330, %v330
        %v332 = vsel %vm324, %v331, 0.0
        %333 = vadd.xlane.f32.xlu0 %v332
        %v334 = vpop.xlane.xlu0 %333
        %v335 = vmul.f32 %v334, %v328
        %v336 = vadd.f32 %v335, 1e-06
        %v337 = vrsqrt.pop %v336
        %v338 = vmul.f32 %v330, %v337
        %v339 = vlaneseq
        %v340 = vshrl.u32 %v339, 7
        %v341 = vsub.s32 0, %v340
        %v342 = vrot.slane %v318, %v341
        %v343 = vmul.f32 %v338, %v342
        %v344 = vlaneseq
        %v345 = vshrl.u32 %v344, 7
        %v346 = vsub.s32 0, %v345
        %v347 = vrot.slane %v319, %v346
        %v348 = vadd.f32 %v343, %v347
        %v349 = vpack.c.bf16 %v348, %v348
        %v350 = vld [vmem:[%s1] sm:$0xf]
        %v351 = vld [vmem:[%s1 + $0x4] sm:$0xf]
        %v352 = vld [vmem:[%s1 + $0x8] sm:$0xf]
        %v353 = vld [vmem:[%s1 + $0xc] sm:$0xf]
        %v354 = vld [vmem:[%s2] sm:$0x1]
        %v356 = vlaneseq
        %v357 = vshrl.u32 %v356, 7
        %v358 = vsub.s32 0, %v357
        %v359 = vrot.slane %v354, %v358
        %v365 = vunpack.c.l.b16 %v350
        %v366 = vunpack.c.l.b16 %v351
        %v367 = vunpack.c.l.b16 %v352
        %v368 = vunpack.c.l.b16 %v353
        %v369 = vpack.c.b16 %v366, %v365
        %v370 = vpack.c.b16 %v368, %v367
        %v374 = vsel %vm324, %v349, 0
        %376 = vmatprep.subr.bf16.mxu0 0
        %377 = vmatpush1.bf16.msra.mxu0 %v369
        %378 = vmatprep.subr.bf16.mxu0 0
        %379 = vmatpush1.bf16.msra.mxu0 %v370
        %380 = vmatprep.subr.bf16.mxu0 0
        %381 = vmatpush1.bf16.msra.mxu0 0
        %382 = vmatprep.subr.bf16.mxu0 0
        %383 = vmatpush1.bf16.msra.mxu0 0
        %384 = vmatprep.subr.bf16.mxu0 0
        %385 = vmatpush1.bf16.msra.mxu0 0
        %386 = vmatprep.subr.bf16.mxu0 0
        %387 = vmatpush1.bf16.msra.mxu0 0
        %388 = vmatprep.subr.bf16.mxu0 0
        %389 = vmatpush1.bf16.msra.mxu0 0
        %390 = vmatprep.subr.bf16.mxu0 0
        %391 = vmatpush1.bf16.msra.mxu0 0
        %392 = vmatprep.subr.bf16.mxu0 0
        %393 = vmatpush1.bf16.msra.mxu0 0
        %394 = vmatprep.subr.bf16.mxu0 0
        %395 = vmatpush1.bf16.msra.mxu0 0
        %396 = vmatprep.subr.bf16.mxu0 0
        %397 = vmatpush1.bf16.msra.mxu0 0
        %398 = vmatprep.subr.bf16.mxu0 0
        %399 = vmatpush1.bf16.msra.mxu0 0
        %400 = vmatprep.subr.bf16.mxu0 0
        %401 = vmatpush1.bf16.msra.mxu0 0
        %402 = vmatprep.subr.bf16.mxu0 0
        %403 = vmatpush1.bf16.msra.mxu0 0
        %404 = vmatprep.subr.bf16.mxu0 0
        %405 = vmatpush1.bf16.msra.mxu0 0
        %406 = vmatprep.subr.bf16.mxu0 0
        %407 = vmatpush1.bf16.msra.mxu0 0
        %408 = vmatprep.mubr.bf16.mxu0 0
        %409 = vmatmul.mubr.bf16.gmra.mrb[0].mxu0 %v374
        %v410 = vpop.f32.mrb[0].mxu0
        %v411 = vadd.f32 %v359, %v410
        %v412 = vpop.f32.mrb[0].mxu0
        %v413 = vpop.f32.mrb[0].mxu0
        %v414 = vpop.f32.mrb[0].mxu0
        %415 = vdwg.mxu0
        %v416 = vpack.c.bf16 %v411, %v411
        %vm417 = vcmask 781312
        %418 = vst.msk [vmem:[#allocation2] sm:$0xf] %vm417, %v416
        %v419 = vld [vmem:[#allocation2] sm:$0xf]
        %v421 = vunpack.c.l.b16 %v419
        %v422 = vpack.c.b16 %v421, %v421
        %423 = vrot.lane.b32.xlu0 %v422, 96
        %v424 = vpop.permute.xlu0 %423
        %vm425 = vcmask 64512
        %v427 = vsel %vm425, %v419, 0
        %v430 = vsel %vm425, %v424, 0
        %432 = vmatprep.subr.bf16.mxu0 0
        %433 = vmatpush1.bf16.xpose.msra.mxu0 %v430
        %434 = vmatprep.subr.bf16.mxu0 0
        %435 = vmatpush1.bf16.xpose.msra.mxu0 0
        %436 = vmatprep.subr.bf16.mxu0 0
        %437 = vmatpush1.bf16.xpose.msra.mxu0 0
        %438 = vmatprep.subr.bf16.mxu0 0
        %439 = vmatpush1.bf16.xpose.msra.mxu0 0
        %440 = vmatprep.subr.bf16.mxu0 0
        %441 = vmatpush1.bf16.xpose.msra.mxu0 0
        %442 = vmatprep.subr.bf16.mxu0 0
        %443 = vmatpush1.bf16.xpose.msra.mxu0 0
        %444 = vmatprep.subr.bf16.mxu0 0
        %445 = vmatpush1.bf16.xpose.msra.mxu0 0
        %446 = vmatprep.subr.bf16.mxu0 0
        %447 = vmatpush1.bf16.xpose.msra.mxu0 0
        %448 = vmatprep.subr.bf16.mxu0 0
        %449 = vmatpush1.bf16.xpose.msra.mxu0 0
        %450 = vmatprep.subr.bf16.mxu0 0
        %451 = vmatpush1.bf16.xpose.msra.mxu0 0
        %452 = vmatprep.subr.bf16.mxu0 0
        %453 = vmatpush1.bf16.xpose.msra.mxu0 0
        %454 = vmatprep.subr.bf16.mxu0 0
        %455 = vmatpush1.bf16.xpose.msra.mxu0 0
        %456 = vmatprep.subr.bf16.mxu0 0
        %457 = vmatpush1.bf16.xpose.msra.mxu0 0
        %458 = vmatprep.subr.bf16.mxu0 0
        %459 = vmatpush1.bf16.xpose.msra.mxu0 0
        %460 = vmatprep.subr.bf16.mxu0 0
        %461 = vmatpush1.bf16.xpose.msra.mxu0 0
        %462 = vmatprep.subr.bf16.mxu0 0
        %463 = vmatpush1.bf16.xpose.msra.mxu0 0
        %464 = vmatprep.mubr.bf16.mxu0 0
        %465 = vmatmul.mubr.bf16.gmra.mrb[0].mxu0 %v427
        %v466 = vpop.f32.mrb[0].mxu0
        %v467 = vadd.f32 0.0, %v466
        %v468 = vpop.f32.mrb[0].mxu0
        %v469 = vpop.f32.mrb[0].mxu0
        %v470 = vpop.f32.mrb[0].mxu0
        %471 = vdwg.mxu0
        %v472 = vsel %vm425, %v467, -inf
        %473 = vmax.xlane.f32.xlu0 %v472
        %v474 = vpop.xlane.xlu0 %473
        %v475 = vsub.f32 %v467, %v474
        %v476 = vmul.f32 %v475, 1.442695
        %v477 = vpow.pop %v476
        %v478 = vsel %vm425, %v477, 0.0
        %479 = vadd.xlane.f32.xlu0 %v478
        %v480 = vpop.xlane.xlu0 %479
        %v481 = vrcp.pop %v480
        %v482 = vmul.f32 %v477, %v481
        %v483 = vpack.c.bf16 %v482, %v482
        %484 = vrot.lane.b32.xlu0 %v422, 64
        %v485 = vpop.permute.xlu0 %484
        %v487 = vsel %vm425, %v483, 0
        %vm489 = vcmask 1043456
        %v491 = vsel %vm489, %v485, 0
        %493 = vmatprep.subr.bf16.mxu0 0
        %494 = vmatpush1.bf16.msra.mxu0 %v491
        %495 = vmatprep.subr.bf16.mxu0 0
        %496 = vmatpush1.bf16.msra.mxu0 0
        %497 = vmatprep.subr.bf16.mxu0 0
        %498 = vmatpush1.bf16.msra.mxu0 0
        %499 = vmatprep.subr.bf16.mxu0 0
        %500 = vmatpush1.bf16.msra.mxu0 0
        %501 = vmatprep.subr.bf16.mxu0 0
        %502 = vmatpush1.bf16.msra.mxu0 0
        %503 = vmatprep.subr.bf16.mxu0 0
        %504 = vmatpush1.bf16.msra.mxu0 0
        %505 = vmatprep.subr.bf16.mxu0 0
        %506 = vmatpush1.bf16.msra.mxu0 0
        %507 = vmatprep.subr.bf16.mxu0 0
        %508 = vmatpush1.bf16.msra.mxu0 0
        %509 = vmatprep.subr.bf16.mxu0 0
        %510 = vmatpush1.bf16.msra.mxu0 0
        %511 = vmatprep.subr.bf16.mxu0 0
        %512 = vmatpush1.bf16.msra.mxu0 0
        %513 = vmatprep.subr.bf16.mxu0 0
        %514 = vmatpush1.bf16.msra.mxu0 0
        %515 = vmatprep.subr.bf16.mxu0 0
        %516 = vmatpush1.bf16.msra.mxu0 0
        %517 = vmatprep.subr.bf16.mxu0 0
        %518 = vmatpush1.bf16.msra.mxu0 0
        %519 = vmatprep.subr.bf16.mxu0 0
        %520 = vmatpush1.bf16.msra.mxu0 0
        %521 = vmatprep.subr.bf16.mxu0 0
        %522 = vmatpush1.bf16.msra.mxu0 0
        %523 = vmatprep.subr.bf16.mxu0 0
        %524 = vmatpush1.bf16.msra.mxu0 0
        %525 = vmatprep.mubr.bf16.mxu0 0
        %526 = vmatmul.mubr.bf16.gmra.mrb[0].mxu0 %v487
        %v527 = vpop.f32.mrb[0].mxu0
        %v528 = vadd.f32 0.0, %v527
        %v529 = vpop.f32.mrb[0].mxu0
        %v530 = vpop.f32.mrb[0].mxu0
        %v531 = vpop.f32.mrb[0].mxu0
        %532 = vdwg.mxu0
        %v533 = vpack.c.bf16 %v528, %v528
        %vm534 = vcmask 60416
        %535 = vst.msk [vmem:[#allocation3] sm:$0xf] %vm534, %v533
        %v536 = vld [vmem:[#allocation2] sm:$0xf]
        %v538 = vunpack.c.l.b16 %v536
        %v539 = vpack.c.b16 %v538, %v538
        %540 = vrot.lane.b32.xlu0 %v539, 120
        %v541 = vpop.permute.xlu0 %540
        %542 = vrot.lane.b32.xlu0 %v539, 88
        %v543 = vpop.permute.xlu0 %542
        %v545 = vsel %vm425, %v541, 0
        %v548 = vsel %vm425, %v543, 0
        %550 = vmatprep.subr.bf16.mxu0 0
        %551 = vmatpush1.bf16.xpose.msra.mxu0 %v548
        %552 = vmatprep.subr.bf16.mxu0 0
        %553 = vmatpush1.bf16.xpose.msra.mxu0 0
        %554 = vmatprep.subr.bf16.mxu0 0
        %555 = vmatpush1.bf16.xpose.msra.mxu0 0
        %556 = vmatprep.subr.bf16.mxu0 0
        %557 = vmatpush1.bf16.xpose.msra.mxu0 0
        %558 = vmatprep.subr.bf16.mxu0 0
        %559 = vmatpush1.bf16.xpose.msra.mxu0 0
        %560 = vmatprep.subr.bf16.mxu0 0
        %561 = vmatpush1.bf16.xpose.msra.mxu0 0
        %562 = vmatprep.subr.bf16.mxu0 0
        %563 = vmatpush1.bf16.xpose.msra.mxu0 0
        %564 = vmatprep.subr.bf16.mxu0 0
        %565 = vmatpush1.bf16.xpose.msra.mxu0 0
        %566 = vmatprep.subr.bf16.mxu0 0
        %567 = vmatpush1.bf16.xpose.msra.mxu0 0
        %568 = vmatprep.subr.bf16.mxu0 0
        %569 = vmatpush1.bf16.xpose.msra.mxu0 0
        %570 = vmatprep.subr.bf16.mxu0 0
        %571 = vmatpush1.bf16.xpose.msra.mxu0 0
        %572 = vmatprep.subr.bf16.mxu0 0
        %573 = vmatpush1.bf16.xpose.msra.mxu0 0
        %574 = vmatprep.subr.bf16.mxu0 0
        %575 = vmatpush1.bf16.xpose.msra.mxu0 0
        %576 = vmatprep.subr.bf16.mxu0 0
        %577 = vmatpush1.bf16.xpose.msra.mxu0 0
        %578 = vmatprep.subr.bf16.mxu0 0
        %579 = vmatpush1.bf16.xpose.msra.mxu0 0
        %580 = vmatprep.subr.bf16.mxu0 0
        %581 = vmatpush1.bf16.xpose.msra.mxu0 0
        %582 = vmatprep.mubr.bf16.mxu0 0
        %583 = vmatmul.mubr.bf16.gmra.mrb[0].mxu0 %v545
        %v584 = vpop.f32.mrb[0].mxu0
        %v585 = vadd.f32 0.0, %v584
        %v586 = vpop.f32.mrb[0].mxu0
        %v587 = vpop.f32.mrb[0].mxu0
        %v588 = vpop.f32.mrb[0].mxu0
        %589 = vdwg.mxu0
        %v590 = vsel %vm425, %v585, -inf
        %591 = vmax.xlane.f32.xlu0 %v590
        %v592 = vpop.xlane.xlu0 %591
        %v593 = vsub.f32 %v585, %v592
        %v594 = vmul.f32 %v593, 1.442695
        %v595 = vpow.pop %v594
        %v596 = vsel %vm425, %v595, 0.0
        %597 = vadd.xlane.f32.xlu0 %v596
        %v598 = vpop.xlane.xlu0 %597
        %v599 = vrcp.pop %v598
        %v600 = vmul.f32 %v595, %v599
        %v601 = vpack.c.bf16 %v600, %v600
        %602 = vrot.lane.b32.xlu0 %v539, 56
        %v603 = vpop.permute.xlu0 %602
        %v605 = vsel %vm425, %v601, 0
        %v608 = vsel %vm489, %v603, 0
        %610 = vmatprep.subr.bf16.mxu0 0
        %611 = vmatpush1.bf16.msra.mxu0 %v608
        %612 = vmatprep.subr.bf16.mxu0 0
        %613 = vmatpush1.bf16.msra.mxu0 0
        %614 = vmatprep.subr.bf16.mxu0 0
        %615 = vmatpush1.bf16.msra.mxu0 0
        %616 = vmatprep.subr.bf16.mxu0 0
        %617 = vmatpush1.bf16.msra.mxu0 0
        %618 = vmatprep.subr.bf16.mxu0 0
        %619 = vmatpush1.bf16.msra.mxu0 0
        %620 = vmatprep.subr.bf16.mxu0 0
        %621 = vmatpush1.bf16.msra.mxu0 0
        %622 = vmatprep.subr.bf16.mxu0 0
        %623 = vmatpush1.bf16.msra.mxu0 0
        %624 = vmatprep.subr.bf16.mxu0 0
        %625 = vmatpush1.bf16.msra.mxu0 0
        %626 = vmatprep.subr.bf16.mxu0 0
        %627 = vmatpush1.bf16.msra.mxu0 0
        %628 = vmatprep.subr.bf16.mxu0 0
        %629 = vmatpush1.bf16.msra.mxu0 0
        %630 = vmatprep.subr.bf16.mxu0 0
        %631 = vmatpush1.bf16.msra.mxu0 0
        %632 = vmatprep.subr.bf16.mxu0 0
        %633 = vmatpush1.bf16.msra.mxu0 0
        %634 = vmatprep.subr.bf16.mxu0 0
        %635 = vmatpush1.bf16.msra.mxu0 0
        %636 = vmatprep.subr.bf16.mxu0 0
        %637 = vmatpush1.bf16.msra.mxu0 0
        %638 = vmatprep.subr.bf16.mxu0 0
        %639 = vmatpush1.bf16.msra.mxu0 0
        %640 = vmatprep.subr.bf16.mxu0 0
        %641 = vmatpush1.bf16.msra.mxu0 0
        %642 = vmatprep.mubr.bf16.mxu0 0
        %643 = vmatmul.mubr.bf16.gmra.mrb[0].mxu0 %v605
        %v644 = vpop.f32.mrb[0].mxu0
        %v645 = vadd.f32 0.0, %v644
        %v646 = vpop.f32.mrb[0].mxu0
        %v647 = vpop.f32.mrb[0].mxu0
        %v648 = vpop.f32.mrb[0].mxu0
        %649 = vdwg.mxu0
        %v650 = vpack.c.bf16 %v645, %v645
        %v652 = vunpack.c.l.b16 %v650
        %v653 = vpack.c.b16 %v652, %v652
        %654 = vrot.lane.b32.xlu0 %v653, 8
        %v655 = vpop.permute.xlu0 %654
        %vm657 = vcmask 126016
        %658 = vst.msk [vmem:[#allocation3] sm:$0xf] %vm657, %v655
        %v659 = vld [vmem:[#allocation2] sm:$0xf]
        %v661 = vunpack.c.l.b16 %v659
        %v662 = vpack.c.b16 %v661, %v661
        %663 = vrot.lane.b32.xlu0 %v662, 112
        %v664 = vpop.permute.xlu0 %663
        %665 = vrot.lane.b32.xlu0 %v662, 80
        %v666 = vpop.permute.xlu0 %665
        %v668 = vsel %vm425, %v664, 0
        %v671 = vsel %vm425, %v666, 0
        %673 = vmatprep.subr.bf16.mxu0 0
        %674 = vmatpush1.bf16.xpose.msra.mxu0 %v671
        %675 = vmatprep.subr.bf16.mxu0 0
        %676 = vmatpush1.bf16.xpose.msra.mxu0 0
        %677 = vmatprep.subr.bf16.mxu0 0
        %678 = vmatpush1.bf16.xpose.msra.mxu0 0
        %679 = vmatprep.subr.bf16.mxu0 0
        %680 = vmatpush1.bf16.xpose.msra.mxu0 0
        %681 = vmatprep.subr.bf16.mxu0 0
        %682 = vmatpush1.bf16.xpose.msra.mxu0 0
        %683 = vmatprep.subr.bf16.mxu0 0
        %684 = vmatpush1.bf16.xpose.msra.mxu0 0
        %685 = vmatprep.subr.bf16.mxu0 0
        %686 = vmatpush1.bf16.xpose.msra.mxu0 0
        %687 = vmatprep.subr.bf16.mxu0 0
        %688 = vmatpush1.bf16.xpose.msra.mxu0 0
        %689 = vmatprep.subr.bf16.mxu0 0
        %690 = vmatpush1.bf16.xpose.msra.mxu0 0
        %691 = vmatprep.subr.bf16.mxu0 0
        %692 = vmatpush1.bf16.xpose.msra.mxu0 0
        %693 = vmatprep.subr.bf16.mxu0 0
        %694 = vmatpush1.bf16.xpose.msra.mxu0 0
        %695 = vmatprep.subr.bf16.mxu0 0
        %696 = vmatpush1.bf16.xpose.msra.mxu0 0
        %697 = vmatprep.subr.bf16.mxu0 0
        %698 = vmatpush1.bf16.xpose.msra.mxu0 0
        %699 = vmatprep.subr.bf16.mxu0 0
        %700 = vmatpush1.bf16.xpose.msra.mxu0 0
        %701 = vmatprep.subr.bf16.mxu0 0
        %702 = vmatpush1.bf16.xpose.msra.mxu0 0
        %703 = vmatprep.subr.bf16.mxu0 0
        %704 = vmatpush1.bf16.xpose.msra.mxu0 0
        %705 = vmatprep.mubr.bf16.mxu0 0
        %706 = vmatmul.mubr.bf16.gmra.mrb[0].mxu0 %v668
        %v707 = vpop.f32.mrb[0].mxu0
        %v708 = vadd.f32 0.0, %v707
        %v709 = vpop.f32.mrb[0].mxu0
        %v710 = vpop.f32.mrb[0].mxu0
        %v711 = vpop.f32.mrb[0].mxu0
        %712 = vdwg.mxu0
        %v713 = vsel %vm425, %v708, -inf
        %714 = vmax.xlane.f32.xlu0 %v713
        %v715 = vpop.xlane.xlu0 %714
        %v716 = vsub.f32 %v708, %v715
        %v717 = vmul.f32 %v716, 1.442695
        %v718 = vpow.pop %v717
        %v719 = vsel %vm425, %v718, 0.0
        %720 = vadd.xlane.f32.xlu0 %v719
        %v721 = vpop.xlane.xlu0 %720
        %v722 = vrcp.pop %v721
        %v723 = vmul.f32 %v718, %v722
        %v724 = vpack.c.bf16 %v723, %v723
        %725 = vrot.lane.b32.xlu0 %v662, 48
        %v726 = vpop.permute.xlu0 %725
        %v728 = vsel %vm425, %v724, 0
        %v731 = vsel %vm489, %v726, 0
        %733 = vmatprep.subr.bf16.mxu0 0
        %734 = vmatpush1.bf16.msra.mxu0 %v731
        %735 = vmatprep.subr.bf16.mxu0 0
        %736 = vmatpush1.bf16.msra.mxu0 0
        %737 = vmatprep.subr.bf16.mxu0 0
        %738 = vmatpush1.bf16.msra.mxu0 0
        %739 = vmatprep.subr.bf16.mxu0 0
        %740 = vmatpush1.bf16.msra.mxu0 0
        %741 = vmatprep.subr.bf16.mxu0 0
        %742 = vmatpush1.bf16.msra.mxu0 0
        %743 = vmatprep.subr.bf16.mxu0 0
        %744 = vmatpush1.bf16.msra.mxu0 0
        %745 = vmatprep.subr.bf16.mxu0 0
        %746 = vmatpush1.bf16.msra.mxu0 0
        %747 = vmatprep.subr.bf16.mxu0 0
        %748 = vmatpush1.bf16.msra.mxu0 0
        %749 = vmatprep.subr.bf16.mxu0 0
        %750 = vmatpush1.bf16.msra.mxu0 0
        %751 = vmatprep.subr.bf16.mxu0 0
        %752 = vmatpush1.bf16.msra.mxu0 0
        %753 = vmatprep.subr.bf16.mxu0 0
        %754 = vmatpush1.bf16.msra.mxu0 0
        %755 = vmatprep.subr.bf16.mxu0 0
        %756 = vmatpush1.bf16.msra.mxu0 0
        %757 = vmatprep.subr.bf16.mxu0 0
        %758 = vmatpush1.bf16.msra.mxu0 0
        %759 = vmatprep.subr.bf16.mxu0 0
        %760 = vmatpush1.bf16.msra.mxu0 0
        %761 = vmatprep.subr.bf16.mxu0 0
        %762 = vmatpush1.bf16.msra.mxu0 0
        %763 = vmatprep.subr.bf16.mxu0 0
        %764 = vmatpush1.bf16.msra.mxu0 0
        %765 = vmatprep.mubr.bf16.mxu0 0
        %766 = vmatmul.mubr.bf16.gmra.mrb[0].mxu0 %v728
        %v767 = vpop.f32.mrb[0].mxu0
        %v768 = vadd.f32 0.0, %v767
        %v769 = vpop.f32.mrb[0].mxu0
        %v770 = vpop.f32.mrb[0].mxu0
        %v771 = vpop.f32.mrb[0].mxu0
        %772 = vdwg.mxu0
        %v773 = vpack.c.bf16 %v768, %v768
        %v775 = vunpack.c.l.b16 %v773
        %v776 = vpack.c.b16 %v775, %v775
        %777 = vrot.lane.b32.xlu0 %v776, 16
        %v778 = vpop.permute.xlu0 %777
        %vm780 = vcmask 191616
        %781 = vst.msk [vmem:[#allocation3] sm:$0xf] %vm780, %v778
        %v782 = vld [vmem:[#allocation2] sm:$0xf]
        %v784 = vunpack.c.l.b16 %v782
        %v785 = vpack.c.b16 %v784, %v784
        %786 = vrot.lane.b32.xlu0 %v785, 104
        %v787 = vpop.permute.xlu0 %786
        %788 = vrot.lane.b32.xlu0 %v785, 72
        %v789 = vpop.permute.xlu0 %788
        %v791 = vsel %vm425, %v787, 0
        %v794 = vsel %vm425, %v789, 0
        %796 = vmatprep.subr.bf16.mxu0 0
        %797 = vmatpush1.bf16.xpose.msra.mxu0 %v794
        %798 = vmatprep.subr.bf16.mxu0 0
        %799 = vmatpush1.bf16.xpose.msra.mxu0 0
        %800 = vmatprep.subr.bf16.mxu0 0
        %801 = vmatpush1.bf16.xpose.msra.mxu0 0
        %802 = vmatprep.subr.bf16.mxu0 0
        %803 = vmatpush1.bf16.xpose.msra.mxu0 0
        %804 = vmatprep.subr.bf16.mxu0 0
        %805 = vmatpush1.bf16.xpose.msra.mxu0 0
        %806 = vmatprep.subr.bf16.mxu0 0
        %807 = vmatpush1.bf16.xpose.msra.mxu0 0
        %808 = vmatprep.subr.bf16.mxu0 0
        %809 = vmatpush1.bf16.xpose.msra.mxu0 0
        %810 = vmatprep.subr.bf16.mxu0 0
        %811 = vmatpush1.bf16.xpose.msra.mxu0 0
        %812 = vmatprep.subr.bf16.mxu0 0
        %813 = vmatpush1.bf16.xpose.msra.mxu0 0
        %814 = vmatprep.subr.bf16.mxu0 0
        %815 = vmatpush1.bf16.xpose.msra.mxu0 0
        %816 = vmatprep.subr.bf16.mxu0 0
        %817 = vmatpush1.bf16.xpose.msra.mxu0 0
        %818 = vmatprep.subr.bf16.mxu0 0
        %819 = vmatpush1.bf16.xpose.msra.mxu0 0
        %820 = vmatprep.subr.bf16.mxu0 0
        %821 = vmatpush1.bf16.xpose.msra.mxu0 0
        %822 = vmatprep.subr.bf16.mxu0 0
        %823 = vmatpush1.bf16.xpose.msra.mxu0 0
        %824 = vmatprep.subr.bf16.mxu0 0
        %825 = vmatpush1.bf16.xpose.msra.mxu0 0
        %826 = vmatprep.subr.bf16.mxu0 0
        %827 = vmatpush1.bf16.xpose.msra.mxu0 0
        %828 = vmatprep.mubr.bf16.mxu0 0
        %829 = vmatmul.mubr.bf16.gmra.mrb[0].mxu0 %v791
        %v830 = vpop.f32.mrb[0].mxu0
        %v831 = vadd.f32 0.0, %v830
        %v832 = vpop.f32.mrb[0].mxu0
        %v833 = vpop.f32.mrb[0].mxu0
        %v834 = vpop.f32.mrb[0].mxu0
        %835 = vdwg.mxu0
        %v836 = vsel %vm425, %v831, -inf
        %837 = vmax.xlane.f32.xlu0 %v836
        %v838 = vpop.xlane.xlu0 %837
        %v839 = vsub.f32 %v831, %v838
        %v840 = vmul.f32 %v839, 1.442695
        %v841 = vpow.pop %v840
        %v842 = vsel %vm425, %v841, 0.0
        %843 = vadd.xlane.f32.xlu0 %v842
        %v844 = vpop.xlane.xlu0 %843
        %v845 = vrcp.pop %v844
        %v846 = vmul.f32 %v841, %v845
        %v847 = vpack.c.bf16 %v846, %v846
        %848 = vrot.lane.b32.xlu0 %v785, 40
        %v849 = vpop.permute.xlu0 %848
        %v851 = vsel %vm425, %v847, 0
        %v854 = vsel %vm489, %v849, 0
        %856 = vmatprep.subr.bf16.mxu0 0
        %857 = vmatpush1.bf16.msra.mxu0 %v854
        %858 = vmatprep.subr.bf16.mxu0 0
        %859 = vmatpush1.bf16.msra.mxu0 0
        %860 = vmatprep.subr.bf16.mxu0 0
        %861 = vmatpush1.bf16.msra.mxu0 0
        %862 = vmatprep.subr.bf16.mxu0 0
        %863 = vmatpush1.bf16.msra.mxu0 0
        %864 = vmatprep.subr.bf16.mxu0 0
        %865 = vmatpush1.bf16.msra.mxu0 0
        %866 = vmatprep.subr.bf16.mxu0 0
        %867 = vmatpush1.bf16.msra.mxu0 0
        %868 = vmatprep.subr.bf16.mxu0 0
        %869 = vmatpush1.bf16.msra.mxu0 0
        %870 = vmatprep.subr.bf16.mxu0 0
        %871 = vmatpush1.bf16.msra.mxu0 0
        %872 = vmatprep.subr.bf16.mxu0 0
        %873 = vmatpush1.bf16.msra.mxu0 0
        %874 = vmatprep.subr.bf16.mxu0 0
        %875 = vmatpush1.bf16.msra.mxu0 0
        %876 = vmatprep.subr.bf16.mxu0 0
        %877 = vmatpush1.bf16.msra.mxu0 0
        %878 = vmatprep.subr.bf16.mxu0 0
        %879 = vmatpush1.bf16.msra.mxu0 0
        %880 = vmatprep.subr.bf16.mxu0 0
        %881 = vmatpush1.bf16.msra.mxu0 0
        %882 = vmatprep.subr.bf16.mxu0 0
        %883 = vmatpush1.bf16.msra.mxu0 0
        %884 = vmatprep.subr.bf16.mxu0 0
        %885 = vmatpush1.bf16.msra.mxu0 0
        %886 = vmatprep.subr.bf16.mxu0 0
        %887 = vmatpush1.bf16.msra.mxu0 0
        %888 = vmatprep.mubr.bf16.mxu0 0
        %889 = vmatmul.mubr.bf16.gmra.mrb[0].mxu0 %v851
        %v890 = vpop.f32.mrb[0].mxu0
        %v891 = vadd.f32 0.0, %v890
        %v892 = vpop.f32.mrb[0].mxu0
        %v893 = vpop.f32.mrb[0].mxu0
        %v894 = vpop.f32.mrb[0].mxu0
        %895 = vdwg.mxu0
        %v896 = vpack.c.bf16 %v891, %v891
        %v898 = vunpack.c.l.b16 %v896
        %v899 = vpack.c.b16 %v898, %v898
        %900 = vrot.lane.b32.xlu0 %v899, 24
        %v901 = vpop.permute.xlu0 %900
        %vm903 = vcmask 257216
        %904 = vst.msk [vmem:[#allocation3] sm:$0xf] %vm903, %v901
        %v905 = vld [vmem:[#allocation3] sm:$0xf]
        %v906 = vld [vmem:[%s3] sm:$0xf]
        %v907 = vld [vmem:[%s3 + $0x4] sm:$0xf]
        %v908 = vld [vmem:[%s3 + $0x8] sm:$0xf]
        %v909 = vld [vmem:[%s3 + $0xc] sm:$0xf]
        %v910 = vlaneseq
        %v911 = vshrl.u32 %v910, 7
        %v912 = vsub.s32 0, %v911
        %v913 = vrot.slane %v322, %v912
        %v918 = vunpack.c.l.b16 %v906
        %v919 = vunpack.c.l.b16 %v907
        %v920 = vunpack.c.l.b16 %v908
        %v921 = vunpack.c.l.b16 %v909
        %v922 = vpack.c.b16 %v919, %v918
        %v923 = vpack.c.b16 %v921, %v920
        %v927 = vsel %vm324, %v905, 0
        %929 = vmatprep.subr.bf16.mxu0 0
        %930 = vmatpush1.bf16.msra.mxu0 %v922
        %931 = vmatprep.subr.bf16.mxu0 0
        %932 = vmatpush1.bf16.msra.mxu0 %v923
        %933 = vmatprep.subr.bf16.mxu0 0
        %934 = vmatpush1.bf16.msra.mxu0 0
        %935 = vmatprep.subr.bf16.mxu0 0
        %936 = vmatpush1.bf16.msra.mxu0 0
        %937 = vmatprep.subr.bf16.mxu0 0
        %938 = vmatpush1.bf16.msra.mxu0 0
        %939 = vmatprep.subr.bf16.mxu0 0
        %940 = vmatpush1.bf16.msra.mxu0 0
        %941 = vmatprep.subr.bf16.mxu0 0
        %942 = vmatpush1.bf16.msra.mxu0 0
        %943 = vmatprep.subr.bf16.mxu0 0
        %944 = vmatpush1.bf16.msra.mxu0 0
        %945 = vmatprep.subr.bf16.mxu0 0
        %946 = vmatpush1.bf16.msra.mxu0 0
        %947 = vmatprep.subr.bf16.mxu0 0
        %948 = vmatpush1.bf16.msra.mxu0 0
        %949 = vmatprep.subr.bf16.mxu0 0
        %950 = vmatpush1.bf16.msra.mxu0 0
        %951 = vmatprep.subr.bf16.mxu0 0
        %952 = vmatpush1.bf16.msra.mxu0 0
        %953 = vmatprep.subr.bf16.mxu0 0
        %954 = vmatpush1.bf16.msra.mxu0 0
        %955 = vmatprep.subr.bf16.mxu0 0
        %956 = vmatpush1.bf16.msra.mxu0 0
        %957 = vmatprep.subr.bf16.mxu0 0
        %958 = vmatpush1.bf16.msra.mxu0 0
        %959 = vmatprep.subr.bf16.mxu0 0
        %960 = vmatpush1.bf16.msra.mxu0 0
        %961 = vmatprep.mubr.bf16.mxu0 0
        %962 = vmatmul.mubr.bf16.gmra.mrb[0].mxu0 %v927
        %v963 = vpop.f32.mrb[0].mxu0
        %v964 = vadd.f32 %v913, %v963
        %v965 = vpop.f32.mrb[0].mxu0
        %v966 = vpop.f32.mrb[0].mxu0
        %v967 = vpop.f32.mrb[0].mxu0
        %968 = vdwg.mxu0
        %v969 = vadd.f32 %v317, %v964
        %v970 = vsel %vm324, %v969, 0.0
        %971 = vadd.xlane.f32.xlu0 %v970
        %v972 = vpop.xlane.xlu0 %971
        %v973 = vmul.f32 %v972, %v328
        %v974 = vsub.f32 %v969, %v973
        %v975 = vmul.f32 %v974, %v974
        %v976 = vsel %vm324, %v975, 0.0
        %977 = vadd.xlane.f32.xlu0 %v976
        %v978 = vpop.xlane.xlu0 %977
        %v979 = vmul.f32 %v978, %v328
        %v980 = vadd.f32 %v979, 1e-06
        %v981 = vrsqrt.pop %v980
        %v982 = vmul.f32 %v974, %v981
        %v983 = vlaneseq
        %v984 = vshrl.u32 %v983, 7
        %v985 = vsub.s32 0, %v984
        %v986 = vrot.slane %v320, %v985
        %v987 = vmul.f32 %v982, %v986
        %v988 = vlaneseq
        %v989 = vshrl.u32 %v988, 7
        %v990 = vsub.s32 0, %v989
        %v991 = vrot.slane %v321, %v990
        %v992 = vadd.f32 %v987, %v991
        %v993 = vpack.c.bf16 %v992, %v992
        %v994 = vld [vmem:[#allocation4] sm:$0xf]
        %v995 = vld [vmem:[#allocation4 + $0x4] sm:$0xf]
        %v996 = vld [vmem:[#allocation4 + $0x8] sm:$0xf]
        %v997 = vld [vmem:[#allocation4 + $0xc] sm:$0xf]
        %v998 = vld [vmem:[%s6] sm:$0x1]
        %v1000 = vlaneseq
        %v1001 = vshrl.u32 %v1000, 7
        %v1002 = vsub.s32 0, %v1001
        %v1003 = vrot.slane %v998, %v1002
        %v1009 = vunpack.c.l.b16 %v994
        %v1010 = vunpack.c.l.b16 %v995
        %v1011 = vunpack.c.l.b16 %v996
        %v1012 = vunpack.c.l.b16 %v997
        %v1013 = vpack.c.b16 %v1010, %v1009
        %v1014 = vpack.c.b16 %v1012, %v1011
        %v1018 = vsel %vm324, %v993, 0
        %1020 = vmatprep.subr.bf16.mxu0 0
        %1021 = vmatpush1.bf16.msra.mxu0 %v1013
        %1022 = vmatprep.subr.bf16.mxu0 0
        %1023 = vmatpush1.bf16.msra.mxu0 %v1014
        %1024 = vmatprep.subr.bf16.mxu0 0
        %1025 = vmatpush1.bf16.msra.mxu0 0
        %1026 = vmatprep.subr.bf16.mxu0 0
        %1027 = vmatpush1.bf16.msra.mxu0 0
        %1028 = vmatprep.subr.bf16.mxu0 0
        %1029 = vmatpush1.bf16.msra.mxu0 0
        %1030 = vmatprep.subr.bf16.mxu0 0
        %1031 = vmatpush1.bf16.msra.mxu0 0
        %1032 = vmatprep.subr.bf16.mxu0 0
        %1033 = vmatpush1.bf16.msra.mxu0 0
        %1034 = vmatprep.subr.bf16.mxu0 0
        %1035 = vmatpush1.bf16.msra.mxu0 0
        %1036 = vmatprep.subr.bf16.mxu0 0
        %1037 = vmatpush1.bf16.msra.mxu0 0
        %1038 = vmatprep.subr.bf16.mxu0 0
        %1039 = vmatpush1.bf16.msra.mxu0 0
        %1040 = vmatprep.subr.bf16.mxu0 0
        %1041 = vmatpush1.bf16.msra.mxu0 0
        %1042 = vmatprep.subr.bf16.mxu0 0
        %1043 = vmatpush1.bf16.msra.mxu0 0
        %1044 = vmatprep.subr.bf16.mxu0 0
        %1045 = vmatpush1.bf16.msra.mxu0 0
        %1046 = vmatprep.subr.bf16.mxu0 0
        %1047 = vmatpush1.bf16.msra.mxu0 0
        %1048 = vmatprep.subr.bf16.mxu0 0
        %1049 = vmatpush1.bf16.msra.mxu0 0
        %1050 = vmatprep.subr.bf16.mxu0 0
        %1051 = vmatpush1.bf16.msra.mxu0 0
        %1052 = vmatprep.mubr.bf16.mxu0 0
        %1053 = vmatmul.mubr.bf16.gmra.mrb[0].mxu0 %v1018
        %v1054 = vpop.f32.mrb[0].mxu0
        %v1055 = vadd.f32 %v1003, %v1054
        %v1056 = vpop.f32.mrb[0].mxu0
        %v1057 = vpop.f32.mrb[0].mxu0
        %v1058 = vpop.f32.mrb[0].mxu0
        %1059 = vdwg.mxu0
        %v1060 = vmul.f32 %v1055, 0.5
        %v1061 = vmul.f32 %v1055, %v1055
        %v1062 = vmul.f32 %v1061, %v1055
        %v1063 = vmul.f32 %v1062, 0.044715
        %v1064 = vadd.f32 %v1055, %v1063
        %v1065 = vmul.f32 %v1064, 0.7978846
        %v1066 = vtanh.pop %v1065
        %v1067 = vadd.f32 %v1066, 1.0
        %v1068 = vmul.f32 %v1060, %v1067
        %v1069 = vpack.c.bf16 %v1068, %v1068
        %v1070 = vld [vmem:[%s7] sm:$0xf]
        %v1071 = vld [vmem:[%s7 + $0x4] sm:$0xf]
        %v1072 = vld [vmem:[%s7 + $0x8] sm:$0xf]
        %v1073 = vld [vmem:[%s7 + $0xc] sm:$0xf]
        %v1074 = vld [vmem:[%s7 + $0x10] sm:$0xf]
        %v1075 = vld [vmem:[%s7 + $0x14] sm:$0xf]
        %v1076 = vld [vmem:[%s7 + $0x18] sm:$0xf]
        %v1077 = vld [vmem:[%s7 + $0x1c] sm:$0xf]
        %v1078 = vlaneseq
        %v1079 = vshrl.u32 %v1078, 7
        %v1080 = vsub.s32 0, %v1079
        %v1081 = vrot.slane %v323, %v1080
        %v1090 = vunpack.c.l.b16 %v1070
        %v1091 = vunpack.c.l.b16 %v1071
        %v1092 = vunpack.c.l.b16 %v1072
        %v1093 = vunpack.c.l.b16 %v1073
        %v1094 = vunpack.c.l.b16 %v1074
        %v1095 = vunpack.c.l.b16 %v1075
        %v1096 = vunpack.c.l.b16 %v1076
        %v1097 = vunpack.c.l.b16 %v1077
        %v1098 = vpack.c.b16 %v1091, %v1090
        %v1099 = vpack.c.b16 %v1093, %v1092
        %v1100 = vpack.c.b16 %v1095, %v1094
        %v1101 = vpack.c.b16 %v1097, %v1096
        %vm1106 = vcmask 523264
        %v1108 = vsel %vm1106, %v1069, 0
        %1110 = vmatprep.subr.bf16.mxu0 0
        %1111 = vmatpush1.bf16.msra.mxu0 %v1098
        %1112 = vmatprep.subr.bf16.mxu0 0
        %1113 = vmatpush1.bf16.msra.mxu0 %v1099
        %1114 = vmatprep.subr.bf16.mxu0 0
        %1115 = vmatpush1.bf16.msra.mxu0 %v1100
        %1116 = vmatprep.subr.bf16.mxu0 0
        %1117 = vmatpush1.bf16.msra.mxu0 %v1101
        %1118 = vmatprep.subr.bf16.mxu0 0
        %1119 = vmatpush1.bf16.msra.mxu0 0
        %1120 = vmatprep.subr.bf16.mxu0 0
        %1121 = vmatpush1.bf16.msra.mxu0 0
        %1122 = vmatprep.subr.bf16.mxu0 0
        %1123 = vmatpush1.bf16.msra.mxu0 0
        %1124 = vmatprep.subr.bf16.mxu0 0
        %1125 = vmatpush1.bf16.msra.mxu0 0
        %1126 = vmatprep.subr.bf16.mxu0 0
        %1127 = vmatpush1.bf16.msra.mxu0 0
        %1128 = vmatprep.subr.bf16.mxu0 0
        %1129 = vmatpush1.bf16.msra.mxu0 0
        %1130 = vmatprep.subr.bf16.mxu0 0
        %1131 = vmatpush1.bf16.msra.mxu0 0
        %1132 = vmatprep.subr.bf16.mxu0 0
        %1133 = vmatpush1.bf16.msra.mxu0 0
        %1134 = vmatprep.subr.bf16.mxu0 0
        %1135 = vmatpush1.bf16.msra.mxu0 0
        %1136 = vmatprep.subr.bf16.mxu0 0
        %1137 = vmatpush1.bf16.msra.mxu0 0
        %1138 = vmatprep.subr.bf16.mxu0 0
        %1139 = vmatpush1.bf16.msra.mxu0 0
        %1140 = vmatprep.subr.bf16.mxu0 0
        %1141 = vmatpush1.bf16.msra.mxu0 0
        %1142 = vmatprep.mubr.bf16.mxu0 0
        %1143 = vmatmul.mubr.bf16.gmra.mrb[0].mxu0 %v1108
        %v1144 = vpop.f32.mrb[0].mxu0
        %v1145 = vadd.f32 %v1081, %v1144
        %v1146 = vpop.f32.mrb[0].mxu0
        %v1147 = vpop.f32.mrb[0].mxu0
        %v1148 = vpop.f32.mrb[0].mxu0
        %1149 = vdwg.mxu0
        %v1150 = vadd.f32 %v969, %v1145
        %1151 = vst.msk [vmem:[%s311] sm:$0xff] %vm324, %v1150
        %s1152 = sand.u32 %s204, 1
        %s1153 = scalar_lea.sflag [#allocation6], %s1152
        %s1154 = sand.u32 %s204, 1
        %s1155 = smul.addr %s1154, 8
        %s1156 = scalar_lea.vmem [#allocation7], %s1155
        // Predicated region
        $region57: #{tpu_custom_call.1} parent=51 // pred_check
          %p1157 = pneg %p214
        $region58: #{tpu_custom_call.1} parent=51 // pred_check_branch
          %1159 = sbr.rel (%p1157) target = $region60
        $region59: #{tpu_custom_call.1} parent=51 // pred_region
          %s1161 = ssub.s32 128, 128
          %1162 = vsyncadd %s1153, %s1161
          %s1163 = smul.addr %s23, 128
          %s1164 = scalar_lea.hbm %s8, %s1163
          %s1166 = sshll.u32 %s1156, 4
          %s1167 = int_to_ptr.vmem [resolvable:$true] %s1166
          %1169 = dma.vmem_to_hbm [thread:$0]  %s1167, 128, %s1164, %s1153
        $region60: #{tpu_custom_call.1} parent=51 // pred_fallthru
          _
      $region52: #{tpu_custom_call.1} parent=5 // pred_fallthru
        _
      %p1170 = scmp.le.s32.totalorder 2, %s18
      // Predicated region
      $region61: #{tpu_custom_call.1} parent=5 // pred_check
        %p1171 = pneg %p1170
      $region62: #{tpu_custom_call.1} parent=5 // pred_check_branch
        %1173 = sbr.rel (%p1171) target = $region64
      $region63: #{tpu_custom_call.1} parent=5 // pred_region
        %s1174 = ssub.s32 %s18, 2
        // Predicated region
        $region65: #{tpu_custom_call.1} parent=63 // pred_check
          %p1175 = pneg %p220
        $region66: #{tpu_custom_call.1} parent=63 // pred_check_branch
          %1177 = sbr.rel (%p1175) target = $region68
        $region67: #{tpu_custom_call.1} parent=63 // pred_region
          %s1178 = sand.u32 %s205, 1
          %s1179 = scalar_lea.sflag [#allocation6], %s1178
          %s1180 = sand.u32 %s205, 1
          %s1181 = smul.addr %s1180, 8
          %s1182 = scalar_lea.vmem [#allocation7], %s1181
          %1183 = dma.done %s1179, 128
        $region68: #{tpu_custom_call.1} parent=63 // pred_fallthru
          _
      $region64: #{tpu_custom_call.1} parent=5 // pred_fallthru
        _
    $region6: #{tpu_custom_call.1} parent=1 // loop_footer
      %s22 = sadd.s32 1, %s18
    $region7: #{tpu_custom_call.1} parent=1 // loop_footer_branch
      %17 = sbr.rel target = $region3
    $region8: #{tpu_custom_call.1} parent=1 // loop_exit
      _
    %1184 = vsyncpa [#allocation5], 1
    %s1185 = scalar_lea.sflag [#allocation5], 1
    %1186 = vsyncpa %s1185, 1
    %1187 = vsyncpa [#allocation6], 1
    %s1188 = scalar_lea.sflag [#allocation6], 1
    %1189 = vsyncpa %s1188, 1

// kernel: tpu_custom_call.1
$region0: #{tpu_custom_call.1}
  #allocation0 [shape = 'u32[]', space=smem, size = 0x4, offset = 0x4, fixed_abs, tag = 'smem constant byte address 0x4 - core index']
  #allocation1 [shape = 'u32[144,128]{1,0:T(1,128)}', space=vmem, size = 0x12000, scoped, tag = 'internal scratch']
  #allocation2 [shape = 'bf16[8,96]{1,0:T(8,128)(2,1)}', space=vmem, size = 0x800, scoped, tag = 'scratch operand']
  #allocation3 [shape = 'bf16[8,32]{1,0:T(8,128)(2,1)}', space=vmem, size = 0x800, scoped, tag = 'scratch operand']
  %s0 = inlined_call_operand.vmem [shape: f32[16,32], index: 0, kind: input, shape index: {}]
  %s1 = inlined_call_operand.vmem [shape: bf16[32,96], index: 1, kind: input, shape index: {}]
  %s2 = inlined_call_operand.vmem [shape: f32[1,96], index: 2, kind: input, shape index: {}]
  %s3 = inlined_call_operand.vmem [shape: bf16[32,32], index: 3, kind: input, shape index: {}]
  %s4 = inlined_call_operand.vmem [shape: f32[8,32], index: 4, kind: input, shape index: {}]
  %s5 = inlined_call_operand.hbm [shape: bf16[32,64], index: 5, kind: input, shape index: {}]
  %s6 = inlined_call_operand.vmem [shape: f32[1,64], index: 6, kind: input, shape index: {}]
  %s7 = inlined_call_operand.vmem [shape: bf16[64,32], index: 7, kind: input, shape index: {}]
  %s8 = inlined_call_operand.hbm [shape: f32[16,32], index: 8, kind: output, shape index: {}]
  %s9 = sld [smem:[#allocation0]]
  $region69: #{tpu_custom_call.1} parent=0
    _
  %s11 = ssub.s32 1, %s9
  %s12 = scalar_select 0, %s11, %s9
  $region1: #{tpu_custom_call.1} parent=0
    #allocation4 [shape = 'u8[8192]{0}', space=vmem, size = 0x2000, scoped, tag = 'input window, operand 5, single buffered']
    #allocation5 [shape = 's32[2]{0}', space=sflag, size = 0x8, scoped, tag = 'scoped memory for tpu_custom_call.1']
    #allocation6 [shape = 's32[2]{0}', space=sflag, size = 0x8, scoped, tag = 'scoped memory for tpu_custom_call.1']
    #allocation7 [shape = 'u8[8192]{0}', space=vmem, size = 0x2000, scoped, tag = 'output window, operand 0']
    %13 = vsyncpa [#allocation5], 0
    %14 = vsyncpa [#allocation6], 0
    %s15 = scalar_lea.sflag [#allocation6], 1
    %16 = vsyncpa %s15, 0
    loop: start=0, step=1, limit=4
    $region2: #{tpu_custom_call.1} parent=1 // loop_pre_header
      _
    $region3: #{tpu_custom_call.1} parent=1 // loop_header
      %s18 = sphi 0, %s22
      %p19 = scmp.ge.s32.totalorder %s18, 4
      %s28 = sphi 0, %s30
      %s31 = sphi 0, %s28
      %s32 = sphi 0, %s31
      %s48 = sphi 0, %s32
      %s52 = sphi 0, %s52
      %s54 = sphi 0, %s52
      %s55 = sphi 0, %s54
      %s69 = sphi 0, %s55
      %s73 = sphi 0, %s73
      %s75 = sphi 0, %s73
      %s76 = sphi 0, %s75
      %s90 = sphi 0, %s76
      %s94 = sphi 0, %s94
      %s96 = sphi 0, %s94
      %s97 = sphi 0, %s96
      %s111 = sphi 0, %s97
      %s115 = sphi 0, %s115
      %s117 = sphi 0, %s115
      %s118 = sphi 0, %s117
      %s132 = sphi 0, %s118
      %s136 = sphi 0, %s136
      %s138 = sphi 0, %s136
      %s139 = sphi 0, %s138
      %s153 = sphi 0, %s139
      %s157 = sphi 0, %s157
      %s159 = sphi 0, %s157
      %s160 = sphi 0, %s159
      %s174 = sphi 0, %s160
      %s178 = sphi 0, %s178
      %s180 = sphi 0, %s178
      %s181 = sphi 0, %s180
      %s195 = sphi 0, %s181
      %s201 = sphi 0, %s203
      %s204 = sphi 0, %s201
      %s205 = sphi 0, %s204
      %s221 = sphi 0, %s205
    $region4: #{tpu_custom_call.1} parent=1 // loop_header_branch
      %21 = sbr.rel (%p19) target = $region8
    $region5: #{tpu_custom_call.1} parent=1 // loop_body
      %s23 = ssub.s32 %s18, 1
      %s24 = ssub.s32 %s18, 2
      %s25 = sadd.s32 %s18, 1
      %s26 = ssub.s32 %s18, %s25
      %p27 = scmp.eq.s32.totalorder %s26, 0
      %s29 = sadd.s32 %s28, 1
      %s30 = scalar_select %p27, %s28, %s29
      %p33 = pneg %p27
      %p34 = scmp.eq.s32.totalorder %s18, 1
      %p35 = por %p33, %p34
      %p36 = scmp.ne.s32.totalorder %s28, %s31
      %p37 = scmp.eq.s32.totalorder %s18, 0
      %p38 = por %p36, %p37
      %p39 = scmp.ne.s32.totalorder %s28, %s31
      %p40 = scmp.eq.s32.totalorder %s23, 1
      %p41 = por %p39, %p40
      %p42 = scmp.ne.s32.totalorder %s31, %s32
      %p43 = scmp.eq.s32.totalorder %s23, 0
      %p44 = por %p42, %p43
      %p45 = scmp.ne.s32.totalorder %s31, %s32
      %p46 = scmp.eq.s32.totalorder %s24, 1
      %p47 = por %p45, %p46
      %p49 = scmp.ne.s32.totalorder %s32, %s48
      %p50 = scmp.eq.s32.totalorder %s24, 0
      %p51 = por %p49, %p50
      %s53 = sadd.s32 %s52, 1
      %p56 = scmp.eq.s32.totalorder %s18, 1
      %p57 = scmp.ne.s32.totalorder %s52, %s54
      %p58 = scmp.eq.s32.totalorder %s18, 0
      %p59 = por %p57, %p58
      %p60 = scmp.ne.s32.totalorder %s52, %s54
      %p61 = scmp.eq.s32.totalorder %s23, 1
      %p62 = por %p60, %p61
      %p63 = scmp.ne.s32.totalorder %s54, %s55
      %p64 = scmp.eq.s32.totalorder %s23, 0
      %p65 = por %p63, %p64
      %p66 = scmp.ne.s32.totalorder %s54, %s55
      %p67 = scmp.eq.s32.totalorder %s24, 1
      %p68 = por %p66, %p67
      %p70 = scmp.ne.s32.totalorder %s55, %s69
      %p71 = scmp.eq.s32.totalorder %s24, 0
      %p72 = por %p70, %p71
      %s74 = sadd.s32 %s73, 1
      %p77 = scmp.eq.s32.totalorder %s18, 1
      %p78 = scmp.ne.s32.totalorder %s73, %s75
      %p79 = scmp.eq.s32.totalorder %s18, 0
      %p80 = por %p78, %p79
      %p81 = scmp.ne.s32.totalorder %s73, %s75
      %p82 = scmp.eq.s32.totalorder %s23, 1
      %p83 = por %p81, %p82
      %p84 = scmp.ne.s32.totalorder %s75, %s76
      %p85 = scmp.eq.s32.totalorder %s23, 0
      %p86 = por %p84, %p85
      %p87 = scmp.ne.s32.totalorder %s75, %s76
      %p88 = scmp.eq.s32.totalorder %s24, 1
      %p89 = por %p87, %p88
      %p91 = scmp.ne.s32.totalorder %s76, %s90
      %p92 = scmp.eq.s32.totalorder %s24, 0
      %p93 = por %p91, %p92
      %s95 = sadd.s32 %s94, 1
      %p98 = scmp.eq.s32.totalorder %s18, 1
      %p99 = scmp.ne.s32.totalorder %s94, %s96
      %p100 = scmp.eq.s32.totalorder %s18, 0
      %p101 = por %p99, %p100
      %p102 = scmp.ne.s32.totalorder %s94, %s96
      %p103 = scmp.eq.s32.totalorder %s23, 1
      %p104 = por %p102, %p103
      %p105 = scmp.ne.s32.totalorder %s96, %s97
      %p106 = scmp.eq.s32.totalorder %s23, 0
      %p107 = por %p105, %p106
      %p108 = scmp.ne.s32.totalorder %s96, %s97
      %p109 = scmp.eq.s32.totalorder %s24, 1
      %p110 = por %p108, %p109
      %p112 = scmp.ne.s32.totalorder %s97, %s111
      %p113 = scmp.eq.s32.totalorder %s24, 0
      %p114 = por %p112, %p113
      %s116 = sadd.s32 %s115, 1
      %p119 = scmp.eq.s32.totalorder %s18, 1
      %p120 = scmp.ne.s32.totalorder %s115, %s117
      %p121 = scmp.eq.s32.totalorder %s18, 0
      %p122 = por %p120, %p121
      %p123 = scmp.ne.s32.totalorder %s115, %s117
      %p124 = scmp.eq.s32.totalorder %s23, 1
      %p125 = por %p123, %p124
      %p126 = scmp.ne.s32.totalorder %s117, %s118
      %p127 = scmp.eq.s32.totalorder %s23, 0
      %p128 = por %p126, %p127
      %p129 = scmp.ne.s32.totalorder %s117, %s118
      %p130 = scmp.eq.s32.totalorder %s24, 1
      %p131 = por %p129, %p130
      %p133 = scmp.ne.s32.totalorder %s118, %s132
      %p134 = scmp.eq.s32.totalorder %s24, 0
      %p135 = por %p133, %p134
      %s137 = sadd.s32 %s136, 1
      %p140 = scmp.eq.s32.totalorder %s18, 1
      %p141 = scmp.ne.s32.totalorder %s136, %s138
      %p142 = scmp.eq.s32.totalorder %s18, 0
      %p143 = por %p141, %p142
      %p144 = scmp.ne.s32.totalorder %s136, %s138
      %p145 = scmp.eq.s32.totalorder %s23, 1
      %p146 = por %p144, %p145
      %p147 = scmp.ne.s32.totalorder %s138, %s139
      %p148 = scmp.eq.s32.totalorder %s23, 0
      %p149 = por %p147, %p148
      %p150 = scmp.ne.s32.totalorder %s138, %s139
      %p151 = scmp.eq.s32.totalorder %s24, 1
      %p152 = por %p150, %p151
      %p154 = scmp.ne.s32.totalorder %s139, %s153
      %p155 = scmp.eq.s32.totalorder %s24, 0
      %p156 = por %p154, %p155
      %s158 = sadd.s32 %s157, 1
      %p161 = scmp.eq.s32.totalorder %s18, 1
      %p162 = scmp.ne.s32.totalorder %s157, %s159
      %p163 = scmp.eq.s32.totalorder %s18, 0
      %p164 = por %p162, %p163
      %p165 = scmp.ne.s32.totalorder %s157, %s159
      %p166 = scmp.eq.s32.totalorder %s23, 1
      %p167 = por %p165, %p166
      %p168 = scmp.ne.s32.totalorder %s159, %s160
      %p169 = scmp.eq.s32.totalorder %s23, 0
      %p170 = por %p168, %p169
      %p171 = scmp.ne.s32.totalorder %s159, %s160
      %p172 = scmp.eq.s32.totalorder %s24, 1
      %p173 = por %p171, %p172
      %p175 = scmp.ne.s32.totalorder %s160, %s174
      %p176 = scmp.eq.s32.totalorder %s24, 0
      %p177 = por %p175, %p176
      %s179 = sadd.s32 %s178, 1
      %p182 = scmp.eq.s32.totalorder %s18, 1
      %p183 = scmp.ne.s32.totalorder %s178, %s180
      %p184 = scmp.eq.s32.totalorder %s18, 0
      %p185 = por %p183, %p184
      %p186 = scmp.ne.s32.totalorder %s178, %s180
      %p187 = scmp.eq.s32.totalorder %s23, 1
      %p188 = por %p186, %p187
      %p189 = scmp.ne.s32.totalorder %s180, %s181
      %p190 = scmp.eq.s32.totalorder %s23, 0
      %p191 = por %p189, %p190
      %p192 = scmp.ne.s32.totalorder %s180, %s181
      %p193 = scmp.eq.s32.totalorder %s24, 1
      %p194 = por %p192, %p193
      %p196 = scmp.ne.s32.totalorder %s181, %s195
      %p197 = scmp.eq.s32.totalorder %s24, 0
      %p198 = por %p196, %p197
      %s199 = ssub.s32 %s18, %s25
      %p200 = scmp.eq.s32.totalorder %s199, 0
      %s202 = sadd.s32 %s201, 1
      %s203 = scalar_select %p200, %s201, %s202
      %p206 = pneg %p200
      %p207 = scmp.eq.s32.totalorder %s18, 1
      %p208 = por %p206, %p207
      %p209 = scmp.ne.s32.totalorder %s201, %s204
      %p210 = scmp.eq.s32.totalorder %s18, 0
      %p211 = por %p209, %p210
      %p212 = scmp.ne.s32.totalorder %s201, %s204
      %p213 = scmp.eq.s32.totalorder %s23, 1
      %p214 = por %p212, %p213
      %p215 = scmp.ne.s32.totalorder %s204, %s205
      %p216 = scmp.eq.s32.totalorder %s23, 0
      %p217 = por %p215, %p216
      %p218 = scmp.ne.s32.totalorder %s204, %s205
      %p219 = scmp.eq.s32.totalorder %s24, 1
      %p220 = por %p218, %p219
      %p222 = scmp.ne.s32.totalorder %s205, %s221
      %p223 = scmp.eq.s32.totalorder %s24, 0
      %p224 = por %p222, %p223
      %p225 = scmp.le.s32.totalorder 1, %s18
      %p226 = scmp.lt.s32.totalorder %s18, 3
      %p227 = pnand %p225, %p226
      %p228 = pneg %p227
      // Predicated region
      $region9: #{tpu_custom_call.1} parent=5 // pred_check
        _
      $region10: #{tpu_custom_call.1} parent=5 // pred_check_branch
        %230 = sbr.rel (%p227) target = $region12
      $region11: #{tpu_custom_call.1} parent=5 // pred_region
        %s231 = ssub.s32 %s18, 1
        // Predicated region
        $region13: #{tpu_custom_call.1} parent=11 // pred_check
          %p232 = pneg %p65
        $region14: #{tpu_custom_call.1} parent=11 // pred_check_branch
          %234 = sbr.rel (%p232) target = $region16
        $region15: #{tpu_custom_call.1} parent=11 // pred_region
          _
        $region16: #{tpu_custom_call.1} parent=11 // pred_fallthru
          _
        // Predicated region
        $region17: #{tpu_custom_call.1} parent=11 // pred_check
          %p235 = pneg %p86
        $region18: #{tpu_custom_call.1} parent=11 // pred_check_branch
          %237 = sbr.rel (%p235) target = $region20
        $region19: #{tpu_custom_call.1} parent=11 // pred_region
          _
        $region20: #{tpu_custom_call.1} parent=11 // pred_fallthru
          _
        // Predicated region
        $region21: #{tpu_custom_call.1} parent=11 // pred_check
          %p238 = pneg %p107
        $region22: #{tpu_custom_call.1} parent=11 // pred_check_branch
          %240 = sbr.rel (%p238) target = $region24
        $region23: #{tpu_custom_call.1} parent=11 // pred_region
          _
        $region24: #{tpu_custom_call.1} parent=11 // pred_fallthru
          _
        // Predicated region
        $region25: #{tpu_custom_call.1} parent=11 // pred_check
          %p241 = pneg %p128
        $region26: #{tpu_custom_call.1} parent=11 // pred_check_branch
          %243 = sbr.rel (%p241) target = $region28
        $region27: #{tpu_custom_call.1} parent=11 // pred_region
          _
        $region28: #{tpu_custom_call.1} parent=11 // pred_fallthru
          _
        // Predicated region
        $region29: #{tpu_custom_call.1} parent=11 // pred_check
          %p244 = pneg %p149
        $region30: #{tpu_custom_call.1} parent=11 // pred_check_branch
          %246 = sbr.rel (%p244) target = $region32
        $region31: #{tpu_custom_call.1} parent=11 // pred_region
          %s248 = ssub.s32 256, 256
          %249 = vsyncadd [#allocation5], %s248
          %s250 = sshll.u32 [#allocation4], 4
          %s251 = int_to_ptr.vmem [resolvable:$true] %s250
          %256 = dma.hbm_to_vmem [thread:$0]  %s5, 256, %s251, [#allocation5], 64, 64, 4
        $region32: #{tpu_custom_call.1} parent=11 // pred_fallthru
          _
        // Predicated region
        $region33: #{tpu_custom_call.1} parent=11 // pred_check
          %p257 = pneg %p170
        $region34: #{tpu_custom_call.1} parent=11 // pred_check_branch
          %259 = sbr.rel (%p257) target = $region36
        $region35: #{tpu_custom_call.1} parent=11 // pred_region
          _
        $region36: #{tpu_custom_call.1} parent=11 // pred_fallthru
          _
        // Predicated region
        $region37: #{tpu_custom_call.1} parent=11 // pred_check
          %p260 = pneg %p191
        $region38: #{tpu_custom_call.1} parent=11 // pred_check_branch
          %262 = sbr.rel (%p260) target = $region40
        $region39: #{tpu_custom_call.1} parent=11 // pred_region
          _
        $region40: #{tpu_custom_call.1} parent=11 // pred_fallthru
          _
      $region12: #{tpu_custom_call.1} parent=5 // pred_fallthru
        _
      %p263 = scmp.lt.s32.totalorder %s18, 2
      // Predicated region
      $region41: #{tpu_custom_call.1} parent=5 // pred_check
        %p264 = pneg %p263
      $region42: #{tpu_custom_call.1} parent=5 // pred_check_branch
        %266 = sbr.rel (%p264) target = $region44
      $region43: #{tpu_custom_call.1} parent=5 // pred_region
        // Predicated region
        $region45: #{tpu_custom_call.1} parent=43 // pred_check
          %p267 = pneg %p38
        $region46: #{tpu_custom_call.1} parent=43 // pred_check_branch
          %269 = sbr.rel (%p267) target = $region48
        $region47: #{tpu_custom_call.1} parent=43 // pred_region
          %p270 = scmp.lt.s32.totalorder %s18, 1
          %s271 = scalar_select %p270, %s18, 1
          %s272 = smul.addr %s271, 8
          %s273 = scalar_lea.vmem %s0, %s272
        $region48: #{tpu_custom_call.1} parent=43 // pred_fallthru
          _
      $region44: #{tpu_custom_call.1} parent=5 // pred_fallthru
        _
      %p274 = scmp.le.s32.totalorder 1, %s18
      %p275 = scmp.lt.s32.totalorder %s18, 3
      %p276 = pnand %p274, %p275
      %p277 = pneg %p276
      // Predicated region
      $region49: #{tpu_custom_call.1} parent=5 // pred_check
        _
      $region50: #{tpu_custom_call.1} parent=5 // pred_check_branch
        %279 = sbr.rel (%p276) target = $region52
      $region51: #{tpu_custom_call.1} parent=5 // pred_region
        %s280 = ssub.s32 %s18, 1
        // Predicated region
        $region53: #{tpu_custom_call.1} parent=51 // pred_check
          %p281 = pneg %p149
        $region54: #{tpu_custom_call.1} parent=51 // pred_check_branch
          %283 = sbr.rel (%p281) target = $region56
        $region55: #{tpu_custom_call.1} parent=51 // pred_region
          %284 = dma.done [#allocation5], 256
        $region56: #{tpu_custom_call.1} parent=51 // pred_fallthru
          _
        %p285 = scmp.lt.s32.totalorder %s23, 1
        %s286 = scalar_select %p285, %s23, 1
        %s287 = smul.addr %s286, 8
        %s288 = scalar_lea.vmem %s0, %s287
        %p289 = pneg %p44
        %p290 = pneg %p41
        %p291 = pneg %p65
        %p292 = pneg %p62
        %p293 = pneg %p86
        %p294 = pneg %p83
        %p295 = pneg %p107
        %p296 = pneg %p104
        %p297 = pneg %p128
        %p298 = pneg %p125
        %p299 = pneg %p149
        %p300 = pneg %p146
        %p301 = pneg %p170
        %p302 = pneg %p167
        %p303 = pneg %p191
        %p304 = pneg %p188
        %p305 = pneg %p217
        %p306 = pneg %p214
        %s307 = sand.u32 %s204, 1
        %s308 = scalar_lea.sflag [#allocation6], %s307
        %s309 = sand.u32 %s204, 1
        %s310 = smul.addr %s309, 8
        %s311 = scalar_lea.vmem [#allocation7], %s310
        %p312 = scmp.lt.s32.totalorder %s23, 1
        %s313 = scalar_select %p312, %s23, 1
        %s314 = smul.addr %s313, 8
        %s315 = scalar_lea.vmem %s0, %s314
        %v317 = vld [vmem:[%s315] sm:$0xff]
        %v318 = vld [vmem:[%s4] sm:$0x1]
        %v319 = vld [vmem:[%s4 + $0x1] sm:$0x1]
        %v320 = vld [vmem:[%s4 + $0x2] sm:$0x1]
        %v321 = vld [vmem:[%s4 + $0x3] sm:$0x1]
        %v322 = vld [vmem:[%s4 + $0x4] sm:$0x1]
        %v323 = vld [vmem:[%s4 + $0x5] sm:$0x1]
        %vm324 = vcmask 261120
        %v325 = vsel %vm324, %v317, 0.0
        %326 = vadd.xlane.f32.xlu0 %v325
        %v327 = vpop.xlane.xlu0 %326
        %v328 = vrcp.pop 32.0
        %v329 = vmul.f32 %v327, %v328
        %v330 = vsub.f32 %v317, %v329
        %v331 = vmul.f32 %v330, %v330
        %v332 = vsel %vm324, %v331, 0.0
        %333 = vadd.xlane.f32.xlu0 %v332
        %v334 = vpop.xlane.xlu0 %333
        %v335 = vmul.f32 %v334, %v328
        %v336 = vadd.f32 %v335, 1e-06
        %v337 = vrsqrt.pop %v336
        %v338 = vmul.f32 %v330, %v337
        %v339 = vlaneseq
        %v340 = vshrl.u32 %v339, 7
        %v341 = vsub.s32 0, %v340
        %v342 = vrot.slane %v318, %v341
        %v343 = vmul.f32 %v338, %v342
        %v344 = vlaneseq
        %v345 = vshrl.u32 %v344, 7
        %v346 = vsub.s32 0, %v345
        %v347 = vrot.slane %v319, %v346
        %v348 = vadd.f32 %v343, %v347
        %v349 = vpack.c.bf16 %v348, %v348
        %v350 = vld [vmem:[%s1] sm:$0xf]
        %v351 = vld [vmem:[%s1 + $0x4] sm:$0xf]
        %v352 = vld [vmem:[%s1 + $0x8] sm:$0xf]
        %v353 = vld [vmem:[%s1 + $0xc] sm:$0xf]
        %v354 = vld [vmem:[%s2] sm:$0x1]
        %v356 = vlaneseq
        %v357 = vshrl.u32 %v356, 7
        %v358 = vsub.s32 0, %v357
        %v359 = vrot.slane %v354, %v358
        %v365 = vunpack.c.l.b16 %v350
        %v366 = vunpack.c.l.b16 %v351
        %v367 = vunpack.c.l.b16 %v352
        %v368 = vunpack.c.l.b16 %v353
        %v369 = vpack.c.b16 %v366, %v365
        %v370 = vpack.c.b16 %v368, %v367
        %v374 = vsel %vm324, %v349, 0
        %376 = vmatprep.subr.bf16.mxu0 0
        %377 = vmatpush1.bf16.msra.mxu0 %v369
        %378 = vmatprep.subr.bf16.mxu0 0
        %379 = vmatpush1.bf16.msra.mxu0 %v370
        %380 = vmatprep.subr.bf16.mxu0 0
        %381 = vmatpush1.bf16.msra.mxu0 0
        %382 = vmatprep.subr.bf16.mxu0 0
        %383 = vmatpush1.bf16.msra.mxu0 0
        %384 = vmatprep.subr.bf16.mxu0 0
        %385 = vmatpush1.bf16.msra.mxu0 0
        %386 = vmatprep.subr.bf16.mxu0 0
        %387 = vmatpush1.bf16.msra.mxu0 0
        %388 = vmatprep.subr.bf16.mxu0 0
        %389 = vmatpush1.bf16.msra.mxu0 0
        %390 = vmatprep.subr.bf16.mxu0 0
        %391 = vmatpush1.bf16.msra.mxu0 0
        %392 = vmatprep.subr.bf16.mxu0 0
        %393 = vmatpush1.bf16.msra.mxu0 0
        %394 = vmatprep.subr.bf16.mxu0 0
        %395 = vmatpush1.bf16.msra.mxu0 0
        %396 = vmatprep.subr.bf16.mxu0 0
        %397 = vmatpush1.bf16.msra.mxu0 0
        %398 = vmatprep.subr.bf16.mxu0 0
        %399 = vmatpush1.bf16.msra.mxu0 0
        %400 = vmatprep.subr.bf16.mxu0 0
        %401 = vmatpush1.bf16.msra.mxu0 0
        %402 = vmatprep.subr.bf16.mxu0 0
        %403 = vmatpush1.bf16.msra.mxu0 0
        %404 = vmatprep.subr.bf16.mxu0 0
        %405 = vmatpush1.bf16.msra.mxu0 0
        %406 = vmatprep.subr.bf16.mxu0 0
        %407 = vmatpush1.bf16.msra.mxu0 0
        %408 = vmatprep.mubr.bf16.mxu0 0
        %409 = vmatmul.mubr.bf16.gmra.mrb[0].mxu0 %v374
        %v410 = vpop.f32.mrb[0].mxu0
        %v411 = vadd.f32 %v359, %v410
        %v412 = vpop.f32.mrb[0].mxu0
        %v413 = vpop.f32.mrb[0].mxu0
        %v414 = vpop.f32.mrb[0].mxu0
        %415 = vdwg.mxu0
        %v416 = vpack.c.bf16 %v411, %v411
        %vm417 = vcmask 781312
        %418 = vst.msk [vmem:[#allocation2] sm:$0xf] %vm417, %v416
        %v419 = vld [vmem:[#allocation2] sm:$0xf]
        %v421 = vunpack.c.l.b16 %v419
        %v422 = vpack.c.b16 %v421, %v421
        %423 = vrot.lane.b32.xlu0 %v422, 96
        %v424 = vpop.permute.xlu0 %423
        %vm425 = vcmask 64512
        %v427 = vsel %vm425, %v419, 0
        %v430 = vsel %vm425, %v424, 0
        %432 = vmatprep.subr.bf16.mxu0 0
        %433 = vmatpush1.bf16.xpose.msra.mxu0 %v430
        %434 = vmatprep.subr.bf16.mxu0 0
        %435 = vmatpush1.bf16.xpose.msra.mxu0 0
        %436 = vmatprep.subr.bf16.mxu0 0
        %437 = vmatpush1.bf16.xpose.msra.mxu0 0
        %438 = vmatprep.subr.bf16.mxu0 0
        %439 = vmatpush1.bf16.xpose.msra.mxu0 0
        %440 = vmatprep.subr.bf16.mxu0 0
        %441 = vmatpush1.bf16.xpose.msra.mxu0 0
        %442 = vmatprep.subr.bf16.mxu0 0
        %443 = vmatpush1.bf16.xpose.msra.mxu0 0
        %444 = vmatprep.subr.bf16.mxu0 0
        %445 = vmatpush1.bf16.xpose.msra.mxu0 0
        %446 = vmatprep.subr.bf16.mxu0 0
        %447 = vmatpush1.bf16.xpose.msra.mxu0 0
        %448 = vmatprep.subr.bf16.mxu0 0
        %449 = vmatpush1.bf16.xpose.msra.mxu0 0
        %450 = vmatprep.subr.bf16.mxu0 0
        %451 = vmatpush1.bf16.xpose.msra.mxu0 0
        %452 = vmatprep.subr.bf16.mxu0 0
        %453 = vmatpush1.bf16.xpose.msra.mxu0 0
        %454 = vmatprep.subr.bf16.mxu0 0
        %455 = vmatpush1.bf16.xpose.msra.mxu0 0
        %456 = vmatprep.subr.bf16.mxu0 0
        %457 = vmatpush1.bf16.xpose.msra.mxu0 0
        %458 = vmatprep.subr.bf16.mxu0 0
        %459 = vmatpush1.bf16.xpose.msra.mxu0 0
        %460 = vmatprep.subr.bf16.mxu0 0
        %461 = vmatpush1.bf16.xpose.msra.mxu0 0
        %462 = vmatprep.subr.bf16.mxu0 0
        %463 = vmatpush1.bf16.xpose.msra.mxu0 0
        %464 = vmatprep.mubr.bf16.mxu0 0
        %465 = vmatmul.mubr.bf16.gmra.mrb[0].mxu0 %v427
        %v466 = vpop.f32.mrb[0].mxu0
        %v467 = vadd.f32 0.0, %v466
        %v468 = vpop.f32.mrb[0].mxu0
        %v469 = vpop.f32.mrb[0].mxu0
        %v470 = vpop.f32.mrb[0].mxu0
        %471 = vdwg.mxu0
        %v472 = vsel %vm425, %v467, -inf
        %473 = vmax.xlane.f32.xlu0 %v472
        %v474 = vpop.xlane.xlu0 %473
        %v475 = vsub.f32 %v467, %v474
        %v476 = vmul.f32 %v475, 1.442695
        %v477 = vpow.pop %v476
        %v478 = vsel %vm425, %v477, 0.0
        %479 = vadd.xlane.f32.xlu0 %v478
        %v480 = vpop.xlane.xlu0 %479
        %v481 = vrcp.pop %v480
        %v482 = vmul.f32 %v477, %v481
        %v483 = vpack.c.bf16 %v482, %v482
        %484 = vrot.lane.b32.xlu0 %v422, 64
        %v485 = vpop.permute.xlu0 %484
        %v487 = vsel %vm425, %v483, 0
        %vm489 = vcmask 1043456
        %v491 = vsel %vm489, %v485, 0
        %493 = vmatprep.subr.bf16.mxu0 0
        %494 = vmatpush1.bf16.msra.mxu0 %v491
        %495 = vmatprep.subr.bf16.mxu0 0
        %496 = vmatpush1.bf16.msra.mxu0 0
        %497 = vmatprep.subr.bf16.mxu0 0
        %498 = vmatpush1.bf16.msra.mxu0 0
        %499 = vmatprep.subr.bf16.mxu0 0
        %500 = vmatpush1.bf16.msra.mxu0 0
        %501 = vmatprep.subr.bf16.mxu0 0
        %502 = vmatpush1.bf16.msra.mxu0 0
        %503 = vmatprep.subr.bf16.mxu0 0
        %504 = vmatpush1.bf16.msra.mxu0 0
        %505 = vmatprep.subr.bf16.mxu0 0
        %506 = vmatpush1.bf16.msra.mxu0 0
        %507 = vmatprep.subr.bf16.mxu0 0
        %508 = vmatpush1.bf16.msra.mxu0 0
        %509 = vmatprep.subr.bf16.mxu0 0
        %510 = vmatpush1.bf16.msra.mxu0 0
        %511 = vmatprep.subr.bf16.mxu0 0
        %512 = vmatpush1.bf16.msra.mxu0 0
        %513 = vmatprep.subr.bf16.mxu0 0
        %514 = vmatpush1.bf16.msra.mxu0 0
        %515 = vmatprep.subr.bf16.mxu0 0
        %516 = vmatpush1.bf16.msra.mxu0 0
        %517 = vmatprep.subr.bf16.mxu0 0
        %518 = vmatpush1.bf16.msra.mxu0 0
        %519 = vmatprep.subr.bf16.mxu0 0
        %520 = vmatpush1.bf16.msra.mxu0 0
        %521 = vmatprep.subr.bf16.mxu0 0
        %522 = vmatpush1.bf16.msra.mxu0 0
        %523 = vmatprep.subr.bf16.mxu0 0
        %524 = vmatpush1.bf16.msra.mxu0 0
        %525 = vmatprep.mubr.bf16.mxu0 0
        %526 = vmatmul.mubr.bf16.gmra.mrb[0].mxu0 %v487
        %v527 = vpop.f32.mrb[0].mxu0
        %v528 = vadd.f32 0.0, %v527
        %v529 = vpop.f32.mrb[0].mxu0
        %v530 = vpop.f32.mrb[0].mxu0
        %v531 = vpop.f32.mrb[0].mxu0
        %532 = vdwg.mxu0
        %v533 = vpack.c.bf16 %v528, %v528
        %vm534 = vcmask 60416
        %535 = vst.msk [vmem:[#allocation3] sm:$0xf] %vm534, %v533
        %v536 = vld [vmem:[#allocation2] sm:$0xf]
        %v538 = vunpack.c.l.b16 %v536
        %v539 = vpack.c.b16 %v538, %v538
        %540 = vrot.lane.b32.xlu0 %v539, 120
        %v541 = vpop.permute.xlu0 %540
        %542 = vrot.lane.b32.xlu0 %v539, 88
        %v543 = vpop.permute.xlu0 %542
        %v545 = vsel %vm425, %v541, 0
        %v548 = vsel %vm425, %v543, 0
        %550 = vmatprep.subr.bf16.mxu0 0
        %551 = vmatpush1.bf16.xpose.msra.mxu0 %v548
        %552 = vmatprep.subr.bf16.mxu0 0
        %553 = vmatpush1.bf16.xpose.msra.mxu0 0
        %554 = vmatprep.subr.bf16.mxu0 0
        %555 = vmatpush1.bf16.xpose.msra.mxu0 0
        %556 = vmatprep.subr.bf16.mxu0 0
        %557 = vmatpush1.bf16.xpose.msra.mxu0 0
        %558 = vmatprep.subr.bf16.mxu0 0
        %559 = vmatpush1.bf16.xpose.msra.mxu0 0
        %560 = vmatprep.subr.bf16.mxu0 0
        %561 = vmatpush1.bf16.xpose.msra.mxu0 0
        %562 = vmatprep.subr.bf16.mxu0 0
        %563 = vmatpush1.bf16.xpose.msra.mxu0 0
        %564 = vmatprep.subr.bf16.mxu0 0
        %565 = vmatpush1.bf16.xpose.msra.mxu0 0
        %566 = vmatprep.subr.bf16.mxu0 0
        %567 = vmatpush1.bf16.xpose.msra.mxu0 0
        %568 = vmatprep.subr.bf16.mxu0 0
        %569 = vmatpush1.bf16.xpose.msra.mxu0 0
        %570 = vmatprep.subr.bf16.mxu0 0
        %571 = vmatpush1.bf16.xpose.msra.mxu0 0
        %572 = vmatprep.subr.bf16.mxu0 0
        %573 = vmatpush1.bf16.xpose.msra.mxu0 0
        %574 = vmatprep.subr.bf16.mxu0 0
        %575 = vmatpush1.bf16.xpose.msra.mxu0 0
        %576 = vmatprep.subr.bf16.mxu0 0
        %577 = vmatpush1.bf16.xpose.msra.mxu0 0
        %578 = vmatprep.subr.bf16.mxu0 0
        %579 = vmatpush1.bf16.xpose.msra.mxu0 0
        %580 = vmatprep.subr.bf16.mxu0 0
        %581 = vmatpush1.bf16.xpose.msra.mxu0 0
        %582 = vmatprep.mubr.bf16.mxu0 0
        %583 = vmatmul.mubr.bf16.gmra.mrb[0].mxu0 %v545
        %v584 = vpop.f32.mrb[0].mxu0
        %v585 = vadd.f32 0.0, %v584
        %v586 = vpop.f32.mrb[0].mxu0
        %v587 = vpop.f32.mrb[0].mxu0
        %v588 = vpop.f32.mrb[0].mxu0
        %589 = vdwg.mxu0
        %v590 = vsel %vm425, %v585, -inf
        %591 = vmax.xlane.f32.xlu0 %v590
        %v592 = vpop.xlane.xlu0 %591
        %v593 = vsub.f32 %v585, %v592
        %v594 = vmul.f32 %v593, 1.442695
        %v595 = vpow.pop %v594
        %v596 = vsel %vm425, %v595, 0.0
        %597 = vadd.xlane.f32.xlu0 %v596
        %v598 = vpop.xlane.xlu0 %597
        %v599 = vrcp.pop %v598
        %v600 = vmul.f32 %v595, %v599
        %v601 = vpack.c.bf16 %v600, %v600
        %602 = vrot.lane.b32.xlu0 %v539, 56
        %v603 = vpop.permute.xlu0 %602
        %v605 = vsel %vm425, %v601, 0
        %v608 = vsel %vm489, %v603, 0
        %610 = vmatprep.subr.bf16.mxu0 0
        %611 = vmatpush1.bf16.msra.mxu0 %v608
        %612 = vmatprep.subr.bf16.mxu0 0
        %613 = vmatpush1.bf16.msra.mxu0 0
        %614 = vmatprep.subr.bf16.mxu0 0
        %615 = vmatpush1.bf16.msra.mxu0 0
        %616 = vmatprep.subr.bf16.mxu0 0
        %617 = vmatpush1.bf16.msra.mxu0 0
        %618 = vmatprep.subr.bf16.mxu0 0
        %619 = vmatpush1.bf16.msra.mxu0 0
        %620 = vmatprep.subr.bf16.mxu0 0
        %621 = vmatpush1.bf16.msra.mxu0 0
        %622 = vmatprep.subr.bf16.mxu0 0
        %623 = vmatpush1.bf16.msra.mxu0 0
        %624 = vmatprep.subr.bf16.mxu0 0
        %625 = vmatpush1.bf16.msra.mxu0 0
        %626 = vmatprep.subr.bf16.mxu0 0
        %627 = vmatpush1.bf16.msra.mxu0 0
        %628 = vmatprep.subr.bf16.mxu0 0
        %629 = vmatpush1.bf16.msra.mxu0 0
        %630 = vmatprep.subr.bf16.mxu0 0
        %631 = vmatpush1.bf16.msra.mxu0 0
        %632 = vmatprep.subr.bf16.mxu0 0
        %633 = vmatpush1.bf16.msra.mxu0 0
        %634 = vmatprep.subr.bf16.mxu0 0
        %635 = vmatpush1.bf16.msra.mxu0 0
        %636 = vmatprep.subr.bf16.mxu0 0
        %637 = vmatpush1.bf16.msra.mxu0 0
        %638 = vmatprep.subr.bf16.mxu0 0
        %639 = vmatpush1.bf16.msra.mxu0 0
        %640 = vmatprep.subr.bf16.mxu0 0
        %641 = vmatpush1.bf16.msra.mxu0 0
        %642 = vmatprep.mubr.bf16.mxu0 0
        %643 = vmatmul.mubr.bf16.gmra.mrb[0].mxu0 %v605
        %v644 = vpop.f32.mrb[0].mxu0
        %v645 = vadd.f32 0.0, %v644
        %v646 = vpop.f32.mrb[0].mxu0
        %v647 = vpop.f32.mrb[0].mxu0
        %v648 = vpop.f32.mrb[0].mxu0
        %649 = vdwg.mxu0
        %v650 = vpack.c.bf16 %v645, %v645
        %v652 = vunpack.c.l.b16 %v650
        %v653 = vpack.c.b16 %v652, %v652
        %654 = vrot.lane.b32.xlu0 %v653, 8
        %v655 = vpop.permute.xlu0 %654
        %vm657 = vcmask 126016
        %658 = vst.msk [vmem:[#allocation3] sm:$0xf] %vm657, %v655
        %v659 = vld [vmem:[#allocation2] sm:$0xf]
        %v661 = vunpack.c.l.b16 %v659
        %v662 = vpack.c.b16 %v661, %v661
        %663 = vrot.lane.b32.xlu0 %v662, 112
        %v664 = vpop.permute.xlu0 %663
        %665 = vrot.lane.b32.xlu0 %v662, 80
        %v666 = vpop.permute.xlu0 %665
        %v668 = vsel %vm425, %v664, 0
        %v671 = vsel %vm425, %v666, 0
        %673 = vmatprep.subr.bf16.mxu0 0
        %674 = vmatpush1.bf16.xpose.msra.mxu0 %v671
        %675 = vmatprep.subr.bf16.mxu0 0
        %676 = vmatpush1.bf16.xpose.msra.mxu0 0
        %677 = vmatprep.subr.bf16.mxu0 0
        %678 = vmatpush1.bf16.xpose.msra.mxu0 0
        %679 = vmatprep.subr.bf16.mxu0 0
        %680 = vmatpush1.bf16.xpose.msra.mxu0 0
        %681 = vmatprep.subr.bf16.mxu0 0
        %682 = vmatpush1.bf16.xpose.msra.mxu0 0
        %683 = vmatprep.subr.bf16.mxu0 0
        %684 = vmatpush1.bf16.xpose.msra.mxu0 0
        %685 = vmatprep.subr.bf16.mxu0 0
        %686 = vmatpush1.bf16.xpose.msra.mxu0 0
        %687 = vmatprep.subr.bf16.mxu0 0
        %688 = vmatpush1.bf16.xpose.msra.mxu0 0
        %689 = vmatprep.subr.bf16.mxu0 0
        %690 = vmatpush1.bf16.xpose.msra.mxu0 0
        %691 = vmatprep.subr.bf16.mxu0 0
        %692 = vmatpush1.bf16.xpose.msra.mxu0 0
        %693 = vmatprep.subr.bf16.mxu0 0
        %694 = vmatpush1.bf16.xpose.msra.mxu0 0
        %695 = vmatprep.subr.bf16.mxu0 0
        %696 = vmatpush1.bf16.xpose.msra.mxu0 0
        %697 = vmatprep.subr.bf16.mxu0 0
        %698 = vmatpush1.bf16.xpose.msra.mxu0 0
        %699 = vmatprep.subr.bf16.mxu0 0
        %700 = vmatpush1.bf16.xpose.msra.mxu0 0
        %701 = vmatprep.subr.bf16.mxu0 0
        %702 = vmatpush1.bf16.xpose.msra.mxu0 0
        %703 = vmatprep.subr.bf16.mxu0 0
        %704 = vmatpush1.bf16.xpose.msra.mxu0 0
        %705 = vmatprep.mubr.bf16.mxu0 0
        %706 = vmatmul.mubr.bf16.gmra.mrb[0].mxu0 %v668
        %v707 = vpop.f32.mrb[0].mxu0
        %v708 = vadd.f32 0.0, %v707
        %v709 = vpop.f32.mrb[0].mxu0
        %v710 = vpop.f32.mrb[0].mxu0
        %v711 = vpop.f32.mrb[0].mxu0
        %712 = vdwg.mxu0
        %v713 = vsel %vm425, %v708, -inf
        %714 = vmax.xlane.f32.xlu0 %v713
        %v715 = vpop.xlane.xlu0 %714
        %v716 = vsub.f32 %v708, %v715
        %v717 = vmul.f32 %v716, 1.442695
        %v718 = vpow.pop %v717
        %v719 = vsel %vm425, %v718, 0.0
        %720 = vadd.xlane.f32.xlu0 %v719
        %v721 = vpop.xlane.xlu0 %720
        %v722 = vrcp.pop %v721
        %v723 = vmul.f32 %v718, %v722
        %v724 = vpack.c.bf16 %v723, %v723
        %725 = vrot.lane.b32.xlu0 %v662, 48
        %v726 = vpop.permute.xlu0 %725
        %v728 = vsel %vm425, %v724, 0
        %v731 = vsel %vm489, %v726, 0
        %733 = vmatprep.subr.bf16.mxu0 0
        %734 = vmatpush1.bf16.msra.mxu0 %v731
        %735 = vmatprep.subr.bf16.mxu0 0
        %736 = vmatpush1.bf16.msra.mxu0 0
        %737 = vmatprep.subr.bf16.mxu0 0
        %738 = vmatpush1.bf16.msra.mxu0 0
        %739 = vmatprep.subr.bf16.mxu0 0
        %740 = vmatpush1.bf16.msra.mxu0 0
        %741 = vmatprep.subr.bf16.mxu0 0
        %742 = vmatpush1.bf16.msra.mxu0 0
        %743 = vmatprep.subr.bf16.mxu0 0
        %744 = vmatpush1.bf16.msra.mxu0 0
        %745 = vmatprep.subr.bf16.mxu0 0
        %746 = vmatpush1.bf16.msra.mxu0 0
        %747 = vmatprep.subr.bf16.mxu0 0
        %748 = vmatpush1.bf16.msra.mxu0 0
        %749 = vmatprep.subr.bf16.mxu0 0
        %750 = vmatpush1.bf16.msra.mxu0 0
        %751 = vmatprep.subr.bf16.mxu0 0
        %752 = vmatpush1.bf16.msra.mxu0 0
        %753 = vmatprep.subr.bf16.mxu0 0
        %754 = vmatpush1.bf16.msra.mxu0 0
        %755 = vmatprep.subr.bf16.mxu0 0
        %756 = vmatpush1.bf16.msra.mxu0 0
        %757 = vmatprep.subr.bf16.mxu0 0
        %758 = vmatpush1.bf16.msra.mxu0 0
        %759 = vmatprep.subr.bf16.mxu0 0
        %760 = vmatpush1.bf16.msra.mxu0 0
        %761 = vmatprep.subr.bf16.mxu0 0
        %762 = vmatpush1.bf16.msra.mxu0 0
        %763 = vmatprep.subr.bf16.mxu0 0
        %764 = vmatpush1.bf16.msra.mxu0 0
        %765 = vmatprep.mubr.bf16.mxu0 0
        %766 = vmatmul.mubr.bf16.gmra.mrb[0].mxu0 %v728
        %v767 = vpop.f32.mrb[0].mxu0
        %v768 = vadd.f32 0.0, %v767
        %v769 = vpop.f32.mrb[0].mxu0
        %v770 = vpop.f32.mrb[0].mxu0
        %v771 = vpop.f32.mrb[0].mxu0
        %772 = vdwg.mxu0
        %v773 = vpack.c.bf16 %v768, %v768
        %v775 = vunpack.c.l.b16 %v773
        %v776 = vpack.c.b16 %v775, %v775
        %777 = vrot.lane.b32.xlu0 %v776, 16
        %v778 = vpop.permute.xlu0 %777
        %vm780 = vcmask 191616
        %781 = vst.msk [vmem:[#allocation3] sm:$0xf] %vm780, %v778
        %v782 = vld [vmem:[#allocation2] sm:$0xf]
        %v784 = vunpack.c.l.b16 %v782
        %v785 = vpack.c.b16 %v784, %v784
        %786 = vrot.lane.b32.xlu0 %v785, 104
        %v787 = vpop.permute.xlu0 %786
        %788 = vrot.lane.b32.xlu0 %v785, 72
        %v789 = vpop.permute.xlu0 %788
        %v791 = vsel %vm425, %v787, 0
        %v794 = vsel %vm425, %v789, 0
        %796 = vmatprep.subr.bf16.mxu0 0
        %797 = vmatpush1.bf16.xpose.msra.mxu0 %v794
        %798 = vmatprep.subr.bf16.mxu0 0
        %799 = vmatpush1.bf16.xpose.msra.mxu0 0
        %800 = vmatprep.subr.bf16.mxu0 0
        %801 = vmatpush1.bf16.xpose.msra.mxu0 0
        %802 = vmatprep.subr.bf16.mxu0 0
        %803 = vmatpush1.bf16.xpose.msra.mxu0 0
        %804 = vmatprep.subr.bf16.mxu0 0
        %805 = vmatpush1.bf16.xpose.msra.mxu0 0
        %806 = vmatprep.subr.bf16.mxu0 0
        %807 = vmatpush1.bf16.xpose.msra.mxu0 0
        %808 = vmatprep.subr.bf16.mxu0 0
        %809 = vmatpush1.bf16.xpose.msra.mxu0 0
        %810 = vmatprep.subr.bf16.mxu0 0
        %811 = vmatpush1.bf16.xpose.msra.mxu0 0
        %812 = vmatprep.subr.bf16.mxu0 0
        %813 = vmatpush1.bf16.xpose.msra.mxu0 0
        %814 = vmatprep.subr.bf16.mxu0 0
        %815 = vmatpush1.bf16.xpose.msra.mxu0 0
        %816 = vmatprep.subr.bf16.mxu0 0
        %817 = vmatpush1.bf16.xpose.msra.mxu0 0
        %818 = vmatprep.subr.bf16.mxu0 0
        %819 = vmatpush1.bf16.xpose.msra.mxu0 0
        %820 = vmatprep.subr.bf16.mxu0 0
        %821 = vmatpush1.bf16.xpose.msra.mxu0 0
        %822 = vmatprep.subr.bf16.mxu0 0
        %823 = vmatpush1.bf16.xpose.msra.mxu0 0
        %824 = vmatprep.subr.bf16.mxu0 0
        %825 = vmatpush1.bf16.xpose.msra.mxu0 0
        %826 = vmatprep.subr.bf16.mxu0 0
        %827 = vmatpush1.bf16.xpose.msra.mxu0 0
        %828 = vmatprep.mubr.bf16.mxu0 0
        %829 = vmatmul.mubr.bf16.gmra.mrb[0].mxu0 %v791
        %v830 = vpop.f32.mrb[0].mxu0
        %v831 = vadd.f32 0.0, %v830
        %v832 = vpop.f32.mrb[0].mxu0
        %v833 = vpop.f32.mrb[0].mxu0
        %v834 = vpop.f32.mrb[0].mxu0
        %835 = vdwg.mxu0
        %v836 = vsel %vm425, %v831, -inf
        %837 = vmax.xlane.f32.xlu0 %v836
        %v838 = vpop.xlane.xlu0 %837
        %v839 = vsub.f32 %v831, %v838
        %v840 = vmul.f32 %v839, 1.442695
        %v841 = vpow.pop %v840
        %v842 = vsel %vm425, %v841, 0.0
        %843 = vadd.xlane.f32.xlu0 %v842
        %v844 = vpop.xlane.xlu0 %843
        %v845 = vrcp.pop %v844
        %v846 = vmul.f32 %v841, %v845
        %v847 = vpack.c.bf16 %v846, %v846
        %848 = vrot.lane.b32.xlu0 %v785, 40
        %v849 = vpop.permute.xlu0 %848
        %v851 = vsel %vm425, %v847, 0
        %v854 = vsel %vm489, %v849, 0
        %856 = vmatprep.subr.bf16.mxu0 0
        %857 = vmatpush1.bf16.msra.mxu0 %v854
        %858 = vmatprep.subr.bf16.mxu0 0
        %859 = vmatpush1.bf16.msra.mxu0 0
        %860 = vmatprep.subr.bf16.mxu0 0
        %861 = vmatpush1.bf16.msra.mxu0 0
        %862 = vmatprep.subr.bf16.mxu0 0
        %863 = vmatpush1.bf16.msra.mxu0 0
        %864 = vmatprep.subr.bf16.mxu0 0
        %865 = vmatpush1.bf16.msra.mxu0 0
        %866 = vmatprep.subr.bf16.mxu0 0
        %867 = vmatpush1.bf16.msra.mxu0 0
        %868 = vmatprep.subr.bf16.mxu0 0
        %869 = vmatpush1.bf16.msra.mxu0 0
        %870 = vmatprep.subr.bf16.mxu0 0
        %871 = vmatpush1.bf16.msra.mxu0 0
        %872 = vmatprep.subr.bf16.mxu0 0
        %873 = vmatpush1.bf16.msra.mxu0 0
        %874 = vmatprep.subr.bf16.mxu0 0
        %875 = vmatpush1.bf16.msra.mxu0 0
        %876 = vmatprep.subr.bf16.mxu0 0
        %877 = vmatpush1.bf16.msra.mxu0 0
        %878 = vmatprep.subr.bf16.mxu0 0
        %879 = vmatpush1.bf16.msra.mxu0 0
        %880 = vmatprep.subr.bf16.mxu0 0
        %881 = vmatpush1.bf16.msra.mxu0 0
        %882 = vmatprep.subr.bf16.mxu0 0
        %883 = vmatpush1.bf16.msra.mxu0 0
        %884 = vmatprep.subr.bf16.mxu0 0
        %885 = vmatpush1.bf16.msra.mxu0 0
        %886 = vmatprep.subr.bf16.mxu0 0
        %887 = vmatpush1.bf16.msra.mxu0 0
        %888 = vmatprep.mubr.bf16.mxu0 0
        %889 = vmatmul.mubr.bf16.gmra.mrb[0].mxu0 %v851
        %v890 = vpop.f32.mrb[0].mxu0
        %v891 = vadd.f32 0.0, %v890
        %v892 = vpop.f32.mrb[0].mxu0
        %v893 = vpop.f32.mrb[0].mxu0
        %v894 = vpop.f32.mrb[0].mxu0
        %895 = vdwg.mxu0
        %v896 = vpack.c.bf16 %v891, %v891
        %v898 = vunpack.c.l.b16 %v896
        %v899 = vpack.c.b16 %v898, %v898
        %900 = vrot.lane.b32.xlu0 %v899, 24
        %v901 = vpop.permute.xlu0 %900
        %vm903 = vcmask 257216
        %904 = vst.msk [vmem:[#allocation3] sm:$0xf] %vm903, %v901
        %v905 = vld [vmem:[#allocation3] sm:$0xf]
        %v906 = vld [vmem:[%s3] sm:$0xf]
        %v907 = vld [vmem:[%s3 + $0x4] sm:$0xf]
        %v908 = vld [vmem:[%s3 + $0x8] sm:$0xf]
        %v909 = vld [vmem:[%s3 + $0xc] sm:$0xf]
        %v910 = vlaneseq
        %v911 = vshrl.u32 %v910, 7
        %v912 = vsub.s32 0, %v911
        %v913 = vrot.slane %v322, %v912
        %v918 = vunpack.c.l.b16 %v906
        %v919 = vunpack.c.l.b16 %v907
        %v920 = vunpack.c.l.b16 %v908
        %v921 = vunpack.c.l.b16 %v909
        %v922 = vpack.c.b16 %v919, %v918
        %v923 = vpack.c.b16 %v921, %v920
        %v927 = vsel %vm324, %v905, 0
        %929 = vmatprep.subr.bf16.mxu0 0
        %930 = vmatpush1.bf16.msra.mxu0 %v922
        %931 = vmatprep.subr.bf16.mxu0 0
        %932 = vmatpush1.bf16.msra.mxu0 %v923
        %933 = vmatprep.subr.bf16.mxu0 0
        %934 = vmatpush1.bf16.msra.mxu0 0
        %935 = vmatprep.subr.bf16.mxu0 0
        %936 = vmatpush1.bf16.msra.mxu0 0
        %937 = vmatprep.subr.bf16.mxu0 0
        %938 = vmatpush1.bf16.msra.mxu0 0
        %939 = vmatprep.subr.bf16.mxu0 0
        %940 = vmatpush1.bf16.msra.mxu0 0
        %941 = vmatprep.subr.bf16.mxu0 0
        %942 = vmatpush1.bf16.msra.mxu0 0
        %943 = vmatprep.subr.bf16.mxu0 0
        %944 = vmatpush1.bf16.msra.mxu0 0
        %945 = vmatprep.subr.bf16.mxu0 0
        %946 = vmatpush1.bf16.msra.mxu0 0
        %947 = vmatprep.subr.bf16.mxu0 0
        %948 = vmatpush1.bf16.msra.mxu0 0
        %949 = vmatprep.subr.bf16.mxu0 0
        %950 = vmatpush1.bf16.msra.mxu0 0
        %951 = vmatprep.subr.bf16.mxu0 0
        %952 = vmatpush1.bf16.msra.mxu0 0
        %953 = vmatprep.subr.bf16.mxu0 0
        %954 = vmatpush1.bf16.msra.mxu0 0
        %955 = vmatprep.subr.bf16.mxu0 0
        %956 = vmatpush1.bf16.msra.mxu0 0
        %957 = vmatprep.subr.bf16.mxu0 0
        %958 = vmatpush1.bf16.msra.mxu0 0
        %959 = vmatprep.subr.bf16.mxu0 0
        %960 = vmatpush1.bf16.msra.mxu0 0
        %961 = vmatprep.mubr.bf16.mxu0 0
        %962 = vmatmul.mubr.bf16.gmra.mrb[0].mxu0 %v927
        %v963 = vpop.f32.mrb[0].mxu0
        %v964 = vadd.f32 %v913, %v963
        %v965 = vpop.f32.mrb[0].mxu0
        %v966 = vpop.f32.mrb[0].mxu0
        %v967 = vpop.f32.mrb[0].mxu0
        %968 = vdwg.mxu0
        %v969 = vadd.f32 %v317, %v964
        %v970 = vsel %vm324, %v969, 0.0
        %971 = vadd.xlane.f32.xlu0 %v970
        %v972 = vpop.xlane.xlu0 %971
        %v973 = vmul.f32 %v972, %v328
        %v974 = vsub.f32 %v969, %v973
        %v975 = vmul.f32 %v974, %v974
        %v976 = vsel %vm324, %v975, 0.0
        %977 = vadd.xlane.f32.xlu0 %v976
        %v978 = vpop.xlane.xlu0 %977
        %v979 = vmul.f32 %v978, %v328
        %v980 = vadd.f32 %v979, 1e-06
        %v981 = vrsqrt.pop %v980
        %v982 = vmul.f32 %v974, %v981
        %v983 = vlaneseq
        %v984 = vshrl.u32 %v983, 7
        %v985 = vsub.s32 0, %v984
        %v986 = vrot.slane %v320, %v985
        %v987 = vmul.f32 %v982, %v986
        %v988 = vlaneseq
        %v989 = vshrl.u32 %v988, 7
        %v990 = vsub.s32 0, %v989
        %v991 = vrot.slane %v321, %v990
        %v992 = vadd.f32 %v987, %v991
        %v993 = vpack.c.bf16 %v992, %v992
        %v994 = vld [vmem:[#allocation4] sm:$0xf]
        %v995 = vld [vmem:[#allocation4 + $0x4] sm:$0xf]
        %v996 = vld [vmem:[#allocation4 + $0x8] sm:$0xf]
        %v997 = vld [vmem:[#allocation4 + $0xc] sm:$0xf]
        %v998 = vld [vmem:[%s6] sm:$0x1]
        %v1000 = vlaneseq
        %v1001 = vshrl.u32 %v1000, 7
        %v1002 = vsub.s32 0, %v1001
        %v1003 = vrot.slane %v998, %v1002
        %v1009 = vunpack.c.l.b16 %v994
        %v1010 = vunpack.c.l.b16 %v995
        %v1011 = vunpack.c.l.b16 %v996
        %v1012 = vunpack.c.l.b16 %v997
        %v1013 = vpack.c.b16 %v1010, %v1009
        %v1014 = vpack.c.b16 %v1012, %v1011
        %v1018 = vsel %vm324, %v993, 0
        %1020 = vmatprep.subr.bf16.mxu0 0
        %1021 = vmatpush1.bf16.msra.mxu0 %v1013
        %1022 = vmatprep.subr.bf16.mxu0 0
        %1023 = vmatpush1.bf16.msra.mxu0 %v1014
        %1024 = vmatprep.subr.bf16.mxu0 0
        %1025 = vmatpush1.bf16.msra.mxu0 0
        %1026 = vmatprep.subr.bf16.mxu0 0
        %1027 = vmatpush1.bf16.msra.mxu0 0
        %1028 = vmatprep.subr.bf16.mxu0 0
        %1029 = vmatpush1.bf16.msra.mxu0 0
        %1030 = vmatprep.subr.bf16.mxu0 0
        %1031 = vmatpush1.bf16.msra.mxu0 0
        %1032 = vmatprep.subr.bf16.mxu0 0
        %1033 = vmatpush1.bf16.msra.mxu0 0
        %1034 = vmatprep.subr.bf16.mxu0 0
        %1035 = vmatpush1.bf16.msra.mxu0 0
        %1036 = vmatprep.subr.bf16.mxu0 0
        %1037 = vmatpush1.bf16.msra.mxu0 0
        %1038 = vmatprep.subr.bf16.mxu0 0
        %1039 = vmatpush1.bf16.msra.mxu0 0
        %1040 = vmatprep.subr.bf16.mxu0 0
        %1041 = vmatpush1.bf16.msra.mxu0 0
        %1042 = vmatprep.subr.bf16.mxu0 0
        %1043 = vmatpush1.bf16.msra.mxu0 0
        %1044 = vmatprep.subr.bf16.mxu0 0
        %1045 = vmatpush1.bf16.msra.mxu0 0
        %1046 = vmatprep.subr.bf16.mxu0 0
        %1047 = vmatpush1.bf16.msra.mxu0 0
        %1048 = vmatprep.subr.bf16.mxu0 0
        %1049 = vmatpush1.bf16.msra.mxu0 0
        %1050 = vmatprep.subr.bf16.mxu0 0
        %1051 = vmatpush1.bf16.msra.mxu0 0
        %1052 = vmatprep.mubr.bf16.mxu0 0
        %1053 = vmatmul.mubr.bf16.gmra.mrb[0].mxu0 %v1018
        %v1054 = vpop.f32.mrb[0].mxu0
        %v1055 = vadd.f32 %v1003, %v1054
        %v1056 = vpop.f32.mrb[0].mxu0
        %v1057 = vpop.f32.mrb[0].mxu0
        %v1058 = vpop.f32.mrb[0].mxu0
        %1059 = vdwg.mxu0
        %v1060 = vmul.f32 %v1055, 0.5
        %v1061 = vmul.f32 %v1055, %v1055
        %v1062 = vmul.f32 %v1061, %v1055
        %v1063 = vmul.f32 %v1062, 0.044715
        %v1064 = vadd.f32 %v1055, %v1063
        %v1065 = vmul.f32 %v1064, 0.7978846
        %v1066 = vtanh.pop %v1065
        %v1067 = vadd.f32 %v1066, 1.0
        %v1068 = vmul.f32 %v1060, %v1067
        %v1069 = vpack.c.bf16 %v1068, %v1068
        %v1070 = vld [vmem:[%s7] sm:$0xf]
        %v1071 = vld [vmem:[%s7 + $0x4] sm:$0xf]
        %v1072 = vld [vmem:[%s7 + $0x8] sm:$0xf]
        %v1073 = vld [vmem:[%s7 + $0xc] sm:$0xf]
        %v1074 = vld [vmem:[%s7 + $0x10] sm:$0xf]
        %v1075 = vld [vmem:[%s7 + $0x14] sm:$0xf]
        %v1076 = vld [vmem:[%s7 + $0x18] sm:$0xf]
        %v1077 = vld [vmem:[%s7 + $0x1c] sm:$0xf]
        %v1078 = vlaneseq
        %v1079 = vshrl.u32 %v1078, 7
        %v1080 = vsub.s32 0, %v1079
        %v1081 = vrot.slane %v323, %v1080
        %v1090 = vunpack.c.l.b16 %v1070
        %v1091 = vunpack.c.l.b16 %v1071
        %v1092 = vunpack.c.l.b16 %v1072
        %v1093 = vunpack.c.l.b16 %v1073
        %v1094 = vunpack.c.l.b16 %v1074
        %v1095 = vunpack.c.l.b16 %v1075
        %v1096 = vunpack.c.l.b16 %v1076
        %v1097 = vunpack.c.l.b16 %v1077
        %v1098 = vpack.c.b16 %v1091, %v1090
        %v1099 = vpack.c.b16 %v1093, %v1092
        %v1100 = vpack.c.b16 %v1095, %v1094
        %v1101 = vpack.c.b16 %v1097, %v1096
        %vm1106 = vcmask 523264
        %v1108 = vsel %vm1106, %v1069, 0
        %1110 = vmatprep.subr.bf16.mxu0 0
        %1111 = vmatpush1.bf16.msra.mxu0 %v1098
        %1112 = vmatprep.subr.bf16.mxu0 0
        %1113 = vmatpush1.bf16.msra.mxu0 %v1099
        %1114 = vmatprep.subr.bf16.mxu0 0
        %1115 = vmatpush1.bf16.msra.mxu0 %v1100
        %1116 = vmatprep.subr.bf16.mxu0 0
        %1117 = vmatpush1.bf16.msra.mxu0 %v1101
        %1118 = vmatprep.subr.bf16.mxu0 0
        %1119 = vmatpush1.bf16.msra.mxu0 0
        %1120 = vmatprep.subr.bf16.mxu0 0
        %1121 = vmatpush1.bf16.msra.mxu0 0
        %1122 = vmatprep.subr.bf16.mxu0 0
        %1123 = vmatpush1.bf16.msra.mxu0 0
        %1124 = vmatprep.subr.bf16.mxu0 0
        %1125 = vmatpush1.bf16.msra.mxu0 0
        %1126 = vmatprep.subr.bf16.mxu0 0
        %1127 = vmatpush1.bf16.msra.mxu0 0
        %1128 = vmatprep.subr.bf16.mxu0 0
        %1129 = vmatpush1.bf16.msra.mxu0 0
        %1130 = vmatprep.subr.bf16.mxu0 0
        %1131 = vmatpush1.bf16.msra.mxu0 0
        %1132 = vmatprep.subr.bf16.mxu0 0
        %1133 = vmatpush1.bf16.msra.mxu0 0
        %1134 = vmatprep.subr.bf16.mxu0 0
        %1135 = vmatpush1.bf16.msra.mxu0 0
        %1136 = vmatprep.subr.bf16.mxu0 0
        %1137 = vmatpush1.bf16.msra.mxu0 0
        %1138 = vmatprep.subr.bf16.mxu0 0
        %1139 = vmatpush1.bf16.msra.mxu0 0
        %1140 = vmatprep.subr.bf16.mxu0 0
        %1141 = vmatpush1.bf16.msra.mxu0 0
        %1142 = vmatprep.mubr.bf16.mxu0 0
        %1143 = vmatmul.mubr.bf16.gmra.mrb[0].mxu0 %v1108
        %v1144 = vpop.f32.mrb[0].mxu0
        %v1145 = vadd.f32 %v1081, %v1144
        %v1146 = vpop.f32.mrb[0].mxu0
        %v1147 = vpop.f32.mrb[0].mxu0
        %v1148 = vpop.f32.mrb[0].mxu0
        %1149 = vdwg.mxu0
        %v1150 = vadd.f32 %v969, %v1145
        %1151 = vst.msk [vmem:[%s311] sm:$0xff] %vm324, %v1150
        %s1152 = sand.u32 %s204, 1
        %s1153 = scalar_lea.sflag [#allocation6], %s1152
        %s1154 = sand.u32 %s204, 1
        %s1155 = smul.addr %s1154, 8
        %s1156 = scalar_lea.vmem [#allocation7], %s1155
        // Predicated region
        $region57: #{tpu_custom_call.1} parent=51 // pred_check
          %p1157 = pneg %p214
        $region58: #{tpu_custom_call.1} parent=51 // pred_check_branch
          %1159 = sbr.rel (%p1157) target = $region60
        $region59: #{tpu_custom_call.1} parent=51 // pred_region
          %s1161 = ssub.s32 128, 128
          %1162 = vsyncadd %s1153, %s1161
          %s1163 = smul.addr %s23, 128
          %s1164 = scalar_lea.hbm %s8, %s1163
          %s1166 = sshll.u32 %s1156, 4
          %s1167 = int_to_ptr.vmem [resolvable:$true] %s1166
          %1169 = dma.vmem_to_hbm [thread:$0]  %s1167, 128, %s1164, %s1153
        $region60: #{tpu_custom_call.1} parent=51 // pred_fallthru
          _
      $region52: #{tpu_custom_call.1} parent=5 // pred_fallthru
        _
      %p1170 = scmp.le.s32.totalorder 2, %s18
      // Predicated region
      $region61: #{tpu_custom_call.1} parent=5 // pred_check
        %p1171 = pneg %p1170
      $region62: #{tpu_custom_call.1} parent=5 // pred_check_branch
        %1173 = sbr.rel (%p1171) target = $region64
      $region63: #{tpu_custom_call.1} parent=5 // pred_region
        %s1174 = ssub.s32 %s18, 2
        // Predicated region
        $region65: #{tpu_custom_call.1} parent=63 // pred_check
          %p1175 = pneg %p220
        $region66: #{tpu_custom_call.1} parent=63 // pred_check_branch
          %1177 = sbr.rel (%p1175) target = $region68
        $region67: #{tpu_custom_call.1} parent=63 // pred_region
          %s1178 = sand.u32 %s205, 1
          %s1179 = scalar_lea.sflag [#allocation6], %s1178
          %s1180 = sand.u32 %s205, 1
          %s1181 = smul.addr %s1180, 8
          %s1182 = scalar_lea.vmem [#allocation7], %s1181
          %1183 = dma.done %s1179, 128
        $region68: #{tpu_custom_call.1} parent=63 // pred_fallthru
          _
      $region64: #{tpu_custom_call.1} parent=5 // pred_fallthru
        _
    $region6: #{tpu_custom_call.1} parent=1 // loop_footer
      %s22 = sadd.s32 1, %s18
    $region7: #{tpu_custom_call.1} parent=1 // loop_footer_branch
      %17 = sbr.rel target = $region3
    $region8: #{tpu_custom_call.1} parent=1 // loop_exit
      _
    %1184 = vsyncpa [#allocation5], 1
    %s1185 = scalar_lea.sflag [#allocation5], 1
    %1186 = vsyncpa %s1185, 1
    %1187 = vsyncpa [#allocation6], 1
    %s1188 = scalar_lea.sflag [#allocation6], 1
    %1189 = vsyncpa %s1188, 1

</llo_original>
